<compile_context>
chip_gen: v5e
topology: v5e:2x2
jax: 0.10.0
libtpu: 0.0.40
codegen_flags: <defaults>
</compile_context>

<pallas_src>
import functools

import jax
import jax.numpy as jnp
from jax import lax
from jax.experimental import pallas as pl
from jax.experimental.pallas import tpu as pltpu


# ----------------------------------------------------------------------------
# Small helpers
# ----------------------------------------------------------------------------

def _round_up(x, m):
    return pl.cdiv(x, m) * m


def _pick_tile(padded_dim, pref):
    """Largest multiple-of-128 tile <= pref that divides padded_dim."""
    t = min(pref, padded_dim)
    while padded_dim % t:
        t -= 128
    return t


# ----------------------------------------------------------------------------
# MXU matmul (+ bias, + optional fused residual) kernels
# ----------------------------------------------------------------------------

def _matmul_bias_kernel(a_ref, b_ref, bias_ref, o_ref, acc_ref):
    k = pl.program_id(2)

    @pl.when(k == 0)
    def _():
        acc_ref[...] = jnp.zeros_like(acc_ref)

    acc_ref[...] += jnp.dot(a_ref[...], b_ref[...],
                            preferred_element_type=jnp.float32)

    @pl.when(k == pl.num_programs(2) - 1)
    def _():
        o_ref[...] = (acc_ref[...] + bias_ref[...]).astype(o_ref.dtype)


def _matmul_bias_res_kernel(a_ref, b_ref, bias_ref, r_ref, o_ref, acc_ref):
    k = pl.program_id(2)

    @pl.when(k == 0)
    def _():
        acc_ref[...] = jnp.zeros_like(acc_ref)

    acc_ref[...] += jnp.dot(a_ref[...], b_ref[...],
                            preferred_element_type=jnp.float32)

    @pl.when(k == pl.num_programs(2) - 1)
    def _():
        # residual add fused in the epilogue (free VPU work under MXU-bound loop)
        o_ref[...] = (acc_ref[...] + bias_ref[...] + r_ref[...]).astype(o_ref.dtype)


def matmul_bias(a_bf16, w_bf16, bias_row, residual=None):
    """(Mp,Kp)bf16 @ (Kp,Np)bf16 + bias(1,Np) [+ residual(Mp,Np)] -> (Mp,Np)f32.

    All dims are already padded to multiples of 128; tiles are chosen to match
    the 256-wide MXUs on v6e/v7x while dividing the padded dims exactly (so no
    per-call jnp.pad of the weight and no ragged tiles).  Double-buffered VMEM
    footprint stays < ~4 MiB, well under the 32 MiB scoped default on every
    generation (incl. v7x's 64 MiB physical VMEM).
    """
    Mp, Kp = a_bf16.shape
    Kp2, Np = w_bf16.shape
    assert Kp == Kp2
    tm = _pick_tile(Mp, 512)
    tn = _pick_tile(Np, 256)
    tk = _pick_tile(Kp, 256)

    in_specs = [
        pl.BlockSpec((tm, tk), lambda i, j, k: (i, k)),
        pl.BlockSpec((tk, tn), lambda i, j, k: (k, j)),
        pl.BlockSpec((1, tn), lambda i, j, k: (0, j)),
    ]
    args = [a_bf16, w_bf16, bias_row]
    kernel = _matmul_bias_kernel
    if residual is not None:
        in_specs.append(pl.BlockSpec((tm, tn), lambda i, j, k: (i, j)))
        args.append(residual)
        kernel = _matmul_bias_res_kernel

    return pl.pallas_call(
        kernel,
        out_shape=jax.ShapeDtypeStruct((Mp, Np), jnp.float32),
        grid_spec=pltpu.PrefetchScalarGridSpec(
            num_scalar_prefetch=0,
            grid=(Mp // tm, Np // tn, Kp // tk),
            in_specs=in_specs,
            out_specs=pl.BlockSpec((tm, tn), lambda i, j, k: (i, j)),
            scratch_shapes=[pltpu.VMEM((tm, tn), jnp.float32)],
        ),
        compiler_params=pltpu.CompilerParams(
            dimension_semantics=("parallel", "parallel", "arbitrary")),
    )(*args)


# ----------------------------------------------------------------------------
# Conv2d = (im2col glue for k>1) + Pallas bf16 matmul (+ fused residual)
# ----------------------------------------------------------------------------

def conv2d(x_nhwc, packed, ksize, stride=1, padding=0, padding_mode="zeros",
           residual=None):
    w = packed["w"]                       # (Kp, Np) bf16, pre-padded at build
    bias = packed["b"]                    # (Cout,) f32
    cout = bias.shape[0]
    N, H, W, Cin = x_nhwc.shape
    KH = KW = ksize

    if padding > 0:
        mode = "edge" if padding_mode == "replicate" else "constant"
        xp = jnp.pad(x_nhwc, ((0, 0), (padding, padding), (padding, padding),
                              (0, 0)), mode=mode)
    else:
        xp = x_nhwc
    Hp, Wp = H + 2 * padding, W + 2 * padding
    Ho = (Hp - KH) // stride + 1
    Wo = (Wp - KW) // stride + 1

    if KH == 1 and KW == 1:
        # 1x1 conv: no im2col needed, just (strided) reshape.
        a = xp[:, ::stride, ::stride, :].reshape(N * Ho * Wo, Cin)
    else:
        # TODO(synk): stream (kh,kw) taps through the matmul k grid axis
        # instead of materializing an im2col tensor (KH*KW x HBM inflation).
        patches = []
        for kh in range(KH):
            for kw in range(KW):
                patches.append(xp[:, kh:kh + stride * (Ho - 1) + 1:stride,
                                  kw:kw + stride * (Wo - 1) + 1:stride, :])
        a = jnp.stack(patches, axis=3).reshape(N * Ho * Wo, KH * KW * Cin)

    a = a.astype(jnp.bfloat16)            # bf16 operand: full-rate MXU, 1/2 HBM
    M, K = a.shape
    Kp, Np = w.shape
    Mp = _round_up(M, 128)
    a = jnp.pad(a, ((0, Mp - M), (0, Kp - K)))
    bias_row = jnp.pad(bias.reshape(1, cout), ((0, 0), (0, Np - cout)))

    r = None
    if residual is not None:
        r = residual.reshape(M, cout)
        r = jnp.pad(r, ((0, Mp - M), (0, Np - cout)))

    out = matmul_bias(a, w, bias_row, residual=r)
    return out[:M, :cout].reshape(N, Ho, Wo, cout)


# ----------------------------------------------------------------------------
# BatchNorm (training-mode batch stats) + optional ReLU : two-pass, M-tiled
# ----------------------------------------------------------------------------

def _bn_stats_kernel(x_ref, sum_ref, ssq_ref):
    @pl.when(pl.program_id(0) == 0)
    def _():
        sum_ref[...] = jnp.zeros_like(sum_ref)
        ssq_ref[...] = jnp.zeros_like(ssq_ref)

    x = x_ref[...]
    sum_ref[...] += jnp.sum(x, axis=0, keepdims=True)
    ssq_ref[...] += jnp.sum(x * x, axis=0, keepdims=True)


def _bn_apply_kernel(x_ref, scale_ref, shift_ref, o_ref, *, relu):
    y = x_ref[...] * scale_ref[...] + shift_ref[...]
    if relu:
        y = jnp.maximum(y, 0.0)
    o_ref[...] = y


def batchnorm2d(x_nhwc, gamma, beta, eps=1e-5, relu=False, tile_m=1024):
    N, H, W, C = x_nhwc.shape
    M = N * H * W
    x2 = x_nhwc.reshape(M, C)
    tm = min(tile_m, _round_up(M, 8))
    Mp = _round_up(M, tm)
    xp = jnp.pad(x2, ((0, Mp - M), (0, 0))) if Mp != M else x2  # zero pad: stats unaffected
    nb = Mp // tm

    # Pass 1: full-M per-channel sum / sum-of-squares (accumulated across tiles).
    sums, ssqs = pl.pallas_call(
        _bn_stats_kernel,
        out_shape=(jax.ShapeDtypeStruct((1, C), jnp.float32),
                   jax.ShapeDtypeStruct((1, C), jnp.float32)),
        grid=(nb,),
        in_specs=[pl.BlockSpec((tm, C), lambda i: (i, 0))],
        out_specs=(pl.BlockSpec((1, C), lambda i: (0, 0)),
                   pl.BlockSpec((1, C), lambda i: (0, 0))),
        compiler_params=pltpu.CompilerParams(
            dimension_semantics=("arbitrary",)),
    )(xp)

    # Tiny C-sized finalization in glue (biased variance = training-mode BN).
    mean = sums / M
    var = jnp.maximum(ssqs / M - mean * mean, 0.0)
    scale = gamma.reshape(1, C) * lax.rsqrt(var + eps)
    shift = beta.reshape(1, C) - mean * scale

    # Pass 2: tiled normalize (+ReLU) apply.
    out = pl.pallas_call(
        functools.partial(_bn_apply_kernel, relu=relu),
        out_shape=jax.ShapeDtypeStruct((Mp, C), jnp.float32),
        grid=(nb,),
        in_specs=[pl.BlockSpec((tm, C), lambda i: (i, 0)),
                  pl.BlockSpec((1, C), lambda i: (0, 0)),
                  pl.BlockSpec((1, C), lambda i: (0, 0))],
        out_specs=pl.BlockSpec((tm, C), lambda i: (i, 0)),
        compiler_params=pltpu.CompilerParams(
            dimension_semantics=("parallel",)),
    )(xp, scale, shift)
    return out[:M].reshape(N, H, W, C)


# ----------------------------------------------------------------------------
# MaxPool2d : M-tiled 9-tap max (no stacked (9, M, C) tensor, no giant block)
# ----------------------------------------------------------------------------

def _maxpool_kernel(*refs):
    o_ref = refs[-1]
    m = refs[0][...]
    for r in refs[1:-1]:
        m = jnp.maximum(m, r[...])
    o_ref[...] = m


def maxpool2d(x_nhwc, ksize=3, stride=2, pad=1, tile_m=1024):
    N, H, W, C = x_nhwc.shape
    neg = jnp.finfo(x_nhwc.dtype).min     # PyTorch MaxPool2d pads with -inf
    xp = jnp.pad(x_nhwc, ((0, 0), (pad, pad), (pad, pad), (0, 0)),
                 constant_values=neg)
    Ho = (H + 2 * pad - ksize) // stride + 1
    Wo = (W + 2 * pad - ksize) // stride + 1
    M = N * Ho * Wo
    tm = min(tile_m, _round_up(M, 8))
    Mp = _round_up(M, tm)

    taps = []
    for kh in range(ksize):
        for kw in range(ksize):
            t = xp[:, kh:kh + stride * (Ho - 1) + 1:stride,
                   kw:kw + stride * (Wo - 1) + 1:stride, :].reshape(M, C)
            if Mp != M:
                t = jnp.pad(t, ((0, Mp - M), (0, 0)))
            taps.append(t)

    spec = pl.BlockSpec((tm, C), lambda i: (i, 0))
    out = pl.pallas_call(
        _maxpool_kernel,
        out_shape=jax.ShapeDtypeStruct((Mp, C), jnp.float32),
        grid=(Mp // tm,),
        in_specs=[spec] * (ksize * ksize),
        out_specs=spec,
        compiler_params=pltpu.CompilerParams(
            dimension_semantics=("parallel",)),
    )(*taps)
    return out[:M].reshape(N, Ho, Wo, C)


# ----------------------------------------------------------------------------
# Classifier: fused global-avg-pool + Linear + softmax, tiled over batch
# ----------------------------------------------------------------------------

def _classifier_kernel(x_ref, w_ref, b_ref, o_ref):
    pooled = jnp.mean(x_ref[...], axis=1)             # AdaptiveAvgPool2d(1)+flatten
    logits = jnp.dot(pooled, w_ref[...],
                     preferred_element_type=jnp.float32) + b_ref[...]
    m = jnp.max(logits, axis=-1, keepdims=True)       # softmax over classes
    e = jnp.exp(logits - m)
    o_ref[...] = e / jnp.sum(e, axis=-1, keepdims=True)


def classifier_head(x_nhwc, w, b, tile_n=8):
    N, H, W, C = x_nhwc.shape
    ncls = w.shape[1]
    bn = min(tile_n, N)
    Npad = _round_up(N, bn)
    x3 = x_nhwc.reshape(N, H * W, C)
    if Npad != N:
        x3 = jnp.pad(x3, ((0, Npad - N), (0, 0), (0, 0)))
    out = pl.pallas_call(
        _classifier_kernel,
        out_shape=jax.ShapeDtypeStruct((Npad, ncls), jnp.float32),
        grid=(Npad // bn,),
        in_specs=[
            pl.BlockSpec((bn, H * W, C), lambda i: (i, 0, 0)),
            pl.BlockSpec((C, ncls), lambda i: (0, 0)),
            pl.BlockSpec((1, ncls), lambda i: (0, 0)),
        ],
        out_specs=pl.BlockSpec((bn, ncls), lambda i: (i, 0)),
        compiler_params=pltpu.CompilerParams(
            dimension_semantics=("parallel",)),
    )(x3, w, b.reshape(1, ncls))
    return out[:N]


# ----------------------------------------------------------------------------
# Parameter init (deterministic, PyTorch-default-style), weights pre-packed
# ----------------------------------------------------------------------------

def _conv_param(key, cout, cin, kh, kw):
    k1, k2 = jax.random.split(key)
    bound = 1.0 / ((cin * kh * kw) ** 0.5)
    w = jax.random.uniform(k1, (cout, cin, kh, kw), jnp.float32, -bound, bound)
    b = jax.random.uniform(k2, (cout,), jnp.float32, -bound, bound)
    # Pre-transpose to (KH*KW*Cin, Cout), pad to 128-multiples, cast bf16 once.
    K = kh * kw * cin
    w2 = jnp.transpose(w, (2, 3, 1, 0)).reshape(K, cout)
    Kp, Np = _round_up(K, 128), _round_up(cout, 128)
    w2 = jnp.pad(w2, ((0, Kp - K), (0, Np - cout))).astype(jnp.bfloat16)
    return dict(w=w2, b=b)


def _bn_init(c):
    return jnp.ones((c,), jnp.float32), jnp.zeros((c,), jnp.float32)


def _linear_init(key, cin, cout):
    k1, k2 = jax.random.split(key)
    bound = 1.0 / (cin ** 0.5)
    w = jax.random.uniform(k1, (cin, cout), jnp.float32, -bound, bound)
    b = jax.random.uniform(k2, (cout,), jnp.float32, -bound, bound)
    return w, b


def build_resnet_params(key, group_parameters, n_classes, incoming_filters=64):
    keys = iter(jax.random.split(key, 512))
    params = {}

    # Stem: Conv2d(3, 64, k=7, s=2, p=3) -> BN(64) -> ReLU -> MaxPool(3, 2, 1)
    bg, bb = _bn_init(64)
    params["stem"] = dict(conv=_conv_param(next(keys), 64, 3, 7, 7),
                          bn_g=bg, bn_b=bb)

    # Learner (strides are structural: group 0 -> 1, others -> 2; kept out of
    # the param pytree so the whole forward can be jax.jit-ed).
    trailing = incoming_filters
    groups = []
    for n_filters, n_blocks in group_parameters:

        def make_block(c_in):
            return dict(
                bn1=_bn_init(c_in),
                conv1=_conv_param(next(keys), n_filters, c_in, 1, 1),
                bn2=_bn_init(n_filters),
                conv2=_conv_param(next(keys), n_filters, n_filters, 3, 3),
                bn3=_bn_init(n_filters),
                conv3=_conv_param(next(keys), 4 * n_filters, n_filters, 1, 1))

        sg, sb = _bn_init(trailing)
        group = {
            "shortcut": dict(bn_g=sg, bn_b=sb,
                             conv=_conv_param(next(keys), 4 * n_filters,
                                              trailing, 1, 1)),
            "projection": make_block(trailing),
        }
        trailing = 4 * n_filters
        group["identity"] = [make_block(trailing) for _ in range(n_blocks)]
        groups.append(group)
    params["learner"] = groups

    # Classifier: Linear(4 * last_n_filters, n_classes), stored as (in, out)
    lw, lb = _linear_init(next(keys), trailing, n_classes)
    params["classifier"] = dict(w=lw, b=lb)
    return params


# ----------------------------------------------------------------------------
# Forward pass
# ----------------------------------------------------------------------------

def _bottleneck_block(x, blk, stride, residual):
    g1, b1 = blk["bn1"]
    y = batchnorm2d(x, g1, b1, relu=True)
    y = conv2d(y, blk["conv1"], ksize=1, stride=1, padding=0)
    g2, b2 = blk["bn2"]
    y = batchnorm2d(y, g2, b2, relu=True)
    y = conv2d(y, blk["conv2"], ksize=3, stride=stride, padding=1,
               padding_mode="replicate")
    g3, b3 = blk["bn3"]
    y = batchnorm2d(y, g3, b3, relu=True)
    # residual add fused into the final 1x1 conv's MXU epilogue
    return conv2d(y, blk["conv3"], ksize=1, stride=1, padding=0,
                  residual=residual)


def resnet_forward(params, x_nchw):
    # NCHW -> NHWC
    x = jnp.transpose(x_nchw, (0, 2, 3, 1)).astype(jnp.float32)

    # Stem
    st = params["stem"]
    x = conv2d(x, st["conv"], ksize=7, stride=2, padding=3)
    x = batchnorm2d(x, st["bn_g"], st["bn_b"], relu=True)
    x = maxpool2d(x, ksize=3, stride=2, pad=1)

    # Learner
    for gi, group in enumerate(params["learner"]):
        stride = 1 if gi == 0 else 2
        sc = group["shortcut"]
        shortcut = batchnorm2d(x, sc["bn_g"], sc["bn_b"], relu=False)
        shortcut = conv2d(shortcut, sc["conv"], ksize=1, stride=stride,
                          padding=0)
        x = _bottleneck_block(x, group["projection"], stride,
                              residual=shortcut)
        for blk in group["identity"]:
            x = _bottleneck_block(x, blk, 1, residual=x)

    # Classifier (global avg pool + Linear + softmax, fused kernel)
    cl = params["classifier"]
    return classifier_head(x, cl["w"], cl["b"])


# ----------------------------------------------------------------------------
if __name__ == "__main__":
    key = jax.random.PRNGKey(0)
    k_params, k_x = jax.random.split(key)

    # Small ResNet configuration: ResLearner([(8, 1), (16, 1)]), 10 classes.
    group_parameters = [(8, 1), (16, 1)]
    n_classes = 10
    params = build_resnet_params(k_params, group_parameters, n_classes)

    # PyTorch-style NCHW input.
    x = jax.random.normal(k_x, (2, 3, 16, 16), jnp.float32)

    fwd = jax.jit(resnet_forward)
    out = jax.block_until_ready(fwd(params, x))

    assert out.shape == (2, n_classes), out.shape
    assert bool(jnp.all(jnp.isfinite(out)))
    # softmax rows sum to 1
    assert bool(jnp.allclose(jnp.sum(out, axis=-1), 1.0, atol=1e-5))
    print("KERNEL_OK")
</pallas_src>

<mosaic_0001>
module attributes {stable_mosaic.version = 11 : i64} {
  func.func @_matmul_bias_kernel(%arg0: i32, %arg1: i32, %arg2: i32, %arg3: memref<128x256xbf16, #tpu.memory_space<vmem>>, %arg4: memref<256x128xbf16, #tpu.memory_space<vmem>>, %arg5: memref<1x128xf32, #tpu.memory_space<vmem>>, %arg6: memref<128x128xf32, #tpu.memory_space<vmem>>, %arg7: memref<128x128xf32, #tpu.memory_space<vmem>>) attributes {dimension_semantics = [#tpu.dimension_semantics<parallel>, #tpu.dimension_semantics<parallel>, #tpu.dimension_semantics<arbitrary>], iteration_bounds = array<i64: 1, 1, 1>, scalar_prefetch = 0 : i64, scratch_operands = 1 : i64, tpu.core_type = #tpu.core_type<tc>, window_params = [{transform_indices = @transform_0, window_bounds = array<i64: 128, 256>}, {transform_indices = @transform_1, window_bounds = array<i64: 256, 128>}, {transform_indices = @transform_2, window_bounds = array<i64: 1, 128>}, {transform_indices = @transform_3, window_bounds = array<i64: 128, 128>}]} {
    %c0_i32 = arith.constant 0 : i32
    %0 = arith.cmpi eq, %arg2, %c0_i32 : i32
    %1 = arith.extui %0 : i1 to i32
    %c0_i32_0 = arith.constant 0 : i32
    %2 = arith.cmpi ne, %1, %c0_i32_0 : i32
    scf.if %2 {
      %cst_10 = arith.constant 0.000000e+00 : f32
      %12 = vector.broadcast %cst_10 : f32 to vector<128x128xf32>
      %c0_11 = arith.constant 0 : index
      %c0_12 = arith.constant 0 : index
      %13 = vector.load %arg7[%c0_11, %c0_12] : memref<128x128xf32, #tpu.memory_space<vmem>>, vector<128x128xf32>
      tpu.vector_store %arg7[%c0_11, %c0_12], %12 {strides = array<i32>} : memref<128x128xf32, #tpu.memory_space<vmem>>, vector<128x128xf32>,
    } else {
    }
    %c0 = arith.constant 0 : index
    %c0_1 = arith.constant 0 : index
    %3 = vector.load %arg7[%c0, %c0_1] : memref<128x128xf32, #tpu.memory_space<vmem>>, vector<128x128xf32>
    %c0_2 = arith.constant 0 : index
    %c0_3 = arith.constant 0 : index
    %4 = vector.load %arg3[%c0_2, %c0_3] : memref<128x256xbf16, #tpu.memory_space<vmem>>, vector<128x256xbf16>
    %c0_4 = arith.constant 0 : index
    %c0_5 = arith.constant 0 : index
    %5 = vector.load %arg4[%c0_4, %c0_5] : memref<256x128xbf16, #tpu.memory_space<vmem>>, vector<256x128xbf16>
    %cst = arith.constant dense<0.000000e+00> : vector<128x128xf32>
    %6 = tpu.matmul %4, %5, %cst {dimension_numbers = #tpu.dot_dimension_numbers<[1], [0], [0], [1], [0, 0, 1, 1], [], []>} : vector<128x256xbf16>, vector<256x128xbf16>, vector<128x128xf32> -> vector<128x128xf32>
    %7 = arith.addf %3, %6 : vector<128x128xf32>
    %c0_6 = arith.constant 0 : index
    %c0_7 = arith.constant 0 : index
    %8 = vector.load %arg7[%c0_6, %c0_7] : memref<128x128xf32, #tpu.memory_space<vmem>>, vector<128x128xf32>
    tpu.vector_store %arg7[%c0_6, %c0_7], %7 {strides = array<i32>} : memref<128x128xf32, #tpu.memory_space<vmem>>, vector<128x128xf32>,
    %c0_i32_8 = arith.constant 0 : i32
    %9 = arith.cmpi eq, %arg2, %c0_i32_8 : i32
    %10 = arith.extui %9 : i1 to i32
    %c0_i32_9 = arith.constant 0 : i32
    %11 = arith.cmpi ne, %10, %c0_i32_9 : i32
    scf.if %11 {
      %c0_10 = arith.constant 0 : index
      %c0_11 = arith.constant 0 : index
      %12 = vector.load %arg7[%c0_10, %c0_11] : memref<128x128xf32, #tpu.memory_space<vmem>>, vector<128x128xf32>
      %c0_12 = arith.constant 0 : index
      %c0_13 = arith.constant 0 : index
      %13 = vector.load %arg5[%c0_12, %c0_13] : memref<1x128xf32, #tpu.memory_space<vmem>>, vector<1x128xf32>
      %14 = vector.broadcast %13 : vector<1x128xf32> to vector<128x128xf32>
      %15 = arith.addf %12, %14 : vector<128x128xf32>
      %c0_14 = arith.constant 0 : index
      %c0_15 = arith.constant 0 : index
      %16 = vector.load %arg6[%c0_14, %c0_15] : memref<128x128xf32, #tpu.memory_space<vmem>>, vector<128x128xf32>
      tpu.vector_store %arg6[%c0_14, %c0_15], %15 {strides = array<i32>} : memref<128x128xf32, #tpu.memory_space<vmem>>, vector<128x128xf32>,
    } else {
    }
    return
  }
  func.func @transform_0(%arg0: i32, %arg1: i32, %arg2: i32) -> (i32, i32) {
    %c0_i32 = arith.constant 0 : i32
    return %arg0, %arg2 : i32, i32
  }
  func.func @transform_1(%arg0: i32, %arg1: i32, %arg2: i32) -> (i32, i32) {
    %c0_i32 = arith.constant 0 : i32
    return %arg2, %arg1 : i32, i32
  }
  func.func @transform_2(%arg0: i32, %arg1: i32, %arg2: i32) -> (i32, i32) {
    %c0_i32 = arith.constant 0 : i32
    %c0_i32_0 = arith.constant 0 : i32
    return %c0_i32, %arg1 : i32, i32
  }
  func.func @transform_3(%arg0: i32, %arg1: i32, %arg2: i32) -> (i32, i32) {
    %c0_i32 = arith.constant 0 : i32
    return %arg0, %arg1 : i32, i32
  }
}

module attributes {stable_mosaic.version = 11 : i64} {
  func.func @_bn_apply_kernel(%arg0: i32, %arg1: memref<128x64xf32, #tpu.memory_space<vmem>>, %arg2: memref<1x64xf32, #tpu.memory_space<vmem>>, %arg3: memref<1x64xf32, #tpu.memory_space<vmem>>, %arg4: memref<128x64xf32, #tpu.memory_space<vmem>>) attributes {dimension_semantics = [#tpu.dimension_semantics<parallel>], iteration_bounds = array<i64: 1>, scalar_prefetch = 0 : i64, scratch_operands = 0 : i64, tpu.core_type = #tpu.core_type<tc>, window_params = [{transform_indices = @transform_0, window_bounds = array<i64: 128, 64>}, {pipeline_mode = #tpu.pipeline_mode<synchronous>, transform_indices = @transform_1, window_bounds = array<i64: 1, 64>}, {pipeline_mode = #tpu.pipeline_mode<synchronous>, transform_indices = @transform_2, window_bounds = array<i64: 1, 64>}, {transform_indices = @transform_3, window_bounds = array<i64: 128, 64>}]} {
    %c0 = arith.constant 0 : index
    %c0_0 = arith.constant 0 : index
    %0 = vector.load %arg1[%c0, %c0_0] : memref<128x64xf32, #tpu.memory_space<vmem>>, vector<128x64xf32>
    %c0_1 = arith.constant 0 : index
    %c0_2 = arith.constant 0 : index
    %1 = vector.load %arg2[%c0_1, %c0_2] : memref<1x64xf32, #tpu.memory_space<vmem>>, vector<1x64xf32>
    %2 = vector.broadcast %1 : vector<1x64xf32> to vector<128x64xf32>
    %3 = arith.mulf %0, %2 : vector<128x64xf32>
    %c0_3 = arith.constant 0 : index
    %c0_4 = arith.constant 0 : index
    %4 = vector.load %arg3[%c0_3, %c0_4] : memref<1x64xf32, #tpu.memory_space<vmem>>, vector<1x64xf32>
    %5 = vector.broadcast %4 : vector<1x64xf32> to vector<128x64xf32>
    %6 = arith.addf %3, %5 : vector<128x64xf32>
    %cst = arith.constant 0.000000e+00 : f32
    %7 = vector.broadcast %cst : f32 to vector<128x64xf32>
    %8 = arith.maximumf %6, %7 : vector<128x64xf32>
    %c0_5 = arith.constant 0 : index
    %c0_6 = arith.constant 0 : index
    %9 = vector.load %arg4[%c0_5, %c0_6] : memref<128x64xf32, #tpu.memory_space<vmem>>, vector<128x64xf32>
    tpu.vector_store %arg4[%c0_5, %c0_6], %8 {strides = array<i32>} : memref<128x64xf32, #tpu.memory_space<vmem>>, vector<128x64xf32>,
    return
  }
  func.func @transform_0(%arg0: i32) -> (i32, i32) {
    %c0_i32 = arith.constant 0 : i32
    %c0_i32_0 = arith.constant 0 : i32
    return %arg0, %c0_i32 : i32, i32
  }
  func.func @transform_1(%arg0: i32) -> (i32, i32) {
    %c0_i32 = arith.constant 0 : i32
    %c0_i32_0 = arith.constant 0 : i32
    %c0_i32_1 = arith.constant 0 : i32
    return %c0_i32, %c0_i32_0 : i32, i32
  }
  func.func @transform_2(%arg0: i32) -> (i32, i32) {
    %c0_i32 = arith.constant 0 : i32
    %c0_i32_0 = arith.constant 0 : i32
    %c0_i32_1 = arith.constant 0 : i32
    return %c0_i32, %c0_i32_0 : i32, i32
  }
  func.func @transform_3(%arg0: i32) -> (i32, i32) {
    %c0_i32 = arith.constant 0 : i32
    %c0_i32_0 = arith.constant 0 : i32
    return %arg0, %c0_i32 : i32, i32
  }
}

module attributes {stable_mosaic.version = 11 : i64} {
  func.func @_bn_stats_kernel(%arg0: i32, %arg1: memref<128x64xf32, #tpu.memory_space<vmem>>, %arg2: memref<1x64xf32, #tpu.memory_space<vmem>>, %arg3: memref<1x64xf32, #tpu.memory_space<vmem>>) attributes {dimension_semantics = [#tpu.dimension_semantics<arbitrary>], iteration_bounds = array<i64: 1>, scalar_prefetch = 0 : i64, scratch_operands = 0 : i64, tpu.core_type = #tpu.core_type<tc>, window_params = [{transform_indices = @transform_0, window_bounds = array<i64: 128, 64>}, {pipeline_mode = #tpu.pipeline_mode<synchronous>, transform_indices = @transform_1, window_bounds = array<i64: 1, 64>}, {pipeline_mode = #tpu.pipeline_mode<synchronous>, transform_indices = @transform_2, window_bounds = array<i64: 1, 64>}]} {
    %c0_i32 = arith.constant 0 : i32
    %0 = arith.cmpi eq, %arg0, %c0_i32 : i32
    %1 = arith.extui %0 : i1 to i32
    %c0_i32_0 = arith.constant 0 : i32
    %2 = arith.cmpi ne, %1, %c0_i32_0 : i32
    scf.if %2 {
      %cst_11 = arith.constant 0.000000e+00 : f32
      %15 = vector.broadcast %cst_11 : f32 to vector<1x64xf32>
      %c0_12 = arith.constant 0 : index
      %c0_13 = arith.constant 0 : index
      %16 = vector.load %arg2[%c0_12, %c0_13] : memref<1x64xf32, #tpu.memory_space<vmem>>, vector<1x64xf32>
      tpu.vector_store %arg2[%c0_12, %c0_13], %15 {strides = array<i32>} : memref<1x64xf32, #tpu.memory_space<vmem>>, vector<1x64xf32>,
      %cst_14 = arith.constant 0.000000e+00 : f32
      %17 = vector.broadcast %cst_14 : f32 to vector<1x64xf32>
      %c0_15 = arith.constant 0 : index
      %c0_16 = arith.constant 0 : index
      %18 = vector.load %arg3[%c0_15, %c0_16] : memref<1x64xf32, #tpu.memory_space<vmem>>, vector<1x64xf32>
      tpu.vector_store %arg3[%c0_15, %c0_16], %17 {strides = array<i32>} : memref<1x64xf32, #tpu.memory_space<vmem>>, vector<1x64xf32>,
    } else {
    }
    %c0 = arith.constant 0 : index
    %c0_1 = arith.constant 0 : index
    %3 = vector.load %arg1[%c0, %c0_1] : memref<128x64xf32, #tpu.memory_space<vmem>>, vector<128x64xf32>
    %c0_2 = arith.constant 0 : index
    %c0_3 = arith.constant 0 : index
    %4 = vector.load %arg2[%c0_2, %c0_3] : memref<1x64xf32, #tpu.memory_space<vmem>>, vector<1x64xf32>
    %cst = arith.constant dense<0.000000e+00> : vector<64xf32>
    %5 = vector.multi_reduction <add>, %3, %cst [0] : vector<128x64xf32> to vector<64xf32>
    %6 = vector.shape_cast %5 : vector<64xf32> to vector<1x64xf32>
    %7 = arith.addf %4, %6 : vector<1x64xf32>
    %c0_4 = arith.constant 0 : index
    %c0_5 = arith.constant 0 : index
    %8 = vector.load %arg2[%c0_4, %c0_5] : memref<1x64xf32, #tpu.memory_space<vmem>>, vector<1x64xf32>
    tpu.vector_store %arg2[%c0_4, %c0_5], %7 {strides = array<i32>} : memref<1x64xf32, #tpu.memory_space<vmem>>, vector<1x64xf32>,
    %c0_6 = arith.constant 0 : index
    %c0_7 = arith.constant 0 : index
    %9 = vector.load %arg3[%c0_6, %c0_7] : memref<1x64xf32, #tpu.memory_space<vmem>>, vector<1x64xf32>
    %10 = arith.mulf %3, %3 : vector<128x64xf32>
    %cst_8 = arith.constant dense<0.000000e+00> : vector<64xf32>
    %11 = vector.multi_reduction <add>, %10, %cst_8 [0] : vector<128x64xf32> to vector<64xf32>
    %12 = vector.shape_cast %11 : vector<64xf32> to vector<1x64xf32>
    %13 = arith.addf %9, %12 : vector<1x64xf32>
    %c0_9 = arith.constant 0 : index
    %c0_10 = arith.constant 0 : index
    %14 = vector.load %arg3[%c0_9, %c0_10] : memref<1x64xf32, #tpu.memory_space<vmem>>, vector<1x64xf32>
    tpu.vector_store %arg3[%c0_9, %c0_10], %13 {strides = array<i32>} : memref<1x64xf32, #tpu.memory_space<vmem>>, vector<1x64xf32>,
    return
  }
  func.func @transform_0(%arg0: i32) -> (i32, i32) {
    %c0_i32 = arith.constant 0 : i32
    %c0_i32_0 = arith.constant 0 : i32
    return %arg0, %c0_i32 : i32, i32
  }
  func.func @transform_1(%arg0: i32) -> (i32, i32) {
    %c0_i32 = arith.constant 0 : i32
    %c0_i32_0 = arith.constant 0 : i32
    %c0_i32_1 = arith.constant 0 : i32
    return %c0_i32, %c0_i32_0 : i32, i32
  }
  func.func @transform_2(%arg0: i32) -> (i32, i32) {
    %c0_i32 = arith.constant 0 : i32
    %c0_i32_0 = arith.constant 0 : i32
    %c0_i32_1 = arith.constant 0 : i32
    return %c0_i32, %c0_i32_0 : i32, i32
  }
}

module attributes {stable_mosaic.version = 11 : i64} {
  func.func @_bn_stats_kernel(%arg0: i32, %arg1: memref<32x64xf32, #tpu.memory_space<vmem>>, %arg2: memref<1x64xf32, #tpu.memory_space<vmem>>, %arg3: memref<1x64xf32, #tpu.memory_space<vmem>>) attributes {dimension_semantics = [#tpu.dimension_semantics<arbitrary>], iteration_bounds = array<i64: 1>, scalar_prefetch = 0 : i64, scratch_operands = 0 : i64, tpu.core_type = #tpu.core_type<tc>, window_params = [{transform_indices = @transform_0, window_bounds = array<i64: 32, 64>}, {pipeline_mode = #tpu.pipeline_mode<synchronous>, transform_indices = @transform_1, window_bounds = array<i64: 1, 64>}, {pipeline_mode = #tpu.pipeline_mode<synchronous>, transform_indices = @transform_2, window_bounds = array<i64: 1, 64>}]} {
    %c0_i32 = arith.constant 0 : i32
    %0 = arith.cmpi eq, %arg0, %c0_i32 : i32
    %1 = arith.extui %0 : i1 to i32
    %c0_i32_0 = arith.constant 0 : i32
    %2 = arith.cmpi ne, %1, %c0_i32_0 : i32
    scf.if %2 {
      %cst_11 = arith.constant 0.000000e+00 : f32
      %15 = vector.broadcast %cst_11 : f32 to vector<1x64xf32>
      %c0_12 = arith.constant 0 : index
      %c0_13 = arith.constant 0 : index
      %16 = vector.load %arg2[%c0_12, %c0_13] : memref<1x64xf32, #tpu.memory_space<vmem>>, vector<1x64xf32>
      tpu.vector_store %arg2[%c0_12, %c0_13], %15 {strides = array<i32>} : memref<1x64xf32, #tpu.memory_space<vmem>>, vector<1x64xf32>,
      %cst_14 = arith.constant 0.000000e+00 : f32
      %17 = vector.broadcast %cst_14 : f32 to vector<1x64xf32>
      %c0_15 = arith.constant 0 : index
      %c0_16 = arith.constant 0 : index
      %18 = vector.load %arg3[%c0_15, %c0_16] : memref<1x64xf32, #tpu.memory_space<vmem>>, vector<1x64xf32>
      tpu.vector_store %arg3[%c0_15, %c0_16], %17 {strides = array<i32>} : memref<1x64xf32, #tpu.memory_space<vmem>>, vector<1x64xf32>,
    } else {
    }
    %c0 = arith.constant 0 : index
    %c0_1 = arith.constant 0 : index
    %3 = vector.load %arg1[%c0, %c0_1] : memref<32x64xf32, #tpu.memory_space<vmem>>, vector<32x64xf32>
    %c0_2 = arith.constant 0 : index
    %c0_3 = arith.constant 0 : index
    %4 = vector.load %arg2[%c0_2, %c0_3] : memref<1x64xf32, #tpu.memory_space<vmem>>, vector<1x64xf32>
    %cst = arith.constant dense<0.000000e+00> : vector<64xf32>
    %5 = vector.multi_reduction <add>, %3, %cst [0] : vector<32x64xf32> to vector<64xf32>
    %6 = vector.shape_cast %5 : vector<64xf32> to vector<1x64xf32>
    %7 = arith.addf %4, %6 : vector<1x64xf32>
    %c0_4 = arith.constant 0 : index
    %c0_5 = arith.constant 0 : index
    %8 = vector.load %arg2[%c0_4, %c0_5] : memref<1x64xf32, #tpu.memory_space<vmem>>, vector<1x64xf32>
    tpu.vector_store %arg2[%c0_4, %c0_5], %7 {strides = array<i32>} : memref<1x64xf32, #tpu.memory_space<vmem>>, vector<1x64xf32>,
    %c0_6 = arith.constant 0 : index
    %c0_7 = arith.constant 0 : index
    %9 = vector.load %arg3[%c0_6, %c0_7] : memref<1x64xf32, #tpu.memory_space<vmem>>, vector<1x64xf32>
    %10 = arith.mulf %3, %3 : vector<32x64xf32>
    %cst_8 = arith.constant dense<0.000000e+00> : vector<64xf32>
    %11 = vector.multi_reduction <add>, %10, %cst_8 [0] : vector<32x64xf32> to vector<64xf32>
    %12 = vector.shape_cast %11 : vector<64xf32> to vector<1x64xf32>
    %13 = arith.addf %9, %12 : vector<1x64xf32>
    %c0_9 = arith.constant 0 : index
    %c0_10 = arith.constant 0 : index
    %14 = vector.load %arg3[%c0_9, %c0_10] : memref<1x64xf32, #tpu.memory_space<vmem>>, vector<1x64xf32>
    tpu.vector_store %arg3[%c0_9, %c0_10], %13 {strides = array<i32>} : memref<1x64xf32, #tpu.memory_space<vmem>>, vector<1x64xf32>,
    return
  }
  func.func @transform_0(%arg0: i32) -> (i32, i32) {
    %c0_i32 = arith.constant 0 : i32
    %c0_i32_0 = arith.constant 0 : i32
    return %arg0, %c0_i32 : i32, i32
  }
  func.func @transform_1(%arg0: i32) -> (i32, i32) {
    %c0_i32 = arith.constant 0 : i32
    %c0_i32_0 = arith.constant 0 : i32
    %c0_i32_1 = arith.constant 0 : i32
    return %c0_i32, %c0_i32_0 : i32, i32
  }
  func.func @transform_2(%arg0: i32) -> (i32, i32) {
    %c0_i32 = arith.constant 0 : i32
    %c0_i32_0 = arith.constant 0 : i32
    %c0_i32_1 = arith.constant 0 : i32
    return %c0_i32, %c0_i32_0 : i32, i32
  }
}

module attributes {stable_mosaic.version = 11 : i64} {
  func.func @_maxpool_kernel(%arg0: i32, %arg1: memref<32x64xf32, #tpu.memory_space<vmem>>, %arg2: memref<32x64xf32, #tpu.memory_space<vmem>>, %arg3: memref<32x64xf32, #tpu.memory_space<vmem>>, %arg4: memref<32x64xf32, #tpu.memory_space<vmem>>, %arg5: memref<32x64xf32, #tpu.memory_space<vmem>>, %arg6: memref<32x64xf32, #tpu.memory_space<vmem>>, %arg7: memref<32x64xf32, #tpu.memory_space<vmem>>, %arg8: memref<32x64xf32, #tpu.memory_space<vmem>>, %arg9: memref<32x64xf32, #tpu.memory_space<vmem>>, %arg10: memref<32x64xf32, #tpu.memory_space<vmem>>) attributes {dimension_semantics = [#tpu.dimension_semantics<parallel>], iteration_bounds = array<i64: 1>, scalar_prefetch = 0 : i64, scratch_operands = 0 : i64, tpu.core_type = #tpu.core_type<tc>, window_params = [{transform_indices = @transform_0, window_bounds = array<i64: 32, 64>}, {transform_indices = @transform_1, window_bounds = array<i64: 32, 64>}, {transform_indices = @transform_2, window_bounds = array<i64: 32, 64>}, {transform_indices = @transform_3, window_bounds = array<i64: 32, 64>}, {transform_indices = @transform_4, window_bounds = array<i64: 32, 64>}, {transform_indices = @transform_5, window_bounds = array<i64: 32, 64>}, {transform_indices = @transform_6, window_bounds = array<i64: 32, 64>}, {transform_indices = @transform_7, window_bounds = array<i64: 32, 64>}, {transform_indices = @transform_8, window_bounds = array<i64: 32, 64>}, {transform_indices = @transform_9, window_bounds = array<i64: 32, 64>}]} {
    %c0 = arith.constant 0 : index
    %c0_0 = arith.constant 0 : index
    %0 = vector.load %arg1[%c0, %c0_0] : memref<32x64xf32, #tpu.memory_space<vmem>>, vector<32x64xf32>
    %c0_1 = arith.constant 0 : index
    %c0_2 = arith.constant 0 : index
    %1 = vector.load %arg2[%c0_1, %c0_2] : memref<32x64xf32, #tpu.memory_space<vmem>>, vector<32x64xf32>
    %2 = arith.maximumf %0, %1 : vector<32x64xf32>
    %c0_3 = arith.constant 0 : index
    %c0_4 = arith.constant 0 : index
    %3 = vector.load %arg3[%c0_3, %c0_4] : memref<32x64xf32, #tpu.memory_space<vmem>>, vector<32x64xf32>
    %4 = arith.maximumf %2, %3 : vector<32x64xf32>
    %c0_5 = arith.constant 0 : index
    %c0_6 = arith.constant 0 : index
    %5 = vector.load %arg4[%c0_5, %c0_6] : memref<32x64xf32, #tpu.memory_space<vmem>>, vector<32x64xf32>
    %6 = arith.maximumf %4, %5 : vector<32x64xf32>
    %c0_7 = arith.constant 0 : index
    %c0_8 = arith.constant 0 : index
    %7 = vector.load %arg5[%c0_7, %c0_8] : memref<32x64xf32, #tpu.memory_space<vmem>>, vector<32x64xf32>
    %8 = arith.maximumf %6, %7 : vector<32x64xf32>
    %c0_9 = arith.constant 0 : index
    %c0_10 = arith.constant 0 : index
    %9 = vector.load %arg6[%c0_9, %c0_10] : memref<32x64xf32, #tpu.memory_space<vmem>>, vector<32x64xf32>
    %10 = arith.maximumf %8, %9 : vector<32x64xf32>
    %c0_11 = arith.constant 0 : index
    %c0_12 = arith.constant 0 : index
    %11 = vector.load %arg7[%c0_11, %c0_12] : memref<32x64xf32, #tpu.memory_space<vmem>>, vector<32x64xf32>
    %12 = arith.maximumf %10, %11 : vector<32x64xf32>
    %c0_13 = arith.constant 0 : index
    %c0_14 = arith.constant 0 : index
    %13 = vector.load %arg8[%c0_13, %c0_14] : memref<32x64xf32, #tpu.memory_space<vmem>>, vector<32x64xf32>
    %14 = arith.maximumf %12, %13 : vector<32x64xf32>
    %c0_15 = arith.constant 0 : index
    %c0_16 = arith.constant 0 : index
    %15 = vector.load %arg9[%c0_15, %c0_16] : memref<32x64xf32, #tpu.memory_space<vmem>>, vector<32x64xf32>
    %16 = arith.maximumf %14, %15 : vector<32x64xf32>
    %c0_17 = arith.constant 0 : index
    %c0_18 = arith.constant 0 : index
    %17 = vector.load %arg10[%c0_17, %c0_18] : memref<32x64xf32, #tpu.memory_space<vmem>>, vector<32x64xf32>
    tpu.vector_store %arg10[%c0_17, %c0_18], %16 {strides = array<i32>} : memref<32x64xf32, #tpu.memory_space<vmem>>, vector<32x64xf32>,
    return
  }
  func.func @transform_0(%arg0: i32) -> (i32, i32) {
    %c0_i32 = arith.constant 0 : i32
    %c0_i32_0 = arith.constant 0 : i32
    return %arg0, %c0_i32 : i32, i32
  }
  func.func @transform_1(%arg0: i32) -> (i32, i32) {
    %c0_i32 = arith.constant 0 : i32
    %c0_i32_0 = arith.constant 0 : i32
    return %arg0, %c0_i32 : i32, i32
  }
  func.func @transform_2(%arg0: i32) -> (i32, i32) {
    %c0_i32 = arith.constant 0 : i32
    %c0_i32_0 = arith.constant 0 : i32
    return %arg0, %c0_i32 : i32, i32
  }
  func.func @transform_3(%arg0: i32) -> (i32, i32) {
    %c0_i32 = arith.constant 0 : i32
    %c0_i32_0 = arith.constant 0 : i32
    return %arg0, %c0_i32 : i32, i32
  }
  func.func @transform_4(%arg0: i32) -> (i32, i32) {
    %c0_i32 = arith.constant 0 : i32
    %c0_i32_0 = arith.constant 0 : i32
    return %arg0, %c0_i32 : i32, i32
  }
  func.func @transform_5(%arg0: i32) -> (i32, i32) {
    %c0_i32 = arith.constant 0 : i32
    %c0_i32_0 = arith.constant 0 : i32
    return %arg0, %c0_i32 : i32, i32
  }
  func.func @transform_6(%arg0: i32) -> (i32, i32) {
    %c0_i32 = arith.constant 0 : i32
    %c0_i32_0 = arith.constant 0 : i32
    return %arg0, %c0_i32 : i32, i32
  }
  func.func @transform_7(%arg0: i32) -> (i32, i32) {
    %c0_i32 = arith.constant 0 : i32
    %c0_i32_0 = arith.constant 0 : i32
    return %arg0, %c0_i32 : i32, i32
  }
  func.func @transform_8(%arg0: i32) -> (i32, i32) {
    %c0_i32 = arith.constant 0 : i32
    %c0_i32_0 = arith.constant 0 : i32
    return %arg0, %c0_i32 : i32, i32
  }
  func.func @transform_9(%arg0: i32) -> (i32, i32) {
    %c0_i32 = arith.constant 0 : i32
    %c0_i32_0 = arith.constant 0 : i32
    return %arg0, %c0_i32 : i32, i32
  }
}

module attributes {stable_mosaic.version = 11 : i64} {
  func.func @_bn_apply_kernel(%arg0: i32, %arg1: memref<32x64xf32, #tpu.memory_space<vmem>>, %arg2: memref<1x64xf32, #tpu.memory_space<vmem>>, %arg3: memref<1x64xf32, #tpu.memory_space<vmem>>, %arg4: memref<32x64xf32, #tpu.memory_space<vmem>>) attributes {dimension_semantics = [#tpu.dimension_semantics<parallel>], iteration_bounds = array<i64: 1>, scalar_prefetch = 0 : i64, scratch_operands = 0 : i64, tpu.core_type = #tpu.core_type<tc>, window_params = [{transform_indices = @transform_0, window_bounds = array<i64: 32, 64>}, {pipeline_mode = #tpu.pipeline_mode<synchronous>, transform_indices = @transform_1, window_bounds = array<i64: 1, 64>}, {pipeline_mode = #tpu.pipeline_mode<synchronous>, transform_indices = @transform_2, window_bounds = array<i64: 1, 64>}, {transform_indices = @transform_3, window_bounds = array<i64: 32, 64>}]} {
    %c0 = arith.constant 0 : index
    %c0_0 = arith.constant 0 : index
    %0 = vector.load %arg1[%c0, %c0_0] : memref<32x64xf32, #tpu.memory_space<vmem>>, vector<32x64xf32>
    %c0_1 = arith.constant 0 : index
    %c0_2 = arith.constant 0 : index
    %1 = vector.load %arg2[%c0_1, %c0_2] : memref<1x64xf32, #tpu.memory_space<vmem>>, vector<1x64xf32>
    %2 = vector.broadcast %1 : vector<1x64xf32> to vector<32x64xf32>
    %3 = arith.mulf %0, %2 : vector<32x64xf32>
    %c0_3 = arith.constant 0 : index
    %c0_4 = arith.constant 0 : index
    %4 = vector.load %arg3[%c0_3, %c0_4] : memref<1x64xf32, #tpu.memory_space<vmem>>, vector<1x64xf32>
    %5 = vector.broadcast %4 : vector<1x64xf32> to vector<32x64xf32>
    %6 = arith.addf %3, %5 : vector<32x64xf32>
    %c0_5 = arith.constant 0 : index
    %c0_6 = arith.constant 0 : index
    %7 = vector.load %arg4[%c0_5, %c0_6] : memref<32x64xf32, #tpu.memory_space<vmem>>, vector<32x64xf32>
    tpu.vector_store %arg4[%c0_5, %c0_6], %6 {strides = array<i32>} : memref<32x64xf32, #tpu.memory_space<vmem>>, vector<32x64xf32>,
    return
  }
  func.func @transform_0(%arg0: i32) -> (i32, i32) {
    %c0_i32 = arith.constant 0 : i32
    %c0_i32_0 = arith.constant 0 : i32
    return %arg0, %c0_i32 : i32, i32
  }
  func.func @transform_1(%arg0: i32) -> (i32, i32) {
    %c0_i32 = arith.constant 0 : i32
    %c0_i32_0 = arith.constant 0 : i32
    %c0_i32_1 = arith.constant 0 : i32
    return %c0_i32, %c0_i32_0 : i32, i32
  }
  func.func @transform_2(%arg0: i32) -> (i32, i32) {
    %c0_i32 = arith.constant 0 : i32
    %c0_i32_0 = arith.constant 0 : i32
    %c0_i32_1 = arith.constant 0 : i32
    return %c0_i32, %c0_i32_0 : i32, i32
  }
  func.func @transform_3(%arg0: i32) -> (i32, i32) {
    %c0_i32 = arith.constant 0 : i32
    %c0_i32_0 = arith.constant 0 : i32
    return %arg0, %c0_i32 : i32, i32
  }
}

module attributes {stable_mosaic.version = 11 : i64} {
  func.func @_matmul_bias_kernel(%arg0: i32, %arg1: i32, %arg2: i32, %arg3: memref<128x128xbf16, #tpu.memory_space<vmem>>, %arg4: memref<128x128xbf16, #tpu.memory_space<vmem>>, %arg5: memref<1x128xf32, #tpu.memory_space<vmem>>, %arg6: memref<128x128xf32, #tpu.memory_space<vmem>>, %arg7: memref<128x128xf32, #tpu.memory_space<vmem>>) attributes {dimension_semantics = [#tpu.dimension_semantics<parallel>, #tpu.dimension_semantics<parallel>, #tpu.dimension_semantics<arbitrary>], iteration_bounds = array<i64: 1, 1, 1>, scalar_prefetch = 0 : i64, scratch_operands = 1 : i64, tpu.core_type = #tpu.core_type<tc>, window_params = [{transform_indices = @transform_0, window_bounds = array<i64: 128, 128>}, {transform_indices = @transform_1, window_bounds = array<i64: 128, 128>}, {transform_indices = @transform_2, window_bounds = array<i64: 1, 128>}, {transform_indices = @transform_3, window_bounds = array<i64: 128, 128>}]} {
    %c0_i32 = arith.constant 0 : i32
    %0 = arith.cmpi eq, %arg2, %c0_i32 : i32
    %1 = arith.extui %0 : i1 to i32
    %c0_i32_0 = arith.constant 0 : i32
    %2 = arith.cmpi ne, %1, %c0_i32_0 : i32
    scf.if %2 {
      %cst_10 = arith.constant 0.000000e+00 : f32
      %12 = vector.broadcast %cst_10 : f32 to vector<128x128xf32>
      %c0_11 = arith.constant 0 : index
      %c0_12 = arith.constant 0 : index
      %13 = vector.load %arg7[%c0_11, %c0_12] : memref<128x128xf32, #tpu.memory_space<vmem>>, vector<128x128xf32>
      tpu.vector_store %arg7[%c0_11, %c0_12], %12 {strides = array<i32>} : memref<128x128xf32, #tpu.memory_space<vmem>>, vector<128x128xf32>,
    } else {
    }
    %c0 = arith.constant 0 : index
    %c0_1 = arith.constant 0 : index
    %3 = vector.load %arg7[%c0, %c0_1] : memref<128x128xf32, #tpu.memory_space<vmem>>, vector<128x128xf32>
    %c0_2 = arith.constant 0 : index
    %c0_3 = arith.constant 0 : index
    %4 = vector.load %arg3[%c0_2, %c0_3] : memref<128x128xbf16, #tpu.memory_space<vmem>>, vector<128x128xbf16>
    %c0_4 = arith.constant 0 : index
    %c0_5 = arith.constant 0 : index
    %5 = vector.load %arg4[%c0_4, %c0_5] : memref<128x128xbf16, #tpu.memory_space<vmem>>, vector<128x128xbf16>
    %cst = arith.constant dense<0.000000e+00> : vector<128x128xf32>
    %6 = tpu.matmul %4, %5, %cst {dimension_numbers = #tpu.dot_dimension_numbers<[1], [0], [0], [1], [0, 0, 1, 1], [], []>} : vector<128x128xbf16>, vector<128x128xbf16>, vector<128x128xf32> -> vector<128x128xf32>
    %7 = arith.addf %3, %6 : vector<128x128xf32>
    %c0_6 = arith.constant 0 : index
    %c0_7 = arith.constant 0 : index
    %8 = vector.load %arg7[%c0_6, %c0_7] : memref<128x128xf32, #tpu.memory_space<vmem>>, vector<128x128xf32>
    tpu.vector_store %arg7[%c0_6, %c0_7], %7 {strides = array<i32>} : memref<128x128xf32, #tpu.memory_space<vmem>>, vector<128x128xf32>,
    %c0_i32_8 = arith.constant 0 : i32
    %9 = arith.cmpi eq, %arg2, %c0_i32_8 : i32
    %10 = arith.extui %9 : i1 to i32
    %c0_i32_9 = arith.constant 0 : i32
    %11 = arith.cmpi ne, %10, %c0_i32_9 : i32
    scf.if %11 {
      %c0_10 = arith.constant 0 : index
      %c0_11 = arith.constant 0 : index
      %12 = vector.load %arg7[%c0_10, %c0_11] : memref<128x128xf32, #tpu.memory_space<vmem>>, vector<128x128xf32>
      %c0_12 = arith.constant 0 : index
      %c0_13 = arith.constant 0 : index
      %13 = vector.load %arg5[%c0_12, %c0_13] : memref<1x128xf32, #tpu.memory_space<vmem>>, vector<1x128xf32>
      %14 = vector.broadcast %13 : vector<1x128xf32> to vector<128x128xf32>
      %15 = arith.addf %12, %14 : vector<128x128xf32>
      %c0_14 = arith.constant 0 : index
      %c0_15 = arith.constant 0 : index
      %16 = vector.load %arg6[%c0_14, %c0_15] : memref<128x128xf32, #tpu.memory_space<vmem>>, vector<128x128xf32>
      tpu.vector_store %arg6[%c0_14, %c0_15], %15 {strides = array<i32>} : memref<128x128xf32, #tpu.memory_space<vmem>>, vector<128x128xf32>,
    } else {
    }
    return
  }
  func.func @transform_0(%arg0: i32, %arg1: i32, %arg2: i32) -> (i32, i32) {
    %c0_i32 = arith.constant 0 : i32
    return %arg0, %arg2 : i32, i32
  }
  func.func @transform_1(%arg0: i32, %arg1: i32, %arg2: i32) -> (i32, i32) {
    %c0_i32 = arith.constant 0 : i32
    return %arg2, %arg1 : i32, i32
  }
  func.func @transform_2(%arg0: i32, %arg1: i32, %arg2: i32) -> (i32, i32) {
    %c0_i32 = arith.constant 0 : i32
    %c0_i32_0 = arith.constant 0 : i32
    return %c0_i32, %arg1 : i32, i32
  }
  func.func @transform_3(%arg0: i32, %arg1: i32, %arg2: i32) -> (i32, i32) {
    %c0_i32 = arith.constant 0 : i32
    return %arg0, %arg1 : i32, i32
  }
}

module attributes {stable_mosaic.version = 11 : i64} {
  func.func @_bn_apply_kernel(%arg0: i32, %arg1: memref<32x64xf32, #tpu.memory_space<vmem>>, %arg2: memref<1x64xf32, #tpu.memory_space<vmem>>, %arg3: memref<1x64xf32, #tpu.memory_space<vmem>>, %arg4: memref<32x64xf32, #tpu.memory_space<vmem>>) attributes {dimension_semantics = [#tpu.dimension_semantics<parallel>], iteration_bounds = array<i64: 1>, scalar_prefetch = 0 : i64, scratch_operands = 0 : i64, tpu.core_type = #tpu.core_type<tc>, window_params = [{transform_indices = @transform_0, window_bounds = array<i64: 32, 64>}, {pipeline_mode = #tpu.pipeline_mode<synchronous>, transform_indices = @transform_1, window_bounds = array<i64: 1, 64>}, {pipeline_mode = #tpu.pipeline_mode<synchronous>, transform_indices = @transform_2, window_bounds = array<i64: 1, 64>}, {transform_indices = @transform_3, window_bounds = array<i64: 32, 64>}]} {
    %c0 = arith.constant 0 : index
    %c0_0 = arith.constant 0 : index
    %0 = vector.load %arg1[%c0, %c0_0] : memref<32x64xf32, #tpu.memory_space<vmem>>, vector<32x64xf32>
    %c0_1 = arith.constant 0 : index
    %c0_2 = arith.constant 0 : index
    %1 = vector.load %arg2[%c0_1, %c0_2] : memref<1x64xf32, #tpu.memory_space<vmem>>, vector<1x64xf32>
    %2 = vector.broadcast %1 : vector<1x64xf32> to vector<32x64xf32>
    %3 = arith.mulf %0, %2 : vector<32x64xf32>
    %c0_3 = arith.constant 0 : index
    %c0_4 = arith.constant 0 : index
    %4 = vector.load %arg3[%c0_3, %c0_4] : memref<1x64xf32, #tpu.memory_space<vmem>>, vector<1x64xf32>
    %5 = vector.broadcast %4 : vector<1x64xf32> to vector<32x64xf32>
    %6 = arith.addf %3, %5 : vector<32x64xf32>
    %cst = arith.constant 0.000000e+00 : f32
    %7 = vector.broadcast %cst : f32 to vector<32x64xf32>
    %8 = arith.maximumf %6, %7 : vector<32x64xf32>
    %c0_5 = arith.constant 0 : index
    %c0_6 = arith.constant 0 : index
    %9 = vector.load %arg4[%c0_5, %c0_6] : memref<32x64xf32, #tpu.memory_space<vmem>>, vector<32x64xf32>
    tpu.vector_store %arg4[%c0_5, %c0_6], %8 {strides = array<i32>} : memref<32x64xf32, #tpu.memory_space<vmem>>, vector<32x64xf32>,
    return
  }
  func.func @transform_0(%arg0: i32) -> (i32, i32) {
    %c0_i32 = arith.constant 0 : i32
    %c0_i32_0 = arith.constant 0 : i32
    return %arg0, %c0_i32 : i32, i32
  }
  func.func @transform_1(%arg0: i32) -> (i32, i32) {
    %c0_i32 = arith.constant 0 : i32
    %c0_i32_0 = arith.constant 0 : i32
    %c0_i32_1 = arith.constant 0 : i32
    return %c0_i32, %c0_i32_0 : i32, i32
  }
  func.func @transform_2(%arg0: i32) -> (i32, i32) {
    %c0_i32 = arith.constant 0 : i32
    %c0_i32_0 = arith.constant 0 : i32
    %c0_i32_1 = arith.constant 0 : i32
    return %c0_i32, %c0_i32_0 : i32, i32
  }
  func.func @transform_3(%arg0: i32) -> (i32, i32) {
    %c0_i32 = arith.constant 0 : i32
    %c0_i32_0 = arith.constant 0 : i32
    return %arg0, %c0_i32 : i32, i32
  }
}

module attributes {stable_mosaic.version = 11 : i64} {
  func.func @_bn_apply_kernel(%arg0: i32, %arg1: memref<32x8xf32, #tpu.memory_space<vmem>>, %arg2: memref<1x8xf32, #tpu.memory_space<vmem>>, %arg3: memref<1x8xf32, #tpu.memory_space<vmem>>, %arg4: memref<32x8xf32, #tpu.memory_space<vmem>>) attributes {dimension_semantics = [#tpu.dimension_semantics<parallel>], iteration_bounds = array<i64: 1>, scalar_prefetch = 0 : i64, scratch_operands = 0 : i64, tpu.core_type = #tpu.core_type<tc>, window_params = [{transform_indices = @transform_0, window_bounds = array<i64: 32, 8>}, {pipeline_mode = #tpu.pipeline_mode<synchronous>, transform_indices = @transform_1, window_bounds = array<i64: 1, 8>}, {pipeline_mode = #tpu.pipeline_mode<synchronous>, transform_indices = @transform_2, window_bounds = array<i64: 1, 8>}, {transform_indices = @transform_3, window_bounds = array<i64: 32, 8>}]} {
    %c0 = arith.constant 0 : index
    %c0_0 = arith.constant 0 : index
    %0 = vector.load %arg1[%c0, %c0_0] : memref<32x8xf32, #tpu.memory_space<vmem>>, vector<32x8xf32>
    %c0_1 = arith.constant 0 : index
    %c0_2 = arith.constant 0 : index
    %1 = vector.load %arg2[%c0_1, %c0_2] : memref<1x8xf32, #tpu.memory_space<vmem>>, vector<1x8xf32>
    %2 = vector.broadcast %1 : vector<1x8xf32> to vector<32x8xf32>
    %3 = arith.mulf %0, %2 : vector<32x8xf32>
    %c0_3 = arith.constant 0 : index
    %c0_4 = arith.constant 0 : index
    %4 = vector.load %arg3[%c0_3, %c0_4] : memref<1x8xf32, #tpu.memory_space<vmem>>, vector<1x8xf32>
    %5 = vector.broadcast %4 : vector<1x8xf32> to vector<32x8xf32>
    %6 = arith.addf %3, %5 : vector<32x8xf32>
    %cst = arith.constant 0.000000e+00 : f32
    %7 = vector.broadcast %cst : f32 to vector<32x8xf32>
    %8 = arith.maximumf %6, %7 : vector<32x8xf32>
    %c0_5 = arith.constant 0 : index
    %c0_6 = arith.constant 0 : index
    %9 = vector.load %arg4[%c0_5, %c0_6] : memref<32x8xf32, #tpu.memory_space<vmem>>, vector<32x8xf32>
    tpu.vector_store %arg4[%c0_5, %c0_6], %8 {strides = array<i32>} : memref<32x8xf32, #tpu.memory_space<vmem>>, vector<32x8xf32>,
    return
  }
  func.func @transform_0(%arg0: i32) -> (i32, i32) {
    %c0_i32 = arith.constant 0 : i32
    %c0_i32_0 = arith.constant 0 : i32
    return %arg0, %c0_i32 : i32, i32
  }
  func.func @transform_1(%arg0: i32) -> (i32, i32) {
    %c0_i32 = arith.constant 0 : i32
    %c0_i32_0 = arith.constant 0 : i32
    %c0_i32_1 = arith.constant 0 : i32
    return %c0_i32, %c0_i32_0 : i32, i32
  }
  func.func @transform_2(%arg0: i32) -> (i32, i32) {
    %c0_i32 = arith.constant 0 : i32
    %c0_i32_0 = arith.constant 0 : i32
    %c0_i32_1 = arith.constant 0 : i32
    return %c0_i32, %c0_i32_0 : i32, i32
  }
  func.func @transform_3(%arg0: i32) -> (i32, i32) {
    %c0_i32 = arith.constant 0 : i32
    %c0_i32_0 = arith.constant 0 : i32
    return %arg0, %c0_i32 : i32, i32
  }
}

module attributes {stable_mosaic.version = 11 : i64} {
  func.func @_bn_stats_kernel(%arg0: i32, %arg1: memref<32x8xf32, #tpu.memory_space<vmem>>, %arg2: memref<1x8xf32, #tpu.memory_space<vmem>>, %arg3: memref<1x8xf32, #tpu.memory_space<vmem>>) attributes {dimension_semantics = [#tpu.dimension_semantics<arbitrary>], iteration_bounds = array<i64: 1>, scalar_prefetch = 0 : i64, scratch_operands = 0 : i64, tpu.core_type = #tpu.core_type<tc>, window_params = [{transform_indices = @transform_0, window_bounds = array<i64: 32, 8>}, {pipeline_mode = #tpu.pipeline_mode<synchronous>, transform_indices = @transform_1, window_bounds = array<i64: 1, 8>}, {pipeline_mode = #tpu.pipeline_mode<synchronous>, transform_indices = @transform_2, window_bounds = array<i64: 1, 8>}]} {
    %c0_i32 = arith.constant 0 : i32
    %0 = arith.cmpi eq, %arg0, %c0_i32 : i32
    %1 = arith.extui %0 : i1 to i32
    %c0_i32_0 = arith.constant 0 : i32
    %2 = arith.cmpi ne, %1, %c0_i32_0 : i32
    scf.if %2 {
      %cst_11 = arith.constant 0.000000e+00 : f32
      %15 = vector.broadcast %cst_11 : f32 to vector<1x8xf32>
      %c0_12 = arith.constant 0 : index
      %c0_13 = arith.constant 0 : index
      %16 = vector.load %arg2[%c0_12, %c0_13] : memref<1x8xf32, #tpu.memory_space<vmem>>, vector<1x8xf32>
      tpu.vector_store %arg2[%c0_12, %c0_13], %15 {strides = array<i32>} : memref<1x8xf32, #tpu.memory_space<vmem>>, vector<1x8xf32>,
      %cst_14 = arith.constant 0.000000e+00 : f32
      %17 = vector.broadcast %cst_14 : f32 to vector<1x8xf32>
      %c0_15 = arith.constant 0 : index
      %c0_16 = arith.constant 0 : index
      %18 = vector.load %arg3[%c0_15, %c0_16] : memref<1x8xf32, #tpu.memory_space<vmem>>, vector<1x8xf32>
      tpu.vector_store %arg3[%c0_15, %c0_16], %17 {strides = array<i32>} : memref<1x8xf32, #tpu.memory_space<vmem>>, vector<1x8xf32>,
    } else {
    }
    %c0 = arith.constant 0 : index
    %c0_1 = arith.constant 0 : index
    %3 = vector.load %arg1[%c0, %c0_1] : memref<32x8xf32, #tpu.memory_space<vmem>>, vector<32x8xf32>
    %c0_2 = arith.constant 0 : index
    %c0_3 = arith.constant 0 : index
    %4 = vector.load %arg2[%c0_2, %c0_3] : memref<1x8xf32, #tpu.memory_space<vmem>>, vector<1x8xf32>
    %cst = arith.constant dense<0.000000e+00> : vector<8xf32>
    %5 = vector.multi_reduction <add>, %3, %cst [0] : vector<32x8xf32> to vector<8xf32>
    %6 = vector.shape_cast %5 : vector<8xf32> to vector<1x8xf32>
    %7 = arith.addf %4, %6 : vector<1x8xf32>
    %c0_4 = arith.constant 0 : index
    %c0_5 = arith.constant 0 : index
    %8 = vector.load %arg2[%c0_4, %c0_5] : memref<1x8xf32, #tpu.memory_space<vmem>>, vector<1x8xf32>
    tpu.vector_store %arg2[%c0_4, %c0_5], %7 {strides = array<i32>} : memref<1x8xf32, #tpu.memory_space<vmem>>, vector<1x8xf32>,
    %c0_6 = arith.constant 0 : index
    %c0_7 = arith.constant 0 : index
    %9 = vector.load %arg3[%c0_6, %c0_7] : memref<1x8xf32, #tpu.memory_space<vmem>>, vector<1x8xf32>
    %10 = arith.mulf %3, %3 : vector<32x8xf32>
    %cst_8 = arith.constant dense<0.000000e+00> : vector<8xf32>
    %11 = vector.multi_reduction <add>, %10, %cst_8 [0] : vector<32x8xf32> to vector<8xf32>
    %12 = vector.shape_cast %11 : vector<8xf32> to vector<1x8xf32>
    %13 = arith.addf %9, %12 : vector<1x8xf32>
    %c0_9 = arith.constant 0 : index
    %c0_10 = arith.constant 0 : index
    %14 = vector.load %arg3[%c0_9, %c0_10] : memref<1x8xf32, #tpu.memory_space<vmem>>, vector<1x8xf32>
    tpu.vector_store %arg3[%c0_9, %c0_10], %13 {strides = array<i32>} : memref<1x8xf32, #tpu.memory_space<vmem>>, vector<1x8xf32>,
    return
  }
  func.func @transform_0(%arg0: i32) -> (i32, i32) {
    %c0_i32 = arith.constant 0 : i32
    %c0_i32_0 = arith.constant 0 : i32
    return %arg0, %c0_i32 : i32, i32
  }
  func.func @transform_1(%arg0: i32) -> (i32, i32) {
    %c0_i32 = arith.constant 0 : i32
    %c0_i32_0 = arith.constant 0 : i32
    %c0_i32_1 = arith.constant 0 : i32
    return %c0_i32, %c0_i32_0 : i32, i32
  }
  func.func @transform_2(%arg0: i32) -> (i32, i32) {
    %c0_i32 = arith.constant 0 : i32
    %c0_i32_0 = arith.constant 0 : i32
    %c0_i32_1 = arith.constant 0 : i32
    return %c0_i32, %c0_i32_0 : i32, i32
  }
}

module attributes {stable_mosaic.version = 11 : i64} {
  func.func @_bn_apply_kernel(%arg0: i32, %arg1: memref<32x32xf32, #tpu.memory_space<vmem>>, %arg2: memref<1x32xf32, #tpu.memory_space<vmem>>, %arg3: memref<1x32xf32, #tpu.memory_space<vmem>>, %arg4: memref<32x32xf32, #tpu.memory_space<vmem>>) attributes {dimension_semantics = [#tpu.dimension_semantics<parallel>], iteration_bounds = array<i64: 1>, scalar_prefetch = 0 : i64, scratch_operands = 0 : i64, tpu.core_type = #tpu.core_type<tc>, window_params = [{transform_indices = @transform_0, window_bounds = array<i64: 32, 32>}, {pipeline_mode = #tpu.pipeline_mode<synchronous>, transform_indices = @transform_1, window_bounds = array<i64: 1, 32>}, {pipeline_mode = #tpu.pipeline_mode<synchronous>, transform_indices = @transform_2, window_bounds = array<i64: 1, 32>}, {transform_indices = @transform_3, window_bounds = array<i64: 32, 32>}]} {
    %c0 = arith.constant 0 : index
    %c0_0 = arith.constant 0 : index
    %0 = vector.load %arg1[%c0, %c0_0] : memref<32x32xf32, #tpu.memory_space<vmem>>, vector<32x32xf32>
    %c0_1 = arith.constant 0 : index
    %c0_2 = arith.constant 0 : index
    %1 = vector.load %arg2[%c0_1, %c0_2] : memref<1x32xf32, #tpu.memory_space<vmem>>, vector<1x32xf32>
    %2 = vector.broadcast %1 : vector<1x32xf32> to vector<32x32xf32>
    %3 = arith.mulf %0, %2 : vector<32x32xf32>
    %c0_3 = arith.constant 0 : index
    %c0_4 = arith.constant 0 : index
    %4 = vector.load %arg3[%c0_3, %c0_4] : memref<1x32xf32, #tpu.memory_space<vmem>>, vector<1x32xf32>
    %5 = vector.broadcast %4 : vector<1x32xf32> to vector<32x32xf32>
    %6 = arith.addf %3, %5 : vector<32x32xf32>
    %cst = arith.constant 0.000000e+00 : f32
    %7 = vector.broadcast %cst : f32 to vector<32x32xf32>
    %8 = arith.maximumf %6, %7 : vector<32x32xf32>
    %c0_5 = arith.constant 0 : index
    %c0_6 = arith.constant 0 : index
    %9 = vector.load %arg4[%c0_5, %c0_6] : memref<32x32xf32, #tpu.memory_space<vmem>>, vector<32x32xf32>
    tpu.vector_store %arg4[%c0_5, %c0_6], %8 {strides = array<i32>} : memref<32x32xf32, #tpu.memory_space<vmem>>, vector<32x32xf32>,
    return
  }
  func.func @transform_0(%arg0: i32) -> (i32, i32) {
    %c0_i32 = arith.constant 0 : i32
    %c0_i32_0 = arith.constant 0 : i32
    return %arg0, %c0_i32 : i32, i32
  }
  func.func @transform_1(%arg0: i32) -> (i32, i32) {
    %c0_i32 = arith.constant 0 : i32
    %c0_i32_0 = arith.constant 0 : i32
    %c0_i32_1 = arith.constant 0 : i32
    return %c0_i32, %c0_i32_0 : i32, i32
  }
  func.func @transform_2(%arg0: i32) -> (i32, i32) {
    %c0_i32 = arith.constant 0 : i32
    %c0_i32_0 = arith.constant 0 : i32
    %c0_i32_1 = arith.constant 0 : i32
    return %c0_i32, %c0_i32_0 : i32, i32
  }
  func.func @transform_3(%arg0: i32) -> (i32, i32) {
    %c0_i32 = arith.constant 0 : i32
    %c0_i32_0 = arith.constant 0 : i32
    return %arg0, %c0_i32 : i32, i32
  }
}

module attributes {stable_mosaic.version = 11 : i64} {
  func.func @_matmul_bias_res_kernel(%arg0: i32, %arg1: i32, %arg2: i32, %arg3: memref<128x128xbf16, #tpu.memory_space<vmem>>, %arg4: memref<128x128xbf16, #tpu.memory_space<vmem>>, %arg5: memref<1x128xf32, #tpu.memory_space<vmem>>, %arg6: memref<128x128xf32, #tpu.memory_space<vmem>>, %arg7: memref<128x128xf32, #tpu.memory_space<vmem>>, %arg8: memref<128x128xf32, #tpu.memory_space<vmem>>) attributes {dimension_semantics = [#tpu.dimension_semantics<parallel>, #tpu.dimension_semantics<parallel>, #tpu.dimension_semantics<arbitrary>], iteration_bounds = array<i64: 1, 1, 1>, scalar_prefetch = 0 : i64, scratch_operands = 1 : i64, tpu.core_type = #tpu.core_type<tc>, window_params = [{transform_indices = @transform_0, window_bounds = array<i64: 128, 128>}, {transform_indices = @transform_1, window_bounds = array<i64: 128, 128>}, {transform_indices = @transform_2, window_bounds = array<i64: 1, 128>}, {transform_indices = @transform_3, window_bounds = array<i64: 128, 128>}, {transform_indices = @transform_4, window_bounds = array<i64: 128, 128>}]} {
    %c0_i32 = arith.constant 0 : i32
    %0 = arith.cmpi eq, %arg2, %c0_i32 : i32
    %1 = arith.extui %0 : i1 to i32
    %c0_i32_0 = arith.constant 0 : i32
    %2 = arith.cmpi ne, %1, %c0_i32_0 : i32
    scf.if %2 {
      %cst_10 = arith.constant 0.000000e+00 : f32
      %12 = vector.broadcast %cst_10 : f32 to vector<128x128xf32>
      %c0_11 = arith.constant 0 : index
      %c0_12 = arith.constant 0 : index
      %13 = vector.load %arg8[%c0_11, %c0_12] : memref<128x128xf32, #tpu.memory_space<vmem>>, vector<128x128xf32>
      tpu.vector_store %arg8[%c0_11, %c0_12], %12 {strides = array<i32>} : memref<128x128xf32, #tpu.memory_space<vmem>>, vector<128x128xf32>,
    } else {
    }
    %c0 = arith.constant 0 : index
    %c0_1 = arith.constant 0 : index
    %3 = vector.load %arg8[%c0, %c0_1] : memref<128x128xf32, #tpu.memory_space<vmem>>, vector<128x128xf32>
    %c0_2 = arith.constant 0 : index
    %c0_3 = arith.constant 0 : index
    %4 = vector.load %arg3[%c0_2, %c0_3] : memref<128x128xbf16, #tpu.memory_space<vmem>>, vector<128x128xbf16>
    %c0_4 = arith.constant 0 : index
    %c0_5 = arith.constant 0 : index
    %5 = vector.load %arg4[%c0_4, %c0_5] : memref<128x128xbf16, #tpu.memory_space<vmem>>, vector<128x128xbf16>
    %cst = arith.constant dense<0.000000e+00> : vector<128x128xf32>
    %6 = tpu.matmul %4, %5, %cst {dimension_numbers = #tpu.dot_dimension_numbers<[1], [0], [0], [1], [0, 0, 1, 1], [], []>} : vector<128x128xbf16>, vector<128x128xbf16>, vector<128x128xf32> -> vector<128x128xf32>
    %7 = arith.addf %3, %6 : vector<128x128xf32>
    %c0_6 = arith.constant 0 : index
    %c0_7 = arith.constant 0 : index
    %8 = vector.load %arg8[%c0_6, %c0_7] : memref<128x128xf32, #tpu.memory_space<vmem>>, vector<128x128xf32>
    tpu.vector_store %arg8[%c0_6, %c0_7], %7 {strides = array<i32>} : memref<128x128xf32, #tpu.memory_space<vmem>>, vector<128x128xf32>,
    %c0_i32_8 = arith.constant 0 : i32
    %9 = arith.cmpi eq, %arg2, %c0_i32_8 : i32
    %10 = arith.extui %9 : i1 to i32
    %c0_i32_9 = arith.constant 0 : i32
    %11 = arith.cmpi ne, %10, %c0_i32_9 : i32
    scf.if %11 {
      %c0_10 = arith.constant 0 : index
      %c0_11 = arith.constant 0 : index
      %12 = vector.load %arg8[%c0_10, %c0_11] : memref<128x128xf32, #tpu.memory_space<vmem>>, vector<128x128xf32>
      %c0_12 = arith.constant 0 : index
      %c0_13 = arith.constant 0 : index
      %13 = vector.load %arg5[%c0_12, %c0_13] : memref<1x128xf32, #tpu.memory_space<vmem>>, vector<1x128xf32>
      %14 = vector.broadcast %13 : vector<1x128xf32> to vector<128x128xf32>
      %15 = arith.addf %12, %14 : vector<128x128xf32>
      %c0_14 = arith.constant 0 : index
      %c0_15 = arith.constant 0 : index
      %16 = vector.load %arg6[%c0_14, %c0_15] : memref<128x128xf32, #tpu.memory_space<vmem>>, vector<128x128xf32>
      %17 = arith.addf %15, %16 : vector<128x128xf32>
      %c0_16 = arith.constant 0 : index
      %c0_17 = arith.constant 0 : index
      %18 = vector.load %arg7[%c0_16, %c0_17] : memref<128x128xf32, #tpu.memory_space<vmem>>, vector<128x128xf32>
      tpu.vector_store %arg7[%c0_16, %c0_17], %17 {strides = array<i32>} : memref<128x128xf32, #tpu.memory_space<vmem>>, vector<128x128xf32>,
    } else {
    }
    return
  }
  func.func @transform_0(%arg0: i32, %arg1: i32, %arg2: i32) -> (i32, i32) {
    %c0_i32 = arith.constant 0 : i32
    return %arg0, %arg2 : i32, i32
  }
  func.func @transform_1(%arg0: i32, %arg1: i32, %arg2: i32) -> (i32, i32) {
    %c0_i32 = arith.constant 0 : i32
    return %arg2, %arg1 : i32, i32
  }
  func.func @transform_2(%arg0: i32, %arg1: i32, %arg2: i32) -> (i32, i32) {
    %c0_i32 = arith.constant 0 : i32
    %c0_i32_0 = arith.constant 0 : i32
    return %c0_i32, %arg1 : i32, i32
  }
  func.func @transform_3(%arg0: i32, %arg1: i32, %arg2: i32) -> (i32, i32) {
    %c0_i32 = arith.constant 0 : i32
    return %arg0, %arg1 : i32, i32
  }
  func.func @transform_4(%arg0: i32, %arg1: i32, %arg2: i32) -> (i32, i32) {
    %c0_i32 = arith.constant 0 : i32
    return %arg0, %arg1 : i32, i32
  }
}

module attributes {stable_mosaic.version = 11 : i64} {
  func.func @_bn_stats_kernel(%arg0: i32, %arg1: memref<32x32xf32, #tpu.memory_space<vmem>>, %arg2: memref<1x32xf32, #tpu.memory_space<vmem>>, %arg3: memref<1x32xf32, #tpu.memory_space<vmem>>) attributes {dimension_semantics = [#tpu.dimension_semantics<arbitrary>], iteration_bounds = array<i64: 1>, scalar_prefetch = 0 : i64, scratch_operands = 0 : i64, tpu.core_type = #tpu.core_type<tc>, window_params = [{transform_indices = @transform_0, window_bounds = array<i64: 32, 32>}, {pipeline_mode = #tpu.pipeline_mode<synchronous>, transform_indices = @transform_1, window_bounds = array<i64: 1, 32>}, {pipeline_mode = #tpu.pipeline_mode<synchronous>, transform_indices = @transform_2, window_bounds = array<i64: 1, 32>}]} {
    %c0_i32 = arith.constant 0 : i32
    %0 = arith.cmpi eq, %arg0, %c0_i32 : i32
    %1 = arith.extui %0 : i1 to i32
    %c0_i32_0 = arith.constant 0 : i32
    %2 = arith.cmpi ne, %1, %c0_i32_0 : i32
    scf.if %2 {
      %cst_11 = arith.constant 0.000000e+00 : f32
      %15 = vector.broadcast %cst_11 : f32 to vector<1x32xf32>
      %c0_12 = arith.constant 0 : index
      %c0_13 = arith.constant 0 : index
      %16 = vector.load %arg2[%c0_12, %c0_13] : memref<1x32xf32, #tpu.memory_space<vmem>>, vector<1x32xf32>
      tpu.vector_store %arg2[%c0_12, %c0_13], %15 {strides = array<i32>} : memref<1x32xf32, #tpu.memory_space<vmem>>, vector<1x32xf32>,
      %cst_14 = arith.constant 0.000000e+00 : f32
      %17 = vector.broadcast %cst_14 : f32 to vector<1x32xf32>
      %c0_15 = arith.constant 0 : index
      %c0_16 = arith.constant 0 : index
      %18 = vector.load %arg3[%c0_15, %c0_16] : memref<1x32xf32, #tpu.memory_space<vmem>>, vector<1x32xf32>
      tpu.vector_store %arg3[%c0_15, %c0_16], %17 {strides = array<i32>} : memref<1x32xf32, #tpu.memory_space<vmem>>, vector<1x32xf32>,
    } else {
    }
    %c0 = arith.constant 0 : index
    %c0_1 = arith.constant 0 : index
    %3 = vector.load %arg1[%c0, %c0_1] : memref<32x32xf32, #tpu.memory_space<vmem>>, vector<32x32xf32>
    %c0_2 = arith.constant 0 : index
    %c0_3 = arith.constant 0 : index
    %4 = vector.load %arg2[%c0_2, %c0_3] : memref<1x32xf32, #tpu.memory_space<vmem>>, vector<1x32xf32>
    %cst = arith.constant dense<0.000000e+00> : vector<32xf32>
    %5 = vector.multi_reduction <add>, %3, %cst [0] : vector<32x32xf32> to vector<32xf32>
    %6 = vector.shape_cast %5 : vector<32xf32> to vector<1x32xf32>
    %7 = arith.addf %4, %6 : vector<1x32xf32>
    %c0_4 = arith.constant 0 : index
    %c0_5 = arith.constant 0 : index
    %8 = vector.load %arg2[%c0_4, %c0_5] : memref<1x32xf32, #tpu.memory_space<vmem>>, vector<1x32xf32>
    tpu.vector_store %arg2[%c0_4, %c0_5], %7 {strides = array<i32>} : memref<1x32xf32, #tpu.memory_space<vmem>>, vector<1x32xf32>,
    %c0_6 = arith.constant 0 : index
    %c0_7 = arith.constant 0 : index
    %9 = vector.load %arg3[%c0_6, %c0_7] : memref<1x32xf32, #tpu.memory_space<vmem>>, vector<1x32xf32>
    %10 = arith.mulf %3, %3 : vector<32x32xf32>
    %cst_8 = arith.constant dense<0.000000e+00> : vector<32xf32>
    %11 = vector.multi_reduction <add>, %10, %cst_8 [0] : vector<32x32xf32> to vector<32xf32>
    %12 = vector.shape_cast %11 : vector<32xf32> to vector<1x32xf32>
    %13 = arith.addf %9, %12 : vector<1x32xf32>
    %c0_9 = arith.constant 0 : index
    %c0_10 = arith.constant 0 : index
    %14 = vector.load %arg3[%c0_9, %c0_10] : memref<1x32xf32, #tpu.memory_space<vmem>>, vector<1x32xf32>
    tpu.vector_store %arg3[%c0_9, %c0_10], %13 {strides = array<i32>} : memref<1x32xf32, #tpu.memory_space<vmem>>, vector<1x32xf32>,
    return
  }
  func.func @transform_0(%arg0: i32) -> (i32, i32) {
    %c0_i32 = arith.constant 0 : i32
    %c0_i32_0 = arith.constant 0 : i32
    return %arg0, %c0_i32 : i32, i32
  }
  func.func @transform_1(%arg0: i32) -> (i32, i32) {
    %c0_i32 = arith.constant 0 : i32
    %c0_i32_0 = arith.constant 0 : i32
    %c0_i32_1 = arith.constant 0 : i32
    return %c0_i32, %c0_i32_0 : i32, i32
  }
  func.func @transform_2(%arg0: i32) -> (i32, i32) {
    %c0_i32 = arith.constant 0 : i32
    %c0_i32_0 = arith.constant 0 : i32
    %c0_i32_1 = arith.constant 0 : i32
    return %c0_i32, %c0_i32_0 : i32, i32
  }
}

module attributes {stable_mosaic.version = 11 : i64} {
  func.func @_bn_apply_kernel(%arg0: i32, %arg1: memref<32x32xf32, #tpu.memory_space<vmem>>, %arg2: memref<1x32xf32, #tpu.memory_space<vmem>>, %arg3: memref<1x32xf32, #tpu.memory_space<vmem>>, %arg4: memref<32x32xf32, #tpu.memory_space<vmem>>) attributes {dimension_semantics = [#tpu.dimension_semantics<parallel>], iteration_bounds = array<i64: 1>, scalar_prefetch = 0 : i64, scratch_operands = 0 : i64, tpu.core_type = #tpu.core_type<tc>, window_params = [{transform_indices = @transform_0, window_bounds = array<i64: 32, 32>}, {pipeline_mode = #tpu.pipeline_mode<synchronous>, transform_indices = @transform_1, window_bounds = array<i64: 1, 32>}, {pipeline_mode = #tpu.pipeline_mode<synchronous>, transform_indices = @transform_2, window_bounds = array<i64: 1, 32>}, {transform_indices = @transform_3, window_bounds = array<i64: 32, 32>}]} {
    %c0 = arith.constant 0 : index
    %c0_0 = arith.constant 0 : index
    %0 = vector.load %arg1[%c0, %c0_0] : memref<32x32xf32, #tpu.memory_space<vmem>>, vector<32x32xf32>
    %c0_1 = arith.constant 0 : index
    %c0_2 = arith.constant 0 : index
    %1 = vector.load %arg2[%c0_1, %c0_2] : memref<1x32xf32, #tpu.memory_space<vmem>>, vector<1x32xf32>
    %2 = vector.broadcast %1 : vector<1x32xf32> to vector<32x32xf32>
    %3 = arith.mulf %0, %2 : vector<32x32xf32>
    %c0_3 = arith.constant 0 : index
    %c0_4 = arith.constant 0 : index
    %4 = vector.load %arg3[%c0_3, %c0_4] : memref<1x32xf32, #tpu.memory_space<vmem>>, vector<1x32xf32>
    %5 = vector.broadcast %4 : vector<1x32xf32> to vector<32x32xf32>
    %6 = arith.addf %3, %5 : vector<32x32xf32>
    %c0_5 = arith.constant 0 : index
    %c0_6 = arith.constant 0 : index
    %7 = vector.load %arg4[%c0_5, %c0_6] : memref<32x32xf32, #tpu.memory_space<vmem>>, vector<32x32xf32>
    tpu.vector_store %arg4[%c0_5, %c0_6], %6 {strides = array<i32>} : memref<32x32xf32, #tpu.memory_space<vmem>>, vector<32x32xf32>,
    return
  }
  func.func @transform_0(%arg0: i32) -> (i32, i32) {
    %c0_i32 = arith.constant 0 : i32
    %c0_i32_0 = arith.constant 0 : i32
    return %arg0, %c0_i32 : i32, i32
  }
  func.func @transform_1(%arg0: i32) -> (i32, i32) {
    %c0_i32 = arith.constant 0 : i32
    %c0_i32_0 = arith.constant 0 : i32
    %c0_i32_1 = arith.constant 0 : i32
    return %c0_i32, %c0_i32_0 : i32, i32
  }
  func.func @transform_2(%arg0: i32) -> (i32, i32) {
    %c0_i32 = arith.constant 0 : i32
    %c0_i32_0 = arith.constant 0 : i32
    %c0_i32_1 = arith.constant 0 : i32
    return %c0_i32, %c0_i32_0 : i32, i32
  }
  func.func @transform_3(%arg0: i32) -> (i32, i32) {
    %c0_i32 = arith.constant 0 : i32
    %c0_i32_0 = arith.constant 0 : i32
    return %arg0, %c0_i32 : i32, i32
  }
}

module attributes {stable_mosaic.version = 11 : i64} {
  func.func @_bn_stats_kernel(%arg0: i32, %arg1: memref<32x16xf32, #tpu.memory_space<vmem>>, %arg2: memref<1x16xf32, #tpu.memory_space<vmem>>, %arg3: memref<1x16xf32, #tpu.memory_space<vmem>>) attributes {dimension_semantics = [#tpu.dimension_semantics<arbitrary>], iteration_bounds = array<i64: 1>, scalar_prefetch = 0 : i64, scratch_operands = 0 : i64, tpu.core_type = #tpu.core_type<tc>, window_params = [{transform_indices = @transform_0, window_bounds = array<i64: 32, 16>}, {pipeline_mode = #tpu.pipeline_mode<synchronous>, transform_indices = @transform_1, window_bounds = array<i64: 1, 16>}, {pipeline_mode = #tpu.pipeline_mode<synchronous>, transform_indices = @transform_2, window_bounds = array<i64: 1, 16>}]} {
    %c0_i32 = arith.constant 0 : i32
    %0 = arith.cmpi eq, %arg0, %c0_i32 : i32
    %1 = arith.extui %0 : i1 to i32
    %c0_i32_0 = arith.constant 0 : i32
    %2 = arith.cmpi ne, %1, %c0_i32_0 : i32
    scf.if %2 {
      %cst_11 = arith.constant 0.000000e+00 : f32
      %15 = vector.broadcast %cst_11 : f32 to vector<1x16xf32>
      %c0_12 = arith.constant 0 : index
      %c0_13 = arith.constant 0 : index
      %16 = vector.load %arg2[%c0_12, %c0_13] : memref<1x16xf32, #tpu.memory_space<vmem>>, vector<1x16xf32>
      tpu.vector_store %arg2[%c0_12, %c0_13], %15 {strides = array<i32>} : memref<1x16xf32, #tpu.memory_space<vmem>>, vector<1x16xf32>,
      %cst_14 = arith.constant 0.000000e+00 : f32
      %17 = vector.broadcast %cst_14 : f32 to vector<1x16xf32>
      %c0_15 = arith.constant 0 : index
      %c0_16 = arith.constant 0 : index
      %18 = vector.load %arg3[%c0_15, %c0_16] : memref<1x16xf32, #tpu.memory_space<vmem>>, vector<1x16xf32>
      tpu.vector_store %arg3[%c0_15, %c0_16], %17 {strides = array<i32>} : memref<1x16xf32, #tpu.memory_space<vmem>>, vector<1x16xf32>,
    } else {
    }
    %c0 = arith.constant 0 : index
    %c0_1 = arith.constant 0 : index
    %3 = vector.load %arg1[%c0, %c0_1] : memref<32x16xf32, #tpu.memory_space<vmem>>, vector<32x16xf32>
    %c0_2 = arith.constant 0 : index
    %c0_3 = arith.constant 0 : index
    %4 = vector.load %arg2[%c0_2, %c0_3] : memref<1x16xf32, #tpu.memory_space<vmem>>, vector<1x16xf32>
    %cst = arith.constant dense<0.000000e+00> : vector<16xf32>
    %5 = vector.multi_reduction <add>, %3, %cst [0] : vector<32x16xf32> to vector<16xf32>
    %6 = vector.shape_cast %5 : vector<16xf32> to vector<1x16xf32>
    %7 = arith.addf %4, %6 : vector<1x16xf32>
    %c0_4 = arith.constant 0 : index
    %c0_5 = arith.constant 0 : index
    %8 = vector.load %arg2[%c0_4, %c0_5] : memref<1x16xf32, #tpu.memory_space<vmem>>, vector<1x16xf32>
    tpu.vector_store %arg2[%c0_4, %c0_5], %7 {strides = array<i32>} : memref<1x16xf32, #tpu.memory_space<vmem>>, vector<1x16xf32>,
    %c0_6 = arith.constant 0 : index
    %c0_7 = arith.constant 0 : index
    %9 = vector.load %arg3[%c0_6, %c0_7] : memref<1x16xf32, #tpu.memory_space<vmem>>, vector<1x16xf32>
    %10 = arith.mulf %3, %3 : vector<32x16xf32>
    %cst_8 = arith.constant dense<0.000000e+00> : vector<16xf32>
    %11 = vector.multi_reduction <add>, %10, %cst_8 [0] : vector<32x16xf32> to vector<16xf32>
    %12 = vector.shape_cast %11 : vector<16xf32> to vector<1x16xf32>
    %13 = arith.addf %9, %12 : vector<1x16xf32>
    %c0_9 = arith.constant 0 : index
    %c0_10 = arith.constant 0 : index
    %14 = vector.load %arg3[%c0_9, %c0_10] : memref<1x16xf32, #tpu.memory_space<vmem>>, vector<1x16xf32>
    tpu.vector_store %arg3[%c0_9, %c0_10], %13 {strides = array<i32>} : memref<1x16xf32, #tpu.memory_space<vmem>>, vector<1x16xf32>,
    return
  }
  func.func @transform_0(%arg0: i32) -> (i32, i32) {
    %c0_i32 = arith.constant 0 : i32
    %c0_i32_0 = arith.constant 0 : i32
    return %arg0, %c0_i32 : i32, i32
  }
  func.func @transform_1(%arg0: i32) -> (i32, i32) {
    %c0_i32 = arith.constant 0 : i32
    %c0_i32_0 = arith.constant 0 : i32
    %c0_i32_1 = arith.constant 0 : i32
    return %c0_i32, %c0_i32_0 : i32, i32
  }
  func.func @transform_2(%arg0: i32) -> (i32, i32) {
    %c0_i32 = arith.constant 0 : i32
    %c0_i32_0 = arith.constant 0 : i32
    %c0_i32_1 = arith.constant 0 : i32
    return %c0_i32, %c0_i32_0 : i32, i32
  }
}

module attributes {stable_mosaic.version = 11 : i64} {
  func.func @_bn_apply_kernel(%arg0: i32, %arg1: memref<32x16xf32, #tpu.memory_space<vmem>>, %arg2: memref<1x16xf32, #tpu.memory_space<vmem>>, %arg3: memref<1x16xf32, #tpu.memory_space<vmem>>, %arg4: memref<32x16xf32, #tpu.memory_space<vmem>>) attributes {dimension_semantics = [#tpu.dimension_semantics<parallel>], iteration_bounds = array<i64: 1>, scalar_prefetch = 0 : i64, scratch_operands = 0 : i64, tpu.core_type = #tpu.core_type<tc>, window_params = [{transform_indices = @transform_0, window_bounds = array<i64: 32, 16>}, {pipeline_mode = #tpu.pipeline_mode<synchronous>, transform_indices = @transform_1, window_bounds = array<i64: 1, 16>}, {pipeline_mode = #tpu.pipeline_mode<synchronous>, transform_indices = @transform_2, window_bounds = array<i64: 1, 16>}, {transform_indices = @transform_3, window_bounds = array<i64: 32, 16>}]} {
    %c0 = arith.constant 0 : index
    %c0_0 = arith.constant 0 : index
    %0 = vector.load %arg1[%c0, %c0_0] : memref<32x16xf32, #tpu.memory_space<vmem>>, vector<32x16xf32>
    %c0_1 = arith.constant 0 : index
    %c0_2 = arith.constant 0 : index
    %1 = vector.load %arg2[%c0_1, %c0_2] : memref<1x16xf32, #tpu.memory_space<vmem>>, vector<1x16xf32>
    %2 = vector.broadcast %1 : vector<1x16xf32> to vector<32x16xf32>
    %3 = arith.mulf %0, %2 : vector<32x16xf32>
    %c0_3 = arith.constant 0 : index
    %c0_4 = arith.constant 0 : index
    %4 = vector.load %arg3[%c0_3, %c0_4] : memref<1x16xf32, #tpu.memory_space<vmem>>, vector<1x16xf32>
    %5 = vector.broadcast %4 : vector<1x16xf32> to vector<32x16xf32>
    %6 = arith.addf %3, %5 : vector<32x16xf32>
    %cst = arith.constant 0.000000e+00 : f32
    %7 = vector.broadcast %cst : f32 to vector<32x16xf32>
    %8 = arith.maximumf %6, %7 : vector<32x16xf32>
    %c0_5 = arith.constant 0 : index
    %c0_6 = arith.constant 0 : index
    %9 = vector.load %arg4[%c0_5, %c0_6] : memref<32x16xf32, #tpu.memory_space<vmem>>, vector<32x16xf32>
    tpu.vector_store %arg4[%c0_5, %c0_6], %8 {strides = array<i32>} : memref<32x16xf32, #tpu.memory_space<vmem>>, vector<32x16xf32>,
    return
  }
  func.func @transform_0(%arg0: i32) -> (i32, i32) {
    %c0_i32 = arith.constant 0 : i32
    %c0_i32_0 = arith.constant 0 : i32
    return %arg0, %c0_i32 : i32, i32
  }
  func.func @transform_1(%arg0: i32) -> (i32, i32) {
    %c0_i32 = arith.constant 0 : i32
    %c0_i32_0 = arith.constant 0 : i32
    %c0_i32_1 = arith.constant 0 : i32
    return %c0_i32, %c0_i32_0 : i32, i32
  }
  func.func @transform_2(%arg0: i32) -> (i32, i32) {
    %c0_i32 = arith.constant 0 : i32
    %c0_i32_0 = arith.constant 0 : i32
    %c0_i32_1 = arith.constant 0 : i32
    return %c0_i32, %c0_i32_0 : i32, i32
  }
  func.func @transform_3(%arg0: i32) -> (i32, i32) {
    %c0_i32 = arith.constant 0 : i32
    %c0_i32_0 = arith.constant 0 : i32
    return %arg0, %c0_i32 : i32, i32
  }
}

module attributes {stable_mosaic.version = 11 : i64} {
  func.func @_bn_stats_kernel(%arg0: i32, %arg1: memref<8x64xf32, #tpu.memory_space<vmem>>, %arg2: memref<1x64xf32, #tpu.memory_space<vmem>>, %arg3: memref<1x64xf32, #tpu.memory_space<vmem>>) attributes {dimension_semantics = [#tpu.dimension_semantics<arbitrary>], iteration_bounds = array<i64: 1>, scalar_prefetch = 0 : i64, scratch_operands = 0 : i64, tpu.core_type = #tpu.core_type<tc>, window_params = [{transform_indices = @transform_0, window_bounds = array<i64: 8, 64>}, {pipeline_mode = #tpu.pipeline_mode<synchronous>, transform_indices = @transform_1, window_bounds = array<i64: 1, 64>}, {pipeline_mode = #tpu.pipeline_mode<synchronous>, transform_indices = @transform_2, window_bounds = array<i64: 1, 64>}]} {
    %c0_i32 = arith.constant 0 : i32
    %0 = arith.cmpi eq, %arg0, %c0_i32 : i32
    %1 = arith.extui %0 : i1 to i32
    %c0_i32_0 = arith.constant 0 : i32
    %2 = arith.cmpi ne, %1, %c0_i32_0 : i32
    scf.if %2 {
      %cst_11 = arith.constant 0.000000e+00 : f32
      %15 = vector.broadcast %cst_11 : f32 to vector<1x64xf32>
      %c0_12 = arith.constant 0 : index
      %c0_13 = arith.constant 0 : index
      %16 = vector.load %arg2[%c0_12, %c0_13] : memref<1x64xf32, #tpu.memory_space<vmem>>, vector<1x64xf32>
      tpu.vector_store %arg2[%c0_12, %c0_13], %15 {strides = array<i32>} : memref<1x64xf32, #tpu.memory_space<vmem>>, vector<1x64xf32>,
      %cst_14 = arith.constant 0.000000e+00 : f32
      %17 = vector.broadcast %cst_14 : f32 to vector<1x64xf32>
      %c0_15 = arith.constant 0 : index
      %c0_16 = arith.constant 0 : index
      %18 = vector.load %arg3[%c0_15, %c0_16] : memref<1x64xf32, #tpu.memory_space<vmem>>, vector<1x64xf32>
      tpu.vector_store %arg3[%c0_15, %c0_16], %17 {strides = array<i32>} : memref<1x64xf32, #tpu.memory_space<vmem>>, vector<1x64xf32>,
    } else {
    }
    %c0 = arith.constant 0 : index
    %c0_1 = arith.constant 0 : index
    %3 = vector.load %arg1[%c0, %c0_1] : memref<8x64xf32, #tpu.memory_space<vmem>>, vector<8x64xf32>
    %c0_2 = arith.constant 0 : index
    %c0_3 = arith.constant 0 : index
    %4 = vector.load %arg2[%c0_2, %c0_3] : memref<1x64xf32, #tpu.memory_space<vmem>>, vector<1x64xf32>
    %cst = arith.constant dense<0.000000e+00> : vector<64xf32>
    %5 = vector.multi_reduction <add>, %3, %cst [0] : vector<8x64xf32> to vector<64xf32>
    %6 = vector.shape_cast %5 : vector<64xf32> to vector<1x64xf32>
    %7 = arith.addf %4, %6 : vector<1x64xf32>
    %c0_4 = arith.constant 0 : index
    %c0_5 = arith.constant 0 : index
    %8 = vector.load %arg2[%c0_4, %c0_5] : memref<1x64xf32, #tpu.memory_space<vmem>>, vector<1x64xf32>
    tpu.vector_store %arg2[%c0_4, %c0_5], %7 {strides = array<i32>} : memref<1x64xf32, #tpu.memory_space<vmem>>, vector<1x64xf32>,
    %c0_6 = arith.constant 0 : index
    %c0_7 = arith.constant 0 : index
    %9 = vector.load %arg3[%c0_6, %c0_7] : memref<1x64xf32, #tpu.memory_space<vmem>>, vector<1x64xf32>
    %10 = arith.mulf %3, %3 : vector<8x64xf32>
    %cst_8 = arith.constant dense<0.000000e+00> : vector<64xf32>
    %11 = vector.multi_reduction <add>, %10, %cst_8 [0] : vector<8x64xf32> to vector<64xf32>
    %12 = vector.shape_cast %11 : vector<64xf32> to vector<1x64xf32>
    %13 = arith.addf %9, %12 : vector<1x64xf32>
    %c0_9 = arith.constant 0 : index
    %c0_10 = arith.constant 0 : index
    %14 = vector.load %arg3[%c0_9, %c0_10] : memref<1x64xf32, #tpu.memory_space<vmem>>, vector<1x64xf32>
    tpu.vector_store %arg3[%c0_9, %c0_10], %13 {strides = array<i32>} : memref<1x64xf32, #tpu.memory_space<vmem>>, vector<1x64xf32>,
    return
  }
  func.func @transform_0(%arg0: i32) -> (i32, i32) {
    %c0_i32 = arith.constant 0 : i32
    %c0_i32_0 = arith.constant 0 : i32
    return %arg0, %c0_i32 : i32, i32
  }
  func.func @transform_1(%arg0: i32) -> (i32, i32) {
    %c0_i32 = arith.constant 0 : i32
    %c0_i32_0 = arith.constant 0 : i32
    %c0_i32_1 = arith.constant 0 : i32
    return %c0_i32, %c0_i32_0 : i32, i32
  }
  func.func @transform_2(%arg0: i32) -> (i32, i32) {
    %c0_i32 = arith.constant 0 : i32
    %c0_i32_0 = arith.constant 0 : i32
    %c0_i32_1 = arith.constant 0 : i32
    return %c0_i32, %c0_i32_0 : i32, i32
  }
}

module attributes {stable_mosaic.version = 11 : i64} {
  func.func @_bn_apply_kernel(%arg0: i32, %arg1: memref<8x16xf32, #tpu.memory_space<vmem>>, %arg2: memref<1x16xf32, #tpu.memory_space<vmem>>, %arg3: memref<1x16xf32, #tpu.memory_space<vmem>>, %arg4: memref<8x16xf32, #tpu.memory_space<vmem>>) attributes {dimension_semantics = [#tpu.dimension_semantics<parallel>], iteration_bounds = array<i64: 1>, scalar_prefetch = 0 : i64, scratch_operands = 0 : i64, tpu.core_type = #tpu.core_type<tc>, window_params = [{transform_indices = @transform_0, window_bounds = array<i64: 8, 16>}, {pipeline_mode = #tpu.pipeline_mode<synchronous>, transform_indices = @transform_1, window_bounds = array<i64: 1, 16>}, {pipeline_mode = #tpu.pipeline_mode<synchronous>, transform_indices = @transform_2, window_bounds = array<i64: 1, 16>}, {transform_indices = @transform_3, window_bounds = array<i64: 8, 16>}]} {
    %c0 = arith.constant 0 : index
    %c0_0 = arith.constant 0 : index
    %0 = vector.load %arg1[%c0, %c0_0] : memref<8x16xf32, #tpu.memory_space<vmem>>, vector<8x16xf32>
    %c0_1 = arith.constant 0 : index
    %c0_2 = arith.constant 0 : index
    %1 = vector.load %arg2[%c0_1, %c0_2] : memref<1x16xf32, #tpu.memory_space<vmem>>, vector<1x16xf32>
    %2 = vector.broadcast %1 : vector<1x16xf32> to vector<8x16xf32>
    %3 = arith.mulf %0, %2 : vector<8x16xf32>
    %c0_3 = arith.constant 0 : index
    %c0_4 = arith.constant 0 : index
    %4 = vector.load %arg3[%c0_3, %c0_4] : memref<1x16xf32, #tpu.memory_space<vmem>>, vector<1x16xf32>
    %5 = vector.broadcast %4 : vector<1x16xf32> to vector<8x16xf32>
    %6 = arith.addf %3, %5 : vector<8x16xf32>
    %cst = arith.constant 0.000000e+00 : f32
    %7 = vector.broadcast %cst : f32 to vector<8x16xf32>
    %8 = arith.maximumf %6, %7 : vector<8x16xf32>
    %c0_5 = arith.constant 0 : index
    %c0_6 = arith.constant 0 : index
    %9 = vector.load %arg4[%c0_5, %c0_6] : memref<8x16xf32, #tpu.memory_space<vmem>>, vector<8x16xf32>
    tpu.vector_store %arg4[%c0_5, %c0_6], %8 {strides = array<i32>} : memref<8x16xf32, #tpu.memory_space<vmem>>, vector<8x16xf32>,
    return
  }
  func.func @transform_0(%arg0: i32) -> (i32, i32) {
    %c0_i32 = arith.constant 0 : i32
    %c0_i32_0 = arith.constant 0 : i32
    return %arg0, %c0_i32 : i32, i32
  }
  func.func @transform_1(%arg0: i32) -> (i32, i32) {
    %c0_i32 = arith.constant 0 : i32
    %c0_i32_0 = arith.constant 0 : i32
    %c0_i32_1 = arith.constant 0 : i32
    return %c0_i32, %c0_i32_0 : i32, i32
  }
  func.func @transform_2(%arg0: i32) -> (i32, i32) {
    %c0_i32 = arith.constant 0 : i32
    %c0_i32_0 = arith.constant 0 : i32
    %c0_i32_1 = arith.constant 0 : i32
    return %c0_i32, %c0_i32_0 : i32, i32
  }
  func.func @transform_3(%arg0: i32) -> (i32, i32) {
    %c0_i32 = arith.constant 0 : i32
    %c0_i32_0 = arith.constant 0 : i32
    return %arg0, %c0_i32 : i32, i32
  }
}

module attributes {stable_mosaic.version = 11 : i64} {
  func.func @_bn_stats_kernel(%arg0: i32, %arg1: memref<8x16xf32, #tpu.memory_space<vmem>>, %arg2: memref<1x16xf32, #tpu.memory_space<vmem>>, %arg3: memref<1x16xf32, #tpu.memory_space<vmem>>) attributes {dimension_semantics = [#tpu.dimension_semantics<arbitrary>], iteration_bounds = array<i64: 1>, scalar_prefetch = 0 : i64, scratch_operands = 0 : i64, tpu.core_type = #tpu.core_type<tc>, window_params = [{transform_indices = @transform_0, window_bounds = array<i64: 8, 16>}, {pipeline_mode = #tpu.pipeline_mode<synchronous>, transform_indices = @transform_1, window_bounds = array<i64: 1, 16>}, {pipeline_mode = #tpu.pipeline_mode<synchronous>, transform_indices = @transform_2, window_bounds = array<i64: 1, 16>}]} {
    %c0_i32 = arith.constant 0 : i32
    %0 = arith.cmpi eq, %arg0, %c0_i32 : i32
    %1 = arith.extui %0 : i1 to i32
    %c0_i32_0 = arith.constant 0 : i32
    %2 = arith.cmpi ne, %1, %c0_i32_0 : i32
    scf.if %2 {
      %cst_11 = arith.constant 0.000000e+00 : f32
      %15 = vector.broadcast %cst_11 : f32 to vector<1x16xf32>
      %c0_12 = arith.constant 0 : index
      %c0_13 = arith.constant 0 : index
      %16 = vector.load %arg2[%c0_12, %c0_13] : memref<1x16xf32, #tpu.memory_space<vmem>>, vector<1x16xf32>
      tpu.vector_store %arg2[%c0_12, %c0_13], %15 {strides = array<i32>} : memref<1x16xf32, #tpu.memory_space<vmem>>, vector<1x16xf32>,
      %cst_14 = arith.constant 0.000000e+00 : f32
      %17 = vector.broadcast %cst_14 : f32 to vector<1x16xf32>
      %c0_15 = arith.constant 0 : index
      %c0_16 = arith.constant 0 : index
      %18 = vector.load %arg3[%c0_15, %c0_16] : memref<1x16xf32, #tpu.memory_space<vmem>>, vector<1x16xf32>
      tpu.vector_store %arg3[%c0_15, %c0_16], %17 {strides = array<i32>} : memref<1x16xf32, #tpu.memory_space<vmem>>, vector<1x16xf32>,
    } else {
    }
    %c0 = arith.constant 0 : index
    %c0_1 = arith.constant 0 : index
    %3 = vector.load %arg1[%c0, %c0_1] : memref<8x16xf32, #tpu.memory_space<vmem>>, vector<8x16xf32>
    %c0_2 = arith.constant 0 : index
    %c0_3 = arith.constant 0 : index
    %4 = vector.load %arg2[%c0_2, %c0_3] : memref<1x16xf32, #tpu.memory_space<vmem>>, vector<1x16xf32>
    %cst = arith.constant dense<0.000000e+00> : vector<16xf32>
    %5 = vector.multi_reduction <add>, %3, %cst [0] : vector<8x16xf32> to vector<16xf32>
    %6 = vector.shape_cast %5 : vector<16xf32> to vector<1x16xf32>
    %7 = arith.addf %4, %6 : vector<1x16xf32>
    %c0_4 = arith.constant 0 : index
    %c0_5 = arith.constant 0 : index
    %8 = vector.load %arg2[%c0_4, %c0_5] : memref<1x16xf32, #tpu.memory_space<vmem>>, vector<1x16xf32>
    tpu.vector_store %arg2[%c0_4, %c0_5], %7 {strides = array<i32>} : memref<1x16xf32, #tpu.memory_space<vmem>>, vector<1x16xf32>,
    %c0_6 = arith.constant 0 : index
    %c0_7 = arith.constant 0 : index
    %9 = vector.load %arg3[%c0_6, %c0_7] : memref<1x16xf32, #tpu.memory_space<vmem>>, vector<1x16xf32>
    %10 = arith.mulf %3, %3 : vector<8x16xf32>
    %cst_8 = arith.constant dense<0.000000e+00> : vector<16xf32>
    %11 = vector.multi_reduction <add>, %10, %cst_8 [0] : vector<8x16xf32> to vector<16xf32>
    %12 = vector.shape_cast %11 : vector<16xf32> to vector<1x16xf32>
    %13 = arith.addf %9, %12 : vector<1x16xf32>
    %c0_9 = arith.constant 0 : index
    %c0_10 = arith.constant 0 : index
    %14 = vector.load %arg3[%c0_9, %c0_10] : memref<1x16xf32, #tpu.memory_space<vmem>>, vector<1x16xf32>
    tpu.vector_store %arg3[%c0_9, %c0_10], %13 {strides = array<i32>} : memref<1x16xf32, #tpu.memory_space<vmem>>, vector<1x16xf32>,
    return
  }
  func.func @transform_0(%arg0: i32) -> (i32, i32) {
    %c0_i32 = arith.constant 0 : i32
    %c0_i32_0 = arith.constant 0 : i32
    return %arg0, %c0_i32 : i32, i32
  }
  func.func @transform_1(%arg0: i32) -> (i32, i32) {
    %c0_i32 = arith.constant 0 : i32
    %c0_i32_0 = arith.constant 0 : i32
    %c0_i32_1 = arith.constant 0 : i32
    return %c0_i32, %c0_i32_0 : i32, i32
  }
  func.func @transform_2(%arg0: i32) -> (i32, i32) {
    %c0_i32 = arith.constant 0 : i32
    %c0_i32_0 = arith.constant 0 : i32
    %c0_i32_1 = arith.constant 0 : i32
    return %c0_i32, %c0_i32_0 : i32, i32
  }
}

module attributes {stable_mosaic.version = 11 : i64} {
  func.func @_bn_apply_kernel(%arg0: i32, %arg1: memref<8x64xf32, #tpu.memory_space<vmem>>, %arg2: memref<1x64xf32, #tpu.memory_space<vmem>>, %arg3: memref<1x64xf32, #tpu.memory_space<vmem>>, %arg4: memref<8x64xf32, #tpu.memory_space<vmem>>) attributes {dimension_semantics = [#tpu.dimension_semantics<parallel>], iteration_bounds = array<i64: 1>, scalar_prefetch = 0 : i64, scratch_operands = 0 : i64, tpu.core_type = #tpu.core_type<tc>, window_params = [{transform_indices = @transform_0, window_bounds = array<i64: 8, 64>}, {pipeline_mode = #tpu.pipeline_mode<synchronous>, transform_indices = @transform_1, window_bounds = array<i64: 1, 64>}, {pipeline_mode = #tpu.pipeline_mode<synchronous>, transform_indices = @transform_2, window_bounds = array<i64: 1, 64>}, {transform_indices = @transform_3, window_bounds = array<i64: 8, 64>}]} {
    %c0 = arith.constant 0 : index
    %c0_0 = arith.constant 0 : index
    %0 = vector.load %arg1[%c0, %c0_0] : memref<8x64xf32, #tpu.memory_space<vmem>>, vector<8x64xf32>
    %c0_1 = arith.constant 0 : index
    %c0_2 = arith.constant 0 : index
    %1 = vector.load %arg2[%c0_1, %c0_2] : memref<1x64xf32, #tpu.memory_space<vmem>>, vector<1x64xf32>
    %2 = vector.broadcast %1 : vector<1x64xf32> to vector<8x64xf32>
    %3 = arith.mulf %0, %2 : vector<8x64xf32>
    %c0_3 = arith.constant 0 : index
    %c0_4 = arith.constant 0 : index
    %4 = vector.load %arg3[%c0_3, %c0_4] : memref<1x64xf32, #tpu.memory_space<vmem>>, vector<1x64xf32>
    %5 = vector.broadcast %4 : vector<1x64xf32> to vector<8x64xf32>
    %6 = arith.addf %3, %5 : vector<8x64xf32>
    %cst = arith.constant 0.000000e+00 : f32
    %7 = vector.broadcast %cst : f32 to vector<8x64xf32>
    %8 = arith.maximumf %6, %7 : vector<8x64xf32>
    %c0_5 = arith.constant 0 : index
    %c0_6 = arith.constant 0 : index
    %9 = vector.load %arg4[%c0_5, %c0_6] : memref<8x64xf32, #tpu.memory_space<vmem>>, vector<8x64xf32>
    tpu.vector_store %arg4[%c0_5, %c0_6], %8 {strides = array<i32>} : memref<8x64xf32, #tpu.memory_space<vmem>>, vector<8x64xf32>,
    return
  }
  func.func @transform_0(%arg0: i32) -> (i32, i32) {
    %c0_i32 = arith.constant 0 : i32
    %c0_i32_0 = arith.constant 0 : i32
    return %arg0, %c0_i32 : i32, i32
  }
  func.func @transform_1(%arg0: i32) -> (i32, i32) {
    %c0_i32 = arith.constant 0 : i32
    %c0_i32_0 = arith.constant 0 : i32
    %c0_i32_1 = arith.constant 0 : i32
    return %c0_i32, %c0_i32_0 : i32, i32
  }
  func.func @transform_2(%arg0: i32) -> (i32, i32) {
    %c0_i32 = arith.constant 0 : i32
    %c0_i32_0 = arith.constant 0 : i32
    %c0_i32_1 = arith.constant 0 : i32
    return %c0_i32, %c0_i32_0 : i32, i32
  }
  func.func @transform_3(%arg0: i32) -> (i32, i32) {
    %c0_i32 = arith.constant 0 : i32
    %c0_i32_0 = arith.constant 0 : i32
    return %arg0, %c0_i32 : i32, i32
  }
}

module attributes {stable_mosaic.version = 11 : i64} {
  func.func @_classifier_kernel(%arg0: i32, %arg1: memref<2x4x64xf32, #tpu.memory_space<vmem>>, %arg2: memref<64x10xf32, #tpu.memory_space<vmem>>, %arg3: memref<1x10xf32, #tpu.memory_space<vmem>>, %arg4: memref<2x10xf32, #tpu.memory_space<vmem>>) attributes {dimension_semantics = [#tpu.dimension_semantics<parallel>], iteration_bounds = array<i64: 1>, scalar_prefetch = 0 : i64, scratch_operands = 0 : i64, tpu.core_type = #tpu.core_type<tc>, window_params = [{transform_indices = @transform_0, window_bounds = array<i64: 2, 4, 64>}, {pipeline_mode = #tpu.pipeline_mode<synchronous>, transform_indices = @transform_1, window_bounds = array<i64: 64, 10>}, {pipeline_mode = #tpu.pipeline_mode<synchronous>, transform_indices = @transform_2, window_bounds = array<i64: 1, 10>}, {transform_indices = @transform_3, window_bounds = array<i64: 2, 10>}]} {
    %c0 = arith.constant 0 : index
    %c0_0 = arith.constant 0 : index
    %c0_1 = arith.constant 0 : index
    %0 = vector.load %arg1[%c0, %c0_0, %c0_1] : memref<2x4x64xf32, #tpu.memory_space<vmem>>, vector<2x4x64xf32>
    %cst = arith.constant dense<0.000000e+00> : vector<2x64xf32>
    %1 = vector.multi_reduction <add>, %0, %cst [1] : vector<2x4x64xf32> to vector<2x64xf32>
    %cst_2 = arith.constant 4.000000e+00 : f32
    %2 = vector.broadcast %cst_2 : f32 to vector<2x64xf32>
    %3 = arith.divf %1, %2 : vector<2x64xf32>
    %c0_3 = arith.constant 0 : index
    %c0_4 = arith.constant 0 : index
    %4 = vector.load %arg2[%c0_3, %c0_4] : memref<64x10xf32, #tpu.memory_space<vmem>>, vector<64x10xf32>
    %cst_5 = arith.constant dense<0.000000e+00> : vector<2x10xf32>
    %5 = tpu.matmul %3, %4, %cst_5 {dimension_numbers = #tpu.dot_dimension_numbers<[1], [0], [0], [1], [0, 0, 1, 1], [], []>} : vector<2x64xf32>, vector<64x10xf32>, vector<2x10xf32> -> vector<2x10xf32>
    %c0_6 = arith.constant 0 : index
    %c0_7 = arith.constant 0 : index
    %6 = vector.load %arg3[%c0_6, %c0_7] : memref<1x10xf32, #tpu.memory_space<vmem>>, vector<1x10xf32>
    %7 = vector.broadcast %6 : vector<1x10xf32> to vector<2x10xf32>
    %8 = arith.addf %5, %7 : vector<2x10xf32>
    %cst_8 = arith.constant dense<0xFF800000> : vector<2xf32>
    %9 = vector.multi_reduction <maximumf>, %8, %cst_8 [1] : vector<2x10xf32> to vector<2xf32>
    %10 = vector.shape_cast %9 : vector<2xf32> to vector<2x1xf32>
    %11 = vector.broadcast %10 : vector<2x1xf32> to vector<2x10xf32>
    %12 = arith.subf %8, %11 : vector<2x10xf32>
    %13 = math.exp %12 : vector<2x10xf32>
    %cst_9 = arith.constant dense<0.000000e+00> : vector<2xf32>
    %14 = vector.multi_reduction <add>, %13, %cst_9 [1] : vector<2x10xf32> to vector<2xf32>
    %15 = vector.shape_cast %14 : vector<2xf32> to vector<2x1xf32>
    %16 = vector.broadcast %15 : vector<2x1xf32> to vector<2x10xf32>
    %17 = arith.divf %13, %16 : vector<2x10xf32>
    %c0_10 = arith.constant 0 : index
    %c0_11 = arith.constant 0 : index
    %18 = vector.load %arg4[%c0_10, %c0_11] : memref<2x10xf32, #tpu.memory_space<vmem>>, vector<2x10xf32>
    tpu.vector_store %arg4[%c0_10, %c0_11], %17 {strides = array<i32>} : memref<2x10xf32, #tpu.memory_space<vmem>>, vector<2x10xf32>,
    return
  }
  func.func @transform_0(%arg0: i32) -> (i32, i32, i32) {
    %c0_i32 = arith.constant 0 : i32
    %c0_i32_0 = arith.constant 0 : i32
    %c0_i32_1 = arith.constant 0 : i32
    return %arg0, %c0_i32, %c0_i32_0 : i32, i32, i32
  }
  func.func @transform_1(%arg0: i32) -> (i32, i32) {
    %c0_i32 = arith.constant 0 : i32
    %c0_i32_0 = arith.constant 0 : i32
    %c0_i32_1 = arith.constant 0 : i32
    return %c0_i32, %c0_i32_0 : i32, i32
  }
  func.func @transform_2(%arg0: i32) -> (i32, i32) {
    %c0_i32 = arith.constant 0 : i32
    %c0_i32_0 = arith.constant 0 : i32
    %c0_i32_1 = arith.constant 0 : i32
    return %c0_i32, %c0_i32_0 : i32, i32
  }
  func.func @transform_3(%arg0: i32) -> (i32, i32) {
    %c0_i32 = arith.constant 0 : i32
    %c0_i32_0 = arith.constant 0 : i32
    return %arg0, %c0_i32 : i32, i32
  }
}

</mosaic_0001>

<llo_original>
// kernel: resnet_forward.48
$region0: #{resnet_forward.48}
  #allocation0 [shape = 'u32[]', space=smem, size = 0x4, offset = 0x4, fixed_abs, tag = 'smem constant byte address 0x4 - core index']
  #allocation1 [shape = 'u32[72,128]{1,0:T(1,128)}', space=vmem, size = 0x9000, scoped, tag = 'internal scratch']
  %s0 = inlined_call_operand.vmem [shape: f32[128,64], index: 0, kind: input, shape index: {}]
  %s1 = inlined_call_operand.vmem [shape: f32[1,64], index: 1, kind: output, shape index: {0}]
  %s2 = inlined_call_operand.vmem [shape: f32[1,64], index: 2, kind: output, shape index: {1}]
  %3 = xla_tuple %s1, %s2
  %s4 = sld [smem:[#allocation0]]
  $region26: #{resnet_forward.48} parent=0
    _
  %s6 = ssub.s32 1, %s4
  %s7 = scalar_select 0, %s6, %s4
  // Predicated region
  $region2: #{resnet_forward.48} parent=0 // pred_check
    _
  $region3: #{resnet_forward.48} parent=0 // pred_check_branch
    %9 = sbr.rel (0) target = $region5
  $region4: #{resnet_forward.48} parent=0 // pred_region
    _
  $region5: #{resnet_forward.48} parent=0 // pred_fallthru
    _
  %p10 = scmp.eq.s32.totalorder 0, 0
  // Predicated region
  $region6: #{resnet_forward.48} parent=0 // pred_check
    %p11 = pneg %p10
  $region7: #{resnet_forward.48} parent=0 // pred_check_branch
    %13 = sbr.rel (%p11) target = $region9
  $region8: #{resnet_forward.48} parent=0 // pred_region
    %vm14 = vcmask 516096
    %15 = vst.msk [vmem:[%s1] sm:$0x1] %vm14, 0.0
    %16 = vst.msk [vmem:[%s2] sm:$0x1] %vm14, 0.0
  $region9: #{resnet_forward.48} parent=0 // pred_fallthru
    _
  %v17 = vld [vmem:[%s0] sm:$0xff]
  %v18 = vld [vmem:[%s0 + $0x8] sm:$0xff]
  %v19 = vld [vmem:[%s0 + $0x10] sm:$0xff]
  %v20 = vld [vmem:[%s0 + $0x18] sm:$0xff]
  %v21 = vld [vmem:[%s0 + $0x20] sm:$0xff]
  %v22 = vld [vmem:[%s0 + $0x28] sm:$0xff]
  %v23 = vld [vmem:[%s0 + $0x30] sm:$0xff]
  %v24 = vld [vmem:[%s0 + $0x38] sm:$0xff]
  %v25 = vld [vmem:[%s0 + $0x40] sm:$0xff]
  %v26 = vld [vmem:[%s0 + $0x48] sm:$0xff]
  %v27 = vld [vmem:[%s0 + $0x50] sm:$0xff]
  %v28 = vld [vmem:[%s0 + $0x58] sm:$0xff]
  %v29 = vld [vmem:[%s0 + $0x60] sm:$0xff]
  %v30 = vld [vmem:[%s0 + $0x68] sm:$0xff]
  %v31 = vld [vmem:[%s0 + $0x70] sm:$0xff]
  %v32 = vld [vmem:[%s0 + $0x78] sm:$0xff]
  %v33 = vld [vmem:[%s1] sm:$0x1]
  %vm34 = vcmask 523264
  %v35 = vsel %vm34, %v17, 0.0
  %v36 = vsel %vm34, %v18, 0.0
  %v37 = vadd.f32 %v35, %v36
  %v38 = vsel %vm34, %v19, 0.0
  %v39 = vadd.f32 %v37, %v38
  %v40 = vsel %vm34, %v20, 0.0
  %v41 = vadd.f32 %v39, %v40
  %v42 = vsel %vm34, %v21, 0.0
  %v43 = vadd.f32 %v41, %v42
  %v44 = vsel %vm34, %v22, 0.0
  %v45 = vadd.f32 %v43, %v44
  %v46 = vsel %vm34, %v23, 0.0
  %v47 = vadd.f32 %v45, %v46
  %v48 = vsel %vm34, %v24, 0.0
  %v49 = vadd.f32 %v47, %v48
  %v50 = vsel %vm34, %v25, 0.0
  %v51 = vadd.f32 %v49, %v50
  %v52 = vsel %vm34, %v26, 0.0
  %v53 = vadd.f32 %v51, %v52
  %v54 = vsel %vm34, %v27, 0.0
  %v55 = vadd.f32 %v53, %v54
  %v56 = vsel %vm34, %v28, 0.0
  %v57 = vadd.f32 %v55, %v56
  %v58 = vsel %vm34, %v29, 0.0
  %v59 = vadd.f32 %v57, %v58
  %v60 = vsel %vm34, %v30, 0.0
  %v61 = vadd.f32 %v59, %v60
  %v62 = vsel %vm34, %v31, 0.0
  %v63 = vadd.f32 %v61, %v62
  %v64 = vsel %vm34, %v32, 0.0
  %v65 = vadd.f32 %v63, %v64
  %v66 = vrot.slane %v65, 4
  %v67 = vadd.f32 %v65, %v66
  %v68 = vrot.slane %v67, 2
  %v69 = vadd.f32 %v67, %v68
  %v70 = vrot.slane %v69, 1
  %v71 = vadd.f32 %v69, %v70
  %v72 = vadd.f32 %v33, %v71
  %vm73 = vcmask 516096
  %74 = vst.msk [vmem:[%s1] sm:$0x1] %vm73, %v72
  %v75 = vld [vmem:[%s2] sm:$0x1]
  %v76 = vmul.f32 %v17, %v17
  %v77 = vmul.f32 %v18, %v18
  %v78 = vmul.f32 %v19, %v19
  %v79 = vmul.f32 %v20, %v20
  %v80 = vmul.f32 %v21, %v21
  %v81 = vmul.f32 %v22, %v22
  %v82 = vmul.f32 %v23, %v23
  %v83 = vmul.f32 %v24, %v24
  %v84 = vmul.f32 %v25, %v25
  %v85 = vmul.f32 %v26, %v26
  %v86 = vmul.f32 %v27, %v27
  %v87 = vmul.f32 %v28, %v28
  %v88 = vmul.f32 %v29, %v29
  %v89 = vmul.f32 %v30, %v30
  %v90 = vmul.f32 %v31, %v31
  %v91 = vmul.f32 %v32, %v32
  %v92 = vsel %vm34, %v76, 0.0
  %v93 = vsel %vm34, %v77, 0.0
  %v94 = vadd.f32 %v92, %v93
  %v95 = vsel %vm34, %v78, 0.0
  %v96 = vadd.f32 %v94, %v95
  %v97 = vsel %vm34, %v79, 0.0
  %v98 = vadd.f32 %v96, %v97
  %v99 = vsel %vm34, %v80, 0.0
  %v100 = vadd.f32 %v98, %v99
  %v101 = vsel %vm34, %v81, 0.0
  %v102 = vadd.f32 %v100, %v101
  %v103 = vsel %vm34, %v82, 0.0
  %v104 = vadd.f32 %v102, %v103
  %v105 = vsel %vm34, %v83, 0.0
  %v106 = vadd.f32 %v104, %v105
  %v107 = vsel %vm34, %v84, 0.0
  %v108 = vadd.f32 %v106, %v107
  %v109 = vsel %vm34, %v85, 0.0
  %v110 = vadd.f32 %v108, %v109
  %v111 = vsel %vm34, %v86, 0.0
  %v112 = vadd.f32 %v110, %v111
  %v113 = vsel %vm34, %v87, 0.0
  %v114 = vadd.f32 %v112, %v113
  %v115 = vsel %vm34, %v88, 0.0
  %v116 = vadd.f32 %v114, %v115
  %v117 = vsel %vm34, %v89, 0.0
  %v118 = vadd.f32 %v116, %v117
  %v119 = vsel %vm34, %v90, 0.0
  %v120 = vadd.f32 %v118, %v119
  %v121 = vsel %vm34, %v91, 0.0
  %v122 = vadd.f32 %v120, %v121
  %v123 = vrot.slane %v122, 4
  %v124 = vadd.f32 %v122, %v123
  %v125 = vrot.slane %v124, 2
  %v126 = vadd.f32 %v124, %v125
  %v127 = vrot.slane %v126, 1
  %v128 = vadd.f32 %v126, %v127
  %v129 = vadd.f32 %v75, %v128
  %130 = vst.msk [vmem:[%s2] sm:$0x1] %vm73, %v129
  // Predicated region
  $region10: #{resnet_forward.48} parent=0 // pred_check
    _
  $region11: #{resnet_forward.48} parent=0 // pred_check_branch
    %132 = sbr.rel (0) target = $region13
  $region12: #{resnet_forward.48} parent=0 // pred_region
    _
  $region13: #{resnet_forward.48} parent=0 // pred_fallthru
    _
  // Predicated region
  $region14: #{resnet_forward.48} parent=0 // pred_check
    _
  $region15: #{resnet_forward.48} parent=0 // pred_check_branch
    %134 = sbr.rel (0) target = $region17
  $region16: #{resnet_forward.48} parent=0 // pred_region
    _
  $region17: #{resnet_forward.48} parent=0 // pred_fallthru
    _
  // Predicated region
  $region18: #{resnet_forward.48} parent=0 // pred_check
    _
  $region19: #{resnet_forward.48} parent=0 // pred_check_branch
    %136 = sbr.rel (0) target = $region21
  $region20: #{resnet_forward.48} parent=0 // pred_region
    _
  $region21: #{resnet_forward.48} parent=0 // pred_fallthru
    _
  // Predicated region
  $region22: #{resnet_forward.48} parent=0 // pred_check
    _
  $region23: #{resnet_forward.48} parent=0 // pred_check_branch
    %138 = sbr.rel (0) target = $region25
  $region24: #{resnet_forward.48} parent=0 // pred_region
    _
  $region25: #{resnet_forward.48} parent=0 // pred_fallthru
    _

// kernel: resnet_forward.49
$region0: #{resnet_forward.49}
  #allocation0 [shape = 'u32[]', space=smem, size = 0x4, offset = 0x4, fixed_abs, tag = 'smem constant byte address 0x4 - core index']
  #allocation1 [shape = 'u32[72,128]{1,0:T(1,128)}', space=vmem, size = 0x9000, scoped, tag = 'internal scratch']
  %s0 = inlined_call_operand.vmem [shape: f32[128,64], index: 0, kind: input, shape index: {}]
  %s1 = inlined_call_operand.vmem [shape: f32[1,64], index: 1, kind: input, shape index: {}]
  %s2 = inlined_call_operand.vmem [shape: f32[1,64], index: 2, kind: input, shape index: {}]
  %s3 = inlined_call_operand.vmem [shape: f32[128,64], index: 3, kind: output, shape index: {}]
  %s4 = sld [smem:[#allocation0]]
  $region22: #{resnet_forward.49} parent=0
    _
  %s6 = ssub.s32 1, %s4
  %s7 = scalar_select 0, %s6, %s4
  // Predicated region
  $region2: #{resnet_forward.49} parent=0 // pred_check
    _
  $region3: #{resnet_forward.49} parent=0 // pred_check_branch
    %9 = sbr.rel (0) target = $region5
  $region4: #{resnet_forward.49} parent=0 // pred_region
    _
  $region5: #{resnet_forward.49} parent=0 // pred_fallthru
    _
  // Predicated region
  $region6: #{resnet_forward.49} parent=0 // pred_check
    _
  $region7: #{resnet_forward.49} parent=0 // pred_check_branch
    %11 = sbr.rel (0) target = $region9
  $region8: #{resnet_forward.49} parent=0 // pred_region
    _
  $region9: #{resnet_forward.49} parent=0 // pred_fallthru
    _
  // Predicated region
  $region10: #{resnet_forward.49} parent=0 // pred_check
    _
  $region11: #{resnet_forward.49} parent=0 // pred_check_branch
    %13 = sbr.rel (0) target = $region13
  $region12: #{resnet_forward.49} parent=0 // pred_region
    _
  $region13: #{resnet_forward.49} parent=0 // pred_fallthru
    _
  %v14 = vld [vmem:[%s0] sm:$0xff]
  %v15 = vld [vmem:[%s0 + $0x8] sm:$0xff]
  %v16 = vld [vmem:[%s0 + $0x10] sm:$0xff]
  %v17 = vld [vmem:[%s0 + $0x18] sm:$0xff]
  %v18 = vld [vmem:[%s0 + $0x20] sm:$0xff]
  %v19 = vld [vmem:[%s0 + $0x28] sm:$0xff]
  %v20 = vld [vmem:[%s0 + $0x30] sm:$0xff]
  %v21 = vld [vmem:[%s0 + $0x38] sm:$0xff]
  %v22 = vld [vmem:[%s0 + $0x40] sm:$0xff]
  %v23 = vld [vmem:[%s0 + $0x48] sm:$0xff]
  %v24 = vld [vmem:[%s0 + $0x50] sm:$0xff]
  %v25 = vld [vmem:[%s0 + $0x58] sm:$0xff]
  %v26 = vld [vmem:[%s0 + $0x60] sm:$0xff]
  %v27 = vld [vmem:[%s0 + $0x68] sm:$0xff]
  %v28 = vld [vmem:[%s0 + $0x70] sm:$0xff]
  %v29 = vld [vmem:[%s0 + $0x78] sm:$0xff]
  %v30 = vld [vmem:[%s1] sm:$0x1]
  %v32 = vperm.slane %v30, 0
  %v34 = vmul.f32 %v14, %v32
  %v35 = vmul.f32 %v15, %v32
  %v36 = vmul.f32 %v16, %v32
  %v37 = vmul.f32 %v17, %v32
  %v38 = vmul.f32 %v18, %v32
  %v39 = vmul.f32 %v19, %v32
  %v40 = vmul.f32 %v20, %v32
  %v41 = vmul.f32 %v21, %v32
  %v42 = vmul.f32 %v22, %v32
  %v43 = vmul.f32 %v23, %v32
  %v44 = vmul.f32 %v24, %v32
  %v45 = vmul.f32 %v25, %v32
  %v46 = vmul.f32 %v26, %v32
  %v47 = vmul.f32 %v27, %v32
  %v48 = vmul.f32 %v28, %v32
  %v49 = vmul.f32 %v29, %v32
  %v50 = vld [vmem:[%s2] sm:$0x1]
  %v52 = vperm.slane %v50, 0
  %v54 = vadd.f32 %v34, %v52
  %v55 = vadd.f32 %v35, %v52
  %v56 = vadd.f32 %v36, %v52
  %v57 = vadd.f32 %v37, %v52
  %v58 = vadd.f32 %v38, %v52
  %v59 = vadd.f32 %v39, %v52
  %v60 = vadd.f32 %v40, %v52
  %v61 = vadd.f32 %v41, %v52
  %v62 = vadd.f32 %v42, %v52
  %v63 = vadd.f32 %v43, %v52
  %v64 = vadd.f32 %v44, %v52
  %v65 = vadd.f32 %v45, %v52
  %v66 = vadd.f32 %v46, %v52
  %v67 = vadd.f32 %v47, %v52
  %v68 = vadd.f32 %v48, %v52
  %v69 = vadd.f32 %v49, %v52
  %v70 = vmax.f32 %v54, 0.0
  %v71 = vmax.f32 %v55, 0.0
  %v72 = vmax.f32 %v56, 0.0
  %v73 = vmax.f32 %v57, 0.0
  %v74 = vmax.f32 %v58, 0.0
  %v75 = vmax.f32 %v59, 0.0
  %v76 = vmax.f32 %v60, 0.0
  %v77 = vmax.f32 %v61, 0.0
  %v78 = vmax.f32 %v62, 0.0
  %v79 = vmax.f32 %v63, 0.0
  %v80 = vmax.f32 %v64, 0.0
  %v81 = vmax.f32 %v65, 0.0
  %v82 = vmax.f32 %v66, 0.0
  %v83 = vmax.f32 %v67, 0.0
  %v84 = vmax.f32 %v68, 0.0
  %v85 = vmax.f32 %v69, 0.0
  %vm86 = vcmask 523264
  %87 = vst.msk [vmem:[%s3] sm:$0xff] %vm86, %v70
  %88 = vst.msk [vmem:[%s3 + $0x8] sm:$0xff] %vm86, %v71
  %89 = vst.msk [vmem:[%s3 + $0x10] sm:$0xff] %vm86, %v72
  %90 = vst.msk [vmem:[%s3 + $0x18] sm:$0xff] %vm86, %v73
  %91 = vst.msk [vmem:[%s3 + $0x20] sm:$0xff] %vm86, %v74
  %92 = vst.msk [vmem:[%s3 + $0x28] sm:$0xff] %vm86, %v75
  %93 = vst.msk [vmem:[%s3 + $0x30] sm:$0xff] %vm86, %v76
  %94 = vst.msk [vmem:[%s3 + $0x38] sm:$0xff] %vm86, %v77
  %95 = vst.msk [vmem:[%s3 + $0x40] sm:$0xff] %vm86, %v78
  %96 = vst.msk [vmem:[%s3 + $0x48] sm:$0xff] %vm86, %v79
  %97 = vst.msk [vmem:[%s3 + $0x50] sm:$0xff] %vm86, %v80
  %98 = vst.msk [vmem:[%s3 + $0x58] sm:$0xff] %vm86, %v81
  %99 = vst.msk [vmem:[%s3 + $0x60] sm:$0xff] %vm86, %v82
  %100 = vst.msk [vmem:[%s3 + $0x68] sm:$0xff] %vm86, %v83
  %101 = vst.msk [vmem:[%s3 + $0x70] sm:$0xff] %vm86, %v84
  %102 = vst.msk [vmem:[%s3 + $0x78] sm:$0xff] %vm86, %v85
  // Predicated region
  $region14: #{resnet_forward.49} parent=0 // pred_check
    _
  $region15: #{resnet_forward.49} parent=0 // pred_check_branch
    %104 = sbr.rel (0) target = $region17
  $region16: #{resnet_forward.49} parent=0 // pred_region
    _
  $region17: #{resnet_forward.49} parent=0 // pred_fallthru
    _
  // Predicated region
  $region18: #{resnet_forward.49} parent=0 // pred_check
    _
  $region19: #{resnet_forward.49} parent=0 // pred_check_branch
    %106 = sbr.rel (0) target = $region21
  $region20: #{resnet_forward.49} parent=0 // pred_region
    _
  $region21: #{resnet_forward.49} parent=0 // pred_fallthru
    _

// kernel: resnet_forward.47
$region0: #{resnet_forward.47}
  #allocation0 [shape = 'u32[]', space=smem, size = 0x4, offset = 0x4, fixed_abs, tag = 'smem constant byte address 0x4 - core index']
  #allocation1 [shape = 'u32[72,128]{1,0:T(1,128)}', space=vmem, size = 0x9000, scoped, tag = 'internal scratch']
  #allocation2 [shape = 'f32[128,128]{1,0:T(8,128)}', space=vmem, size = 0x10000, scoped, tag = 'scratch operand']
  %s0 = inlined_call_operand.vmem [shape: bf16[128,256], index: 0, kind: input, shape index: {}]
  %s1 = inlined_call_operand.vmem [shape: bf16[256,128], index: 1, kind: input, shape index: {}]
  %s2 = inlined_call_operand.vmem [shape: f32[1,128], index: 2, kind: input, shape index: {}]
  %s3 = inlined_call_operand.vmem [shape: f32[128,128], index: 3, kind: output, shape index: {}]
  %s4 = sld [smem:[#allocation0]]
  $region30: #{resnet_forward.47} parent=0
    _
  %s6 = ssub.s32 1, %s4
  %s7 = scalar_select 0, %s6, %s4
  // Predicated region
  $region2: #{resnet_forward.47} parent=0 // pred_check
    _
  $region3: #{resnet_forward.47} parent=0 // pred_check_branch
    %9 = sbr.rel (0) target = $region5
  $region4: #{resnet_forward.47} parent=0 // pred_region
    _
  $region5: #{resnet_forward.47} parent=0 // pred_fallthru
    _
  // Predicated region
  $region6: #{resnet_forward.47} parent=0 // pred_check
    _
  $region7: #{resnet_forward.47} parent=0 // pred_check_branch
    %11 = sbr.rel (0) target = $region9
  $region8: #{resnet_forward.47} parent=0 // pred_region
    _
  $region9: #{resnet_forward.47} parent=0 // pred_fallthru
    _
  // Predicated region
  $region10: #{resnet_forward.47} parent=0 // pred_check
    _
  $region11: #{resnet_forward.47} parent=0 // pred_check_branch
    %13 = sbr.rel (0) target = $region13
  $region12: #{resnet_forward.47} parent=0 // pred_region
    _
  $region13: #{resnet_forward.47} parent=0 // pred_fallthru
    _
  %p14 = scmp.eq.s32.totalorder 0, 0
  // Predicated region
  $region14: #{resnet_forward.47} parent=0 // pred_check
    %p15 = pneg %p14
  $region15: #{resnet_forward.47} parent=0 // pred_check_branch
    %17 = sbr.rel (%p15) target = $region17
  $region16: #{resnet_forward.47} parent=0 // pred_region
    %18 = vst [vmem:[#allocation2] sm:$0xff] 0.0
    %19 = vst [vmem:[#allocation2 + $0x8] sm:$0xff] 0.0
    %20 = vst [vmem:[#allocation2 + $0x10] sm:$0xff] 0.0
    %21 = vst [vmem:[#allocation2 + $0x18] sm:$0xff] 0.0
    %22 = vst [vmem:[#allocation2 + $0x20] sm:$0xff] 0.0
    %23 = vst [vmem:[#allocation2 + $0x28] sm:$0xff] 0.0
    %24 = vst [vmem:[#allocation2 + $0x30] sm:$0xff] 0.0
    %25 = vst [vmem:[#allocation2 + $0x38] sm:$0xff] 0.0
    %26 = vst [vmem:[#allocation2 + $0x40] sm:$0xff] 0.0
    %27 = vst [vmem:[#allocation2 + $0x48] sm:$0xff] 0.0
    %28 = vst [vmem:[#allocation2 + $0x50] sm:$0xff] 0.0
    %29 = vst [vmem:[#allocation2 + $0x58] sm:$0xff] 0.0
    %30 = vst [vmem:[#allocation2 + $0x60] sm:$0xff] 0.0
    %31 = vst [vmem:[#allocation2 + $0x68] sm:$0xff] 0.0
    %32 = vst [vmem:[#allocation2 + $0x70] sm:$0xff] 0.0
    %33 = vst [vmem:[#allocation2 + $0x78] sm:$0xff] 0.0
  $region17: #{resnet_forward.47} parent=0 // pred_fallthru
    _
  %v34 = vld [vmem:[#allocation2] sm:$0xff]
  %v35 = vld [vmem:[#allocation2 + $0x8] sm:$0xff]
  %v36 = vld [vmem:[#allocation2 + $0x10] sm:$0xff]
  %v37 = vld [vmem:[#allocation2 + $0x18] sm:$0xff]
  %v38 = vld [vmem:[#allocation2 + $0x20] sm:$0xff]
  %v39 = vld [vmem:[#allocation2 + $0x28] sm:$0xff]
  %v40 = vld [vmem:[#allocation2 + $0x30] sm:$0xff]
  %v41 = vld [vmem:[#allocation2 + $0x38] sm:$0xff]
  %v42 = vld [vmem:[#allocation2 + $0x40] sm:$0xff]
  %v43 = vld [vmem:[#allocation2 + $0x48] sm:$0xff]
  %v44 = vld [vmem:[#allocation2 + $0x50] sm:$0xff]
  %v45 = vld [vmem:[#allocation2 + $0x58] sm:$0xff]
  %v46 = vld [vmem:[#allocation2 + $0x60] sm:$0xff]
  %v47 = vld [vmem:[#allocation2 + $0x68] sm:$0xff]
  %v48 = vld [vmem:[#allocation2 + $0x70] sm:$0xff]
  %v49 = vld [vmem:[#allocation2 + $0x78] sm:$0xff]
  %v50 = vld [vmem:[%s0] sm:$0xff]
  %v51 = vld [vmem:[%s0 + $0x8] sm:$0xff]
  %v52 = vld [vmem:[%s0 + $0x10] sm:$0xff]
  %v53 = vld [vmem:[%s0 + $0x18] sm:$0xff]
  %v54 = vld [vmem:[%s0 + $0x20] sm:$0xff]
  %v55 = vld [vmem:[%s0 + $0x28] sm:$0xff]
  %v56 = vld [vmem:[%s0 + $0x30] sm:$0xff]
  %v57 = vld [vmem:[%s0 + $0x38] sm:$0xff]
  %v58 = vld [vmem:[%s0 + $0x40] sm:$0xff]
  %v59 = vld [vmem:[%s0 + $0x48] sm:$0xff]
  %v60 = vld [vmem:[%s0 + $0x50] sm:$0xff]
  %v61 = vld [vmem:[%s0 + $0x58] sm:$0xff]
  %v62 = vld [vmem:[%s0 + $0x60] sm:$0xff]
  %v63 = vld [vmem:[%s0 + $0x68] sm:$0xff]
  %v64 = vld [vmem:[%s0 + $0x70] sm:$0xff]
  %v65 = vld [vmem:[%s0 + $0x78] sm:$0xff]
  %v66 = vld [vmem:[%s1] sm:$0xf]
  %v67 = vld [vmem:[%s1 + $0x4] sm:$0xf]
  %v68 = vld [vmem:[%s1 + $0x8] sm:$0xf]
  %v69 = vld [vmem:[%s1 + $0xc] sm:$0xf]
  %v70 = vld [vmem:[%s1 + $0x10] sm:$0xf]
  %v71 = vld [vmem:[%s1 + $0x14] sm:$0xf]
  %v72 = vld [vmem:[%s1 + $0x18] sm:$0xf]
  %v73 = vld [vmem:[%s1 + $0x1c] sm:$0xf]
  %v74 = vld [vmem:[%s1 + $0x20] sm:$0xf]
  %v75 = vld [vmem:[%s1 + $0x24] sm:$0xf]
  %v76 = vld [vmem:[%s1 + $0x28] sm:$0xf]
  %v77 = vld [vmem:[%s1 + $0x2c] sm:$0xf]
  %v78 = vld [vmem:[%s1 + $0x30] sm:$0xf]
  %v79 = vld [vmem:[%s1 + $0x34] sm:$0xf]
  %v80 = vld [vmem:[%s1 + $0x38] sm:$0xf]
  %v81 = vld [vmem:[%s1 + $0x3c] sm:$0xf]
  %v82 = vld [vmem:[%s1 + $0x40] sm:$0xf]
  %v83 = vld [vmem:[%s1 + $0x44] sm:$0xf]
  %v84 = vld [vmem:[%s1 + $0x48] sm:$0xf]
  %v85 = vld [vmem:[%s1 + $0x4c] sm:$0xf]
  %v86 = vld [vmem:[%s1 + $0x50] sm:$0xf]
  %v87 = vld [vmem:[%s1 + $0x54] sm:$0xf]
  %v88 = vld [vmem:[%s1 + $0x58] sm:$0xf]
  %v89 = vld [vmem:[%s1 + $0x5c] sm:$0xf]
  %v90 = vld [vmem:[%s1 + $0x60] sm:$0xf]
  %v91 = vld [vmem:[%s1 + $0x64] sm:$0xf]
  %v92 = vld [vmem:[%s1 + $0x68] sm:$0xf]
  %v93 = vld [vmem:[%s1 + $0x6c] sm:$0xf]
  %v94 = vld [vmem:[%s1 + $0x70] sm:$0xf]
  %v95 = vld [vmem:[%s1 + $0x74] sm:$0xf]
  %v96 = vld [vmem:[%s1 + $0x78] sm:$0xf]
  %v97 = vld [vmem:[%s1 + $0x7c] sm:$0xf]
  %v114 = vunpack.c.l.b16 %v50
  %v115 = vunpack.c.h.b16 %v50
  %v116 = vunpack.c.l.b16 %v51
  %v117 = vunpack.c.h.b16 %v51
  %v118 = vunpack.c.l.b16 %v52
  %v119 = vunpack.c.h.b16 %v52
  %v120 = vunpack.c.l.b16 %v53
  %v121 = vunpack.c.h.b16 %v53
  %v122 = vunpack.c.l.b16 %v54
  %v123 = vunpack.c.h.b16 %v54
  %v124 = vunpack.c.l.b16 %v55
  %v125 = vunpack.c.h.b16 %v55
  %v126 = vunpack.c.l.b16 %v56
  %v127 = vunpack.c.h.b16 %v56
  %v128 = vunpack.c.l.b16 %v57
  %v129 = vunpack.c.h.b16 %v57
  %v130 = vunpack.c.l.b16 %v58
  %v131 = vunpack.c.h.b16 %v58
  %v132 = vunpack.c.l.b16 %v59
  %v133 = vunpack.c.h.b16 %v59
  %v134 = vunpack.c.l.b16 %v60
  %v135 = vunpack.c.h.b16 %v60
  %v136 = vunpack.c.l.b16 %v61
  %v137 = vunpack.c.h.b16 %v61
  %v138 = vunpack.c.l.b16 %v62
  %v139 = vunpack.c.h.b16 %v62
  %v140 = vunpack.c.l.b16 %v63
  %v141 = vunpack.c.h.b16 %v63
  %v142 = vunpack.c.l.b16 %v64
  %v143 = vunpack.c.h.b16 %v64
  %v144 = vunpack.c.l.b16 %v65
  %v145 = vunpack.c.h.b16 %v65
  %v146 = vpack.c.b16 %v116, %v114
  %v147 = vpack.c.b16 %v117, %v115
  %v148 = vpack.c.b16 %v120, %v118
  %v149 = vpack.c.b16 %v121, %v119
  %v150 = vpack.c.b16 %v124, %v122
  %v151 = vpack.c.b16 %v125, %v123
  %v152 = vpack.c.b16 %v128, %v126
  %v153 = vpack.c.b16 %v129, %v127
  %v154 = vpack.c.b16 %v132, %v130
  %v155 = vpack.c.b16 %v133, %v131
  %v156 = vpack.c.b16 %v136, %v134
  %v157 = vpack.c.b16 %v137, %v135
  %v158 = vpack.c.b16 %v140, %v138
  %v159 = vpack.c.b16 %v141, %v139
  %v160 = vpack.c.b16 %v144, %v142
  %v161 = vpack.c.b16 %v145, %v143
  %v210 = vunpack.c.l.b16 %v66
  %v211 = vunpack.c.l.b16 %v67
  %v212 = vunpack.c.l.b16 %v68
  %v213 = vunpack.c.l.b16 %v69
  %v214 = vunpack.c.l.b16 %v70
  %v215 = vunpack.c.l.b16 %v71
  %v216 = vunpack.c.l.b16 %v72
  %v217 = vunpack.c.l.b16 %v73
  %v218 = vunpack.c.l.b16 %v74
  %v219 = vunpack.c.l.b16 %v75
  %v220 = vunpack.c.l.b16 %v76
  %v221 = vunpack.c.l.b16 %v77
  %v222 = vunpack.c.l.b16 %v78
  %v223 = vunpack.c.l.b16 %v79
  %v224 = vunpack.c.l.b16 %v80
  %v225 = vunpack.c.l.b16 %v81
  %v226 = vunpack.c.l.b16 %v82
  %v227 = vunpack.c.l.b16 %v83
  %v228 = vunpack.c.l.b16 %v84
  %v229 = vunpack.c.l.b16 %v85
  %v230 = vunpack.c.l.b16 %v86
  %v231 = vunpack.c.l.b16 %v87
  %v232 = vunpack.c.l.b16 %v88
  %v233 = vunpack.c.l.b16 %v89
  %v234 = vunpack.c.l.b16 %v90
  %v235 = vunpack.c.l.b16 %v91
  %v236 = vunpack.c.l.b16 %v92
  %v237 = vunpack.c.l.b16 %v93
  %v238 = vunpack.c.l.b16 %v94
  %v239 = vunpack.c.l.b16 %v95
  %v240 = vunpack.c.l.b16 %v96
  %v241 = vunpack.c.l.b16 %v97
  %v242 = vpack.c.b16 %v211, %v210
  %v243 = vpack.c.b16 %v213, %v212
  %v244 = vpack.c.b16 %v215, %v214
  %v245 = vpack.c.b16 %v217, %v216
  %v246 = vpack.c.b16 %v219, %v218
  %v247 = vpack.c.b16 %v221, %v220
  %v248 = vpack.c.b16 %v223, %v222
  %v249 = vpack.c.b16 %v225, %v224
  %v250 = vpack.c.b16 %v227, %v226
  %v251 = vpack.c.b16 %v229, %v228
  %v252 = vpack.c.b16 %v231, %v230
  %v253 = vpack.c.b16 %v233, %v232
  %v254 = vpack.c.b16 %v235, %v234
  %v255 = vpack.c.b16 %v237, %v236
  %v256 = vpack.c.b16 %v239, %v238
  %v257 = vpack.c.b16 %v241, %v240
  %274 = vmatpush.bf16.msra.mxu0 %v249
  %275 = vmatpush.bf16.msra.mxu0 %v248
  %276 = vmatpush.bf16.msra.mxu0 %v247
  %277 = vmatpush.bf16.msra.mxu0 %v246
  %278 = vmatpush.bf16.msra.mxu0 %v245
  %279 = vmatpush.bf16.msra.mxu0 %v244
  %280 = vmatpush.bf16.msra.mxu0 %v243
  %281 = vmatpush.bf16.msra.mxu0 %v242
  %282 = vmatmul.bf16.gmra.mxu0 %v146
  %v283 = vpop.f32.mrf.mxu0
  %v284 = vadd.f32 0.0, %v283
  %v285 = vpop.f32.mrf.mxu0
  %v286 = vadd.f32 0.0, %v285
  %287 = vmatmul.bf16.gmra.mxu0 %v148
  %v288 = vpop.f32.mrf.mxu0
  %v289 = vadd.f32 0.0, %v288
  %v290 = vpop.f32.mrf.mxu0
  %v291 = vadd.f32 0.0, %v290
  %292 = vmatmul.bf16.gmra.mxu0 %v150
  %v293 = vpop.f32.mrf.mxu0
  %v294 = vadd.f32 0.0, %v293
  %v295 = vpop.f32.mrf.mxu0
  %v296 = vadd.f32 0.0, %v295
  %297 = vmatmul.bf16.gmra.mxu0 %v152
  %v298 = vpop.f32.mrf.mxu0
  %v299 = vadd.f32 0.0, %v298
  %v300 = vpop.f32.mrf.mxu0
  %v301 = vadd.f32 0.0, %v300
  %302 = vmatmul.bf16.gmra.mxu0 %v154
  %v303 = vpop.f32.mrf.mxu0
  %v304 = vadd.f32 0.0, %v303
  %v305 = vpop.f32.mrf.mxu0
  %v306 = vadd.f32 0.0, %v305
  %307 = vmatmul.bf16.gmra.mxu0 %v156
  %v308 = vpop.f32.mrf.mxu0
  %v309 = vadd.f32 0.0, %v308
  %v310 = vpop.f32.mrf.mxu0
  %v311 = vadd.f32 0.0, %v310
  %312 = vmatmul.bf16.gmra.mxu0 %v158
  %v313 = vpop.f32.mrf.mxu0
  %v314 = vadd.f32 0.0, %v313
  %v315 = vpop.f32.mrf.mxu0
  %v316 = vadd.f32 0.0, %v315
  %317 = vmatmul.bf16.gmra.mxu0 %v160
  %v318 = vpop.f32.mrf.mxu0
  %v319 = vadd.f32 0.0, %v318
  %v320 = vpop.f32.mrf.mxu0
  %v321 = vadd.f32 0.0, %v320
  %322 = vdwg.mxu0
  %323 = vmatpush.bf16.msra.mxu0 %v257
  %324 = vmatpush.bf16.msra.mxu0 %v256
  %325 = vmatpush.bf16.msra.mxu0 %v255
  %326 = vmatpush.bf16.msra.mxu0 %v254
  %327 = vmatpush.bf16.msra.mxu0 %v253
  %328 = vmatpush.bf16.msra.mxu0 %v252
  %329 = vmatpush.bf16.msra.mxu0 %v251
  %330 = vmatpush.bf16.msra.mxu0 %v250
  %331 = vmatmul.bf16.gmra.mxu0 %v147
  %v332 = vpop.f32.mrf.mxu0
  %v333 = vadd.f32 %v284, %v332
  %v334 = vpop.f32.mrf.mxu0
  %v335 = vadd.f32 %v286, %v334
  %336 = vmatmul.bf16.gmra.mxu0 %v149
  %v337 = vpop.f32.mrf.mxu0
  %v338 = vadd.f32 %v289, %v337
  %v339 = vpop.f32.mrf.mxu0
  %v340 = vadd.f32 %v291, %v339
  %341 = vmatmul.bf16.gmra.mxu0 %v151
  %v342 = vpop.f32.mrf.mxu0
  %v343 = vadd.f32 %v294, %v342
  %v344 = vpop.f32.mrf.mxu0
  %v345 = vadd.f32 %v296, %v344
  %346 = vmatmul.bf16.gmra.mxu0 %v153
  %v347 = vpop.f32.mrf.mxu0
  %v348 = vadd.f32 %v299, %v347
  %v349 = vpop.f32.mrf.mxu0
  %v350 = vadd.f32 %v301, %v349
  %351 = vmatmul.bf16.gmra.mxu0 %v155
  %v352 = vpop.f32.mrf.mxu0
  %v353 = vadd.f32 %v304, %v352
  %v354 = vpop.f32.mrf.mxu0
  %v355 = vadd.f32 %v306, %v354
  %356 = vmatmul.bf16.gmra.mxu0 %v157
  %v357 = vpop.f32.mrf.mxu0
  %v358 = vadd.f32 %v309, %v357
  %v359 = vpop.f32.mrf.mxu0
  %v360 = vadd.f32 %v311, %v359
  %361 = vmatmul.bf16.gmra.mxu0 %v159
  %v362 = vpop.f32.mrf.mxu0
  %v363 = vadd.f32 %v314, %v362
  %v364 = vpop.f32.mrf.mxu0
  %v365 = vadd.f32 %v316, %v364
  %366 = vmatmul.bf16.gmra.mxu0 %v161
  %v367 = vpop.f32.mrf.mxu0
  %v368 = vadd.f32 %v319, %v367
  %v369 = vpop.f32.mrf.mxu0
  %v370 = vadd.f32 %v321, %v369
  %371 = vdwg.mxu0
  %v372 = vadd.f32 %v34, %v333
  %v373 = vadd.f32 %v35, %v335
  %v374 = vadd.f32 %v36, %v338
  %v375 = vadd.f32 %v37, %v340
  %v376 = vadd.f32 %v38, %v343
  %v377 = vadd.f32 %v39, %v345
  %v378 = vadd.f32 %v40, %v348
  %v379 = vadd.f32 %v41, %v350
  %v380 = vadd.f32 %v42, %v353
  %v381 = vadd.f32 %v43, %v355
  %v382 = vadd.f32 %v44, %v358
  %v383 = vadd.f32 %v45, %v360
  %v384 = vadd.f32 %v46, %v363
  %v385 = vadd.f32 %v47, %v365
  %v386 = vadd.f32 %v48, %v368
  %v387 = vadd.f32 %v49, %v370
  %388 = vst [vmem:[#allocation2] sm:$0xff] %v372
  %389 = vst [vmem:[#allocation2 + $0x8] sm:$0xff] %v373
  %390 = vst [vmem:[#allocation2 + $0x10] sm:$0xff] %v374
  %391 = vst [vmem:[#allocation2 + $0x18] sm:$0xff] %v375
  %392 = vst [vmem:[#allocation2 + $0x20] sm:$0xff] %v376
  %393 = vst [vmem:[#allocation2 + $0x28] sm:$0xff] %v377
  %394 = vst [vmem:[#allocation2 + $0x30] sm:$0xff] %v378
  %395 = vst [vmem:[#allocation2 + $0x38] sm:$0xff] %v379
  %396 = vst [vmem:[#allocation2 + $0x40] sm:$0xff] %v380
  %397 = vst [vmem:[#allocation2 + $0x48] sm:$0xff] %v381
  %398 = vst [vmem:[#allocation2 + $0x50] sm:$0xff] %v382
  %399 = vst [vmem:[#allocation2 + $0x58] sm:$0xff] %v383
  %400 = vst [vmem:[#allocation2 + $0x60] sm:$0xff] %v384
  %401 = vst [vmem:[#allocation2 + $0x68] sm:$0xff] %v385
  %402 = vst [vmem:[#allocation2 + $0x70] sm:$0xff] %v386
  %403 = vst [vmem:[#allocation2 + $0x78] sm:$0xff] %v387
  // Predicated region
  $region18: #{resnet_forward.47} parent=0 // pred_check
    %p404 = pneg %p14
  $region19: #{resnet_forward.47} parent=0 // pred_check_branch
    %406 = sbr.rel (%p404) target = $region21
  $region20: #{resnet_forward.47} parent=0 // pred_region
    %v407 = vld [vmem:[#allocation2] sm:$0xff]
    %v408 = vld [vmem:[#allocation2 + $0x8] sm:$0xff]
    %v409 = vld [vmem:[#allocation2 + $0x10] sm:$0xff]
    %v410 = vld [vmem:[#allocation2 + $0x18] sm:$0xff]
    %v411 = vld [vmem:[#allocation2 + $0x20] sm:$0xff]
    %v412 = vld [vmem:[#allocation2 + $0x28] sm:$0xff]
    %v413 = vld [vmem:[#allocation2 + $0x30] sm:$0xff]
    %v414 = vld [vmem:[#allocation2 + $0x38] sm:$0xff]
    %v415 = vld [vmem:[#allocation2 + $0x40] sm:$0xff]
    %v416 = vld [vmem:[#allocation2 + $0x48] sm:$0xff]
    %v417 = vld [vmem:[#allocation2 + $0x50] sm:$0xff]
    %v418 = vld [vmem:[#allocation2 + $0x58] sm:$0xff]
    %v419 = vld [vmem:[#allocation2 + $0x60] sm:$0xff]
    %v420 = vld [vmem:[#allocation2 + $0x68] sm:$0xff]
    %v421 = vld [vmem:[#allocation2 + $0x70] sm:$0xff]
    %v422 = vld [vmem:[#allocation2 + $0x78] sm:$0xff]
    %v423 = vld [vmem:[%s2] sm:$0x1]
    %v425 = vperm.slane %v423, 0
    %v427 = vadd.f32 %v407, %v425
    %v428 = vadd.f32 %v408, %v425
    %v429 = vadd.f32 %v409, %v425
    %v430 = vadd.f32 %v410, %v425
    %v431 = vadd.f32 %v411, %v425
    %v432 = vadd.f32 %v412, %v425
    %v433 = vadd.f32 %v413, %v425
    %v434 = vadd.f32 %v414, %v425
    %v435 = vadd.f32 %v415, %v425
    %v436 = vadd.f32 %v416, %v425
    %v437 = vadd.f32 %v417, %v425
    %v438 = vadd.f32 %v418, %v425
    %v439 = vadd.f32 %v419, %v425
    %v440 = vadd.f32 %v420, %v425
    %v441 = vadd.f32 %v421, %v425
    %v442 = vadd.f32 %v422, %v425
    %443 = vst [vmem:[%s3] sm:$0xff] %v427
    %444 = vst [vmem:[%s3 + $0x8] sm:$0xff] %v428
    %445 = vst [vmem:[%s3 + $0x10] sm:$0xff] %v429
    %446 = vst [vmem:[%s3 + $0x18] sm:$0xff] %v430
    %447 = vst [vmem:[%s3 + $0x20] sm:$0xff] %v431
    %448 = vst [vmem:[%s3 + $0x28] sm:$0xff] %v432
    %449 = vst [vmem:[%s3 + $0x30] sm:$0xff] %v433
    %450 = vst [vmem:[%s3 + $0x38] sm:$0xff] %v434
    %451 = vst [vmem:[%s3 + $0x40] sm:$0xff] %v435
    %452 = vst [vmem:[%s3 + $0x48] sm:$0xff] %v436
    %453 = vst [vmem:[%s3 + $0x50] sm:$0xff] %v437
    %454 = vst [vmem:[%s3 + $0x58] sm:$0xff] %v438
    %455 = vst [vmem:[%s3 + $0x60] sm:$0xff] %v439
    %456 = vst [vmem:[%s3 + $0x68] sm:$0xff] %v440
    %457 = vst [vmem:[%s3 + $0x70] sm:$0xff] %v441
    %458 = vst [vmem:[%s3 + $0x78] sm:$0xff] %v442
  $region21: #{resnet_forward.47} parent=0 // pred_fallthru
    _
  // Predicated region
  $region22: #{resnet_forward.47} parent=0 // pred_check
    _
  $region23: #{resnet_forward.47} parent=0 // pred_check_branch
    %460 = sbr.rel (0) target = $region25
  $region24: #{resnet_forward.47} parent=0 // pred_region
    _
  $region25: #{resnet_forward.47} parent=0 // pred_fallthru
    _
  // Predicated region
  $region26: #{resnet_forward.47} parent=0 // pred_check
    _
  $region27: #{resnet_forward.47} parent=0 // pred_check_branch
    %462 = sbr.rel (0) target = $region29
  $region28: #{resnet_forward.47} parent=0 // pred_region
    _
  $region29: #{resnet_forward.47} parent=0 // pred_fallthru
    _

// kernel: resnet_forward.53
$region0: #{resnet_forward.53}
  #allocation0 [shape = 'u32[]', space=smem, size = 0x4, offset = 0x4, fixed_abs, tag = 'smem constant byte address 0x4 - core index']
  #allocation1 [shape = 'u32[72,128]{1,0:T(1,128)}', space=vmem, size = 0x9000, scoped, tag = 'internal scratch']
  %s0 = inlined_call_operand.vmem [shape: f32[32,64], index: 0, kind: input, shape index: {}]
  %s1 = inlined_call_operand.vmem [shape: f32[1,64], index: 1, kind: output, shape index: {0}]
  %s2 = inlined_call_operand.vmem [shape: f32[1,64], index: 2, kind: output, shape index: {1}]
  %3 = xla_tuple %s1, %s2
  %s4 = sld [smem:[#allocation0]]
  $region26: #{resnet_forward.53} parent=0
    _
  %s6 = ssub.s32 1, %s4
  %s7 = scalar_select 0, %s6, %s4
  // Predicated region
  $region2: #{resnet_forward.53} parent=0 // pred_check
    _
  $region3: #{resnet_forward.53} parent=0 // pred_check_branch
    %9 = sbr.rel (0) target = $region5
  $region4: #{resnet_forward.53} parent=0 // pred_region
    _
  $region5: #{resnet_forward.53} parent=0 // pred_fallthru
    _
  %p10 = scmp.eq.s32.totalorder 0, 0
  // Predicated region
  $region6: #{resnet_forward.53} parent=0 // pred_check
    %p11 = pneg %p10
  $region7: #{resnet_forward.53} parent=0 // pred_check_branch
    %13 = sbr.rel (%p11) target = $region9
  $region8: #{resnet_forward.53} parent=0 // pred_region
    %vm14 = vcmask 516096
    %15 = vst.msk [vmem:[%s1] sm:$0x1] %vm14, 0.0
    %16 = vst.msk [vmem:[%s2] sm:$0x1] %vm14, 0.0
  $region9: #{resnet_forward.53} parent=0 // pred_fallthru
    _
  %v17 = vld [vmem:[%s0] sm:$0xff]
  %v18 = vld [vmem:[%s0 + $0x8] sm:$0xff]
  %v19 = vld [vmem:[%s0 + $0x10] sm:$0xff]
  %v20 = vld [vmem:[%s0 + $0x18] sm:$0xff]
  %v21 = vld [vmem:[%s1] sm:$0x1]
  %vm22 = vcmask 523264
  %v23 = vsel %vm22, %v17, 0.0
  %v24 = vsel %vm22, %v18, 0.0
  %v25 = vadd.f32 %v23, %v24
  %v26 = vsel %vm22, %v19, 0.0
  %v27 = vadd.f32 %v25, %v26
  %v28 = vsel %vm22, %v20, 0.0
  %v29 = vadd.f32 %v27, %v28
  %v30 = vrot.slane %v29, 4
  %v31 = vadd.f32 %v29, %v30
  %v32 = vrot.slane %v31, 2
  %v33 = vadd.f32 %v31, %v32
  %v34 = vrot.slane %v33, 1
  %v35 = vadd.f32 %v33, %v34
  %v36 = vadd.f32 %v21, %v35
  %vm37 = vcmask 516096
  %38 = vst.msk [vmem:[%s1] sm:$0x1] %vm37, %v36
  %v39 = vld [vmem:[%s2] sm:$0x1]
  %v40 = vmul.f32 %v17, %v17
  %v41 = vmul.f32 %v18, %v18
  %v42 = vmul.f32 %v19, %v19
  %v43 = vmul.f32 %v20, %v20
  %v44 = vsel %vm22, %v40, 0.0
  %v45 = vsel %vm22, %v41, 0.0
  %v46 = vadd.f32 %v44, %v45
  %v47 = vsel %vm22, %v42, 0.0
  %v48 = vadd.f32 %v46, %v47
  %v49 = vsel %vm22, %v43, 0.0
  %v50 = vadd.f32 %v48, %v49
  %v51 = vrot.slane %v50, 4
  %v52 = vadd.f32 %v50, %v51
  %v53 = vrot.slane %v52, 2
  %v54 = vadd.f32 %v52, %v53
  %v55 = vrot.slane %v54, 1
  %v56 = vadd.f32 %v54, %v55
  %v57 = vadd.f32 %v39, %v56
  %58 = vst.msk [vmem:[%s2] sm:$0x1] %vm37, %v57
  // Predicated region
  $region10: #{resnet_forward.53} parent=0 // pred_check
    _
  $region11: #{resnet_forward.53} parent=0 // pred_check_branch
    %60 = sbr.rel (0) target = $region13
  $region12: #{resnet_forward.53} parent=0 // pred_region
    _
  $region13: #{resnet_forward.53} parent=0 // pred_fallthru
    _
  // Predicated region
  $region14: #{resnet_forward.53} parent=0 // pred_check
    _
  $region15: #{resnet_forward.53} parent=0 // pred_check_branch
    %62 = sbr.rel (0) target = $region17
  $region16: #{resnet_forward.53} parent=0 // pred_region
    _
  $region17: #{resnet_forward.53} parent=0 // pred_fallthru
    _
  // Predicated region
  $region18: #{resnet_forward.53} parent=0 // pred_check
    _
  $region19: #{resnet_forward.53} parent=0 // pred_check_branch
    %64 = sbr.rel (0) target = $region21
  $region20: #{resnet_forward.53} parent=0 // pred_region
    _
  $region21: #{resnet_forward.53} parent=0 // pred_fallthru
    _
  // Predicated region
  $region22: #{resnet_forward.53} parent=0 // pred_check
    _
  $region23: #{resnet_forward.53} parent=0 // pred_check_branch
    %66 = sbr.rel (0) target = $region25
  $region24: #{resnet_forward.53} parent=0 // pred_region
    _
  $region25: #{resnet_forward.53} parent=0 // pred_fallthru
    _

// kernel: resnet_forward.50
$region0: #{resnet_forward.50}
  #allocation0 [shape = 'u32[]', space=smem, size = 0x4, offset = 0x4, fixed_abs, tag = 'smem constant byte address 0x4 - core index']
  #allocation1 [shape = 'u32[72,128]{1,0:T(1,128)}', space=vmem, size = 0x9000, scoped, tag = 'internal scratch']
  %s0 = inlined_call_operand.vmem [shape: f32[32,64], index: 0, kind: input, shape index: {}]
  %s1 = inlined_call_operand.vmem [shape: f32[32,64], index: 1, kind: input, shape index: {}]
  %s2 = inlined_call_operand.vmem [shape: f32[32,64], index: 2, kind: input, shape index: {}]
  %s3 = inlined_call_operand.vmem [shape: f32[32,64], index: 3, kind: input, shape index: {}]
  %s4 = inlined_call_operand.vmem [shape: f32[32,64], index: 4, kind: input, shape index: {}]
  %s5 = inlined_call_operand.vmem [shape: f32[32,64], index: 5, kind: input, shape index: {}]
  %s6 = inlined_call_operand.vmem [shape: f32[32,64], index: 6, kind: input, shape index: {}]
  %s7 = inlined_call_operand.vmem [shape: f32[32,64], index: 7, kind: input, shape index: {}]
  %s8 = inlined_call_operand.vmem [shape: f32[32,64], index: 8, kind: input, shape index: {}]
  %s9 = inlined_call_operand.vmem [shape: f32[32,64], index: 9, kind: output, shape index: {}]
  %s10 = sld [smem:[#allocation0]]
  $region46: #{resnet_forward.50} parent=0
    _
  %s12 = ssub.s32 1, %s10
  %s13 = scalar_select 0, %s12, %s10
  // Predicated region
  $region2: #{resnet_forward.50} parent=0 // pred_check
    _
  $region3: #{resnet_forward.50} parent=0 // pred_check_branch
    %15 = sbr.rel (0) target = $region5
  $region4: #{resnet_forward.50} parent=0 // pred_region
    _
  $region5: #{resnet_forward.50} parent=0 // pred_fallthru
    _
  // Predicated region
  $region6: #{resnet_forward.50} parent=0 // pred_check
    _
  $region7: #{resnet_forward.50} parent=0 // pred_check_branch
    %17 = sbr.rel (0) target = $region9
  $region8: #{resnet_forward.50} parent=0 // pred_region
    _
  $region9: #{resnet_forward.50} parent=0 // pred_fallthru
    _
  // Predicated region
  $region10: #{resnet_forward.50} parent=0 // pred_check
    _
  $region11: #{resnet_forward.50} parent=0 // pred_check_branch
    %19 = sbr.rel (0) target = $region13
  $region12: #{resnet_forward.50} parent=0 // pred_region
    _
  $region13: #{resnet_forward.50} parent=0 // pred_fallthru
    _
  // Predicated region
  $region14: #{resnet_forward.50} parent=0 // pred_check
    _
  $region15: #{resnet_forward.50} parent=0 // pred_check_branch
    %21 = sbr.rel (0) target = $region17
  $region16: #{resnet_forward.50} parent=0 // pred_region
    _
  $region17: #{resnet_forward.50} parent=0 // pred_fallthru
    _
  // Predicated region
  $region18: #{resnet_forward.50} parent=0 // pred_check
    _
  $region19: #{resnet_forward.50} parent=0 // pred_check_branch
    %23 = sbr.rel (0) target = $region21
  $region20: #{resnet_forward.50} parent=0 // pred_region
    _
  $region21: #{resnet_forward.50} parent=0 // pred_fallthru
    _
  // Predicated region
  $region22: #{resnet_forward.50} parent=0 // pred_check
    _
  $region23: #{resnet_forward.50} parent=0 // pred_check_branch
    %25 = sbr.rel (0) target = $region25
  $region24: #{resnet_forward.50} parent=0 // pred_region
    _
  $region25: #{resnet_forward.50} parent=0 // pred_fallthru
    _
  // Predicated region
  $region26: #{resnet_forward.50} parent=0 // pred_check
    _
  $region27: #{resnet_forward.50} parent=0 // pred_check_branch
    %27 = sbr.rel (0) target = $region29
  $region28: #{resnet_forward.50} parent=0 // pred_region
    _
  $region29: #{resnet_forward.50} parent=0 // pred_fallthru
    _
  // Predicated region
  $region30: #{resnet_forward.50} parent=0 // pred_check
    _
  $region31: #{resnet_forward.50} parent=0 // pred_check_branch
    %29 = sbr.rel (0) target = $region33
  $region32: #{resnet_forward.50} parent=0 // pred_region
    _
  $region33: #{resnet_forward.50} parent=0 // pred_fallthru
    _
  // Predicated region
  $region34: #{resnet_forward.50} parent=0 // pred_check
    _
  $region35: #{resnet_forward.50} parent=0 // pred_check_branch
    %31 = sbr.rel (0) target = $region37
  $region36: #{resnet_forward.50} parent=0 // pred_region
    _
  $region37: #{resnet_forward.50} parent=0 // pred_fallthru
    _
  %v32 = vld [vmem:[%s0] sm:$0xff]
  %v33 = vld [vmem:[%s0 + $0x8] sm:$0xff]
  %v34 = vld [vmem:[%s0 + $0x10] sm:$0xff]
  %v35 = vld [vmem:[%s0 + $0x18] sm:$0xff]
  %v36 = vld [vmem:[%s1] sm:$0xff]
  %v37 = vld [vmem:[%s1 + $0x8] sm:$0xff]
  %v38 = vld [vmem:[%s1 + $0x10] sm:$0xff]
  %v39 = vld [vmem:[%s1 + $0x18] sm:$0xff]
  %v40 = vmax.f32 %v32, %v36
  %v41 = vmax.f32 %v33, %v37
  %v42 = vmax.f32 %v34, %v38
  %v43 = vmax.f32 %v35, %v39
  %v44 = vld [vmem:[%s2] sm:$0xff]
  %v45 = vld [vmem:[%s2 + $0x8] sm:$0xff]
  %v46 = vld [vmem:[%s2 + $0x10] sm:$0xff]
  %v47 = vld [vmem:[%s2 + $0x18] sm:$0xff]
  %v48 = vmax.f32 %v40, %v44
  %v49 = vmax.f32 %v41, %v45
  %v50 = vmax.f32 %v42, %v46
  %v51 = vmax.f32 %v43, %v47
  %v52 = vld [vmem:[%s3] sm:$0xff]
  %v53 = vld [vmem:[%s3 + $0x8] sm:$0xff]
  %v54 = vld [vmem:[%s3 + $0x10] sm:$0xff]
  %v55 = vld [vmem:[%s3 + $0x18] sm:$0xff]
  %v56 = vmax.f32 %v48, %v52
  %v57 = vmax.f32 %v49, %v53
  %v58 = vmax.f32 %v50, %v54
  %v59 = vmax.f32 %v51, %v55
  %v60 = vld [vmem:[%s4] sm:$0xff]
  %v61 = vld [vmem:[%s4 + $0x8] sm:$0xff]
  %v62 = vld [vmem:[%s4 + $0x10] sm:$0xff]
  %v63 = vld [vmem:[%s4 + $0x18] sm:$0xff]
  %v64 = vmax.f32 %v56, %v60
  %v65 = vmax.f32 %v57, %v61
  %v66 = vmax.f32 %v58, %v62
  %v67 = vmax.f32 %v59, %v63
  %v68 = vld [vmem:[%s5] sm:$0xff]
  %v69 = vld [vmem:[%s5 + $0x8] sm:$0xff]
  %v70 = vld [vmem:[%s5 + $0x10] sm:$0xff]
  %v71 = vld [vmem:[%s5 + $0x18] sm:$0xff]
  %v72 = vmax.f32 %v64, %v68
  %v73 = vmax.f32 %v65, %v69
  %v74 = vmax.f32 %v66, %v70
  %v75 = vmax.f32 %v67, %v71
  %v76 = vld [vmem:[%s6] sm:$0xff]
  %v77 = vld [vmem:[%s6 + $0x8] sm:$0xff]
  %v78 = vld [vmem:[%s6 + $0x10] sm:$0xff]
  %v79 = vld [vmem:[%s6 + $0x18] sm:$0xff]
  %v80 = vmax.f32 %v72, %v76
  %v81 = vmax.f32 %v73, %v77
  %v82 = vmax.f32 %v74, %v78
  %v83 = vmax.f32 %v75, %v79
  %v84 = vld [vmem:[%s7] sm:$0xff]
  %v85 = vld [vmem:[%s7 + $0x8] sm:$0xff]
  %v86 = vld [vmem:[%s7 + $0x10] sm:$0xff]
  %v87 = vld [vmem:[%s7 + $0x18] sm:$0xff]
  %v88 = vmax.f32 %v80, %v84
  %v89 = vmax.f32 %v81, %v85
  %v90 = vmax.f32 %v82, %v86
  %v91 = vmax.f32 %v83, %v87
  %v92 = vld [vmem:[%s8] sm:$0xff]
  %v93 = vld [vmem:[%s8 + $0x8] sm:$0xff]
  %v94 = vld [vmem:[%s8 + $0x10] sm:$0xff]
  %v95 = vld [vmem:[%s8 + $0x18] sm:$0xff]
  %v96 = vmax.f32 %v88, %v92
  %v97 = vmax.f32 %v89, %v93
  %v98 = vmax.f32 %v90, %v94
  %v99 = vmax.f32 %v91, %v95
  %vm100 = vcmask 523264
  %101 = vst.msk [vmem:[%s9] sm:$0xff] %vm100, %v96
  %102 = vst.msk [vmem:[%s9 + $0x8] sm:$0xff] %vm100, %v97
  %103 = vst.msk [vmem:[%s9 + $0x10] sm:$0xff] %vm100, %v98
  %104 = vst.msk [vmem:[%s9 + $0x18] sm:$0xff] %vm100, %v99
  // Predicated region
  $region38: #{resnet_forward.50} parent=0 // pred_check
    _
  $region39: #{resnet_forward.50} parent=0 // pred_check_branch
    %106 = sbr.rel (0) target = $region41
  $region40: #{resnet_forward.50} parent=0 // pred_region
    _
  $region41: #{resnet_forward.50} parent=0 // pred_fallthru
    _
  // Predicated region
  $region42: #{resnet_forward.50} parent=0 // pred_check
    _
  $region43: #{resnet_forward.50} parent=0 // pred_check_branch
    %108 = sbr.rel (0) target = $region45
  $region44: #{resnet_forward.50} parent=0 // pred_region
    _
  $region45: #{resnet_forward.50} parent=0 // pred_fallthru
    _

// kernel: resnet_forward.51
$region0: #{resnet_forward.51}
  #allocation0 [shape = 'u32[]', space=smem, size = 0x4, offset = 0x4, fixed_abs, tag = 'smem constant byte address 0x4 - core index']
  #allocation1 [shape = 'u32[72,128]{1,0:T(1,128)}', space=vmem, size = 0x9000, scoped, tag = 'internal scratch']
  %s0 = inlined_call_operand.vmem [shape: f32[32,64], index: 0, kind: input, shape index: {}]
  %s1 = inlined_call_operand.vmem [shape: f32[1,64], index: 1, kind: input, shape index: {}]
  %s2 = inlined_call_operand.vmem [shape: f32[1,64], index: 2, kind: input, shape index: {}]
  %s3 = inlined_call_operand.vmem [shape: f32[32,64], index: 3, kind: output, shape index: {}]
  %s4 = sld [smem:[#allocation0]]
  $region22: #{resnet_forward.51} parent=0
    _
  %s6 = ssub.s32 1, %s4
  %s7 = scalar_select 0, %s6, %s4
  // Predicated region
  $region2: #{resnet_forward.51} parent=0 // pred_check
    _
  $region3: #{resnet_forward.51} parent=0 // pred_check_branch
    %9 = sbr.rel (0) target = $region5
  $region4: #{resnet_forward.51} parent=0 // pred_region
    _
  $region5: #{resnet_forward.51} parent=0 // pred_fallthru
    _
  // Predicated region
  $region6: #{resnet_forward.51} parent=0 // pred_check
    _
  $region7: #{resnet_forward.51} parent=0 // pred_check_branch
    %11 = sbr.rel (0) target = $region9
  $region8: #{resnet_forward.51} parent=0 // pred_region
    _
  $region9: #{resnet_forward.51} parent=0 // pred_fallthru
    _
  // Predicated region
  $region10: #{resnet_forward.51} parent=0 // pred_check
    _
  $region11: #{resnet_forward.51} parent=0 // pred_check_branch
    %13 = sbr.rel (0) target = $region13
  $region12: #{resnet_forward.51} parent=0 // pred_region
    _
  $region13: #{resnet_forward.51} parent=0 // pred_fallthru
    _
  %v14 = vld [vmem:[%s0] sm:$0xff]
  %v15 = vld [vmem:[%s0 + $0x8] sm:$0xff]
  %v16 = vld [vmem:[%s0 + $0x10] sm:$0xff]
  %v17 = vld [vmem:[%s0 + $0x18] sm:$0xff]
  %v18 = vld [vmem:[%s1] sm:$0x1]
  %v20 = vperm.slane %v18, 0
  %v22 = vmul.f32 %v14, %v20
  %v23 = vmul.f32 %v15, %v20
  %v24 = vmul.f32 %v16, %v20
  %v25 = vmul.f32 %v17, %v20
  %v26 = vld [vmem:[%s2] sm:$0x1]
  %v28 = vperm.slane %v26, 0
  %v30 = vadd.f32 %v22, %v28
  %v31 = vadd.f32 %v23, %v28
  %v32 = vadd.f32 %v24, %v28
  %v33 = vadd.f32 %v25, %v28
  %vm34 = vcmask 523264
  %35 = vst.msk [vmem:[%s3] sm:$0xff] %vm34, %v30
  %36 = vst.msk [vmem:[%s3 + $0x8] sm:$0xff] %vm34, %v31
  %37 = vst.msk [vmem:[%s3 + $0x10] sm:$0xff] %vm34, %v32
  %38 = vst.msk [vmem:[%s3 + $0x18] sm:$0xff] %vm34, %v33
  // Predicated region
  $region14: #{resnet_forward.51} parent=0 // pred_check
    _
  $region15: #{resnet_forward.51} parent=0 // pred_check_branch
    %40 = sbr.rel (0) target = $region17
  $region16: #{resnet_forward.51} parent=0 // pred_region
    _
  $region17: #{resnet_forward.51} parent=0 // pred_fallthru
    _
  // Predicated region
  $region18: #{resnet_forward.51} parent=0 // pred_check
    _
  $region19: #{resnet_forward.51} parent=0 // pred_check_branch
    %42 = sbr.rel (0) target = $region21
  $region20: #{resnet_forward.51} parent=0 // pred_region
    _
  $region21: #{resnet_forward.51} parent=0 // pred_fallthru
    _

// kernel: resnet_forward.54
$region0: #{resnet_forward.54}
  #allocation0 [shape = 'u32[]', space=smem, size = 0x4, offset = 0x4, fixed_abs, tag = 'smem constant byte address 0x4 - core index']
  #allocation1 [shape = 'u32[72,128]{1,0:T(1,128)}', space=vmem, size = 0x9000, scoped, tag = 'internal scratch']
  %s0 = inlined_call_operand.vmem [shape: f32[32,64], index: 0, kind: input, shape index: {}]
  %s1 = inlined_call_operand.vmem [shape: f32[1,64], index: 1, kind: input, shape index: {}]
  %s2 = inlined_call_operand.vmem [shape: f32[1,64], index: 2, kind: input, shape index: {}]
  %s3 = inlined_call_operand.vmem [shape: f32[32,64], index: 3, kind: output, shape index: {}]
  %s4 = sld [smem:[#allocation0]]
  $region22: #{resnet_forward.54} parent=0
    _
  %s6 = ssub.s32 1, %s4
  %s7 = scalar_select 0, %s6, %s4
  // Predicated region
  $region2: #{resnet_forward.54} parent=0 // pred_check
    _
  $region3: #{resnet_forward.54} parent=0 // pred_check_branch
    %9 = sbr.rel (0) target = $region5
  $region4: #{resnet_forward.54} parent=0 // pred_region
    _
  $region5: #{resnet_forward.54} parent=0 // pred_fallthru
    _
  // Predicated region
  $region6: #{resnet_forward.54} parent=0 // pred_check
    _
  $region7: #{resnet_forward.54} parent=0 // pred_check_branch
    %11 = sbr.rel (0) target = $region9
  $region8: #{resnet_forward.54} parent=0 // pred_region
    _
  $region9: #{resnet_forward.54} parent=0 // pred_fallthru
    _
  // Predicated region
  $region10: #{resnet_forward.54} parent=0 // pred_check
    _
  $region11: #{resnet_forward.54} parent=0 // pred_check_branch
    %13 = sbr.rel (0) target = $region13
  $region12: #{resnet_forward.54} parent=0 // pred_region
    _
  $region13: #{resnet_forward.54} parent=0 // pred_fallthru
    _
  %v14 = vld [vmem:[%s0] sm:$0xff]
  %v15 = vld [vmem:[%s0 + $0x8] sm:$0xff]
  %v16 = vld [vmem:[%s0 + $0x10] sm:$0xff]
  %v17 = vld [vmem:[%s0 + $0x18] sm:$0xff]
  %v18 = vld [vmem:[%s1] sm:$0x1]
  %v20 = vperm.slane %v18, 0
  %v22 = vmul.f32 %v14, %v20
  %v23 = vmul.f32 %v15, %v20
  %v24 = vmul.f32 %v16, %v20
  %v25 = vmul.f32 %v17, %v20
  %v26 = vld [vmem:[%s2] sm:$0x1]
  %v28 = vperm.slane %v26, 0
  %v30 = vadd.f32 %v22, %v28
  %v31 = vadd.f32 %v23, %v28
  %v32 = vadd.f32 %v24, %v28
  %v33 = vadd.f32 %v25, %v28
  %v34 = vmax.f32 %v30, 0.0
  %v35 = vmax.f32 %v31, 0.0
  %v36 = vmax.f32 %v32, 0.0
  %v37 = vmax.f32 %v33, 0.0
  %vm38 = vcmask 523264
  %39 = vst.msk [vmem:[%s3] sm:$0xff] %vm38, %v34
  %40 = vst.msk [vmem:[%s3 + $0x8] sm:$0xff] %vm38, %v35
  %41 = vst.msk [vmem:[%s3 + $0x10] sm:$0xff] %vm38, %v36
  %42 = vst.msk [vmem:[%s3 + $0x18] sm:$0xff] %vm38, %v37
  // Predicated region
  $region14: #{resnet_forward.54} parent=0 // pred_check
    _
  $region15: #{resnet_forward.54} parent=0 // pred_check_branch
    %44 = sbr.rel (0) target = $region17
  $region16: #{resnet_forward.54} parent=0 // pred_region
    _
  $region17: #{resnet_forward.54} parent=0 // pred_fallthru
    _
  // Predicated region
  $region18: #{resnet_forward.54} parent=0 // pred_check
    _
  $region19: #{resnet_forward.54} parent=0 // pred_check_branch
    %46 = sbr.rel (0) target = $region21
  $region20: #{resnet_forward.54} parent=0 // pred_region
    _
  $region21: #{resnet_forward.54} parent=0 // pred_fallthru
    _

// kernel: resnet_forward.57
$region0: #{resnet_forward.57}
  #allocation0 [shape = 'u32[]', space=smem, size = 0x4, offset = 0x4, fixed_abs, tag = 'smem constant byte address 0x4 - core index']
  #allocation1 [shape = 'u32[72,128]{1,0:T(1,128)}', space=vmem, size = 0x9000, scoped, tag = 'internal scratch']
  %s0 = inlined_call_operand.vmem [shape: f32[32,8], index: 0, kind: input, shape index: {}]
  %s1 = inlined_call_operand.vmem [shape: f32[1,8], index: 1, kind: input, shape index: {}]
  %s2 = inlined_call_operand.vmem [shape: f32[1,8], index: 2, kind: input, shape index: {}]
  %s3 = inlined_call_operand.vmem [shape: f32[32,8], index: 3, kind: output, shape index: {}]
  %s4 = sld [smem:[#allocation0]]
  $region22: #{resnet_forward.57} parent=0
    _
  %s6 = ssub.s32 1, %s4
  %s7 = scalar_select 0, %s6, %s4
  // Predicated region
  $region2: #{resnet_forward.57} parent=0 // pred_check
    _
  $region3: #{resnet_forward.57} parent=0 // pred_check_branch
    %9 = sbr.rel (0) target = $region5
  $region4: #{resnet_forward.57} parent=0 // pred_region
    _
  $region5: #{resnet_forward.57} parent=0 // pred_fallthru
    _
  // Predicated region
  $region6: #{resnet_forward.57} parent=0 // pred_check
    _
  $region7: #{resnet_forward.57} parent=0 // pred_check_branch
    %11 = sbr.rel (0) target = $region9
  $region8: #{resnet_forward.57} parent=0 // pred_region
    _
  $region9: #{resnet_forward.57} parent=0 // pred_fallthru
    _
  // Predicated region
  $region10: #{resnet_forward.57} parent=0 // pred_check
    _
  $region11: #{resnet_forward.57} parent=0 // pred_check_branch
    %13 = sbr.rel (0) target = $region13
  $region12: #{resnet_forward.57} parent=0 // pred_region
    _
  $region13: #{resnet_forward.57} parent=0 // pred_fallthru
    _
  %v14 = vld [vmem:[%s0] sm:$0xff]
  %v15 = vld [vmem:[%s0 + $0x8] sm:$0xff]
  %v16 = vld [vmem:[%s0 + $0x10] sm:$0xff]
  %v17 = vld [vmem:[%s0 + $0x18] sm:$0xff]
  %v18 = vld [vmem:[%s1] sm:$0x1]
  %v20 = vperm.slane %v18, 0
  %v22 = vmul.f32 %v14, %v20
  %v23 = vmul.f32 %v15, %v20
  %v24 = vmul.f32 %v16, %v20
  %v25 = vmul.f32 %v17, %v20
  %v26 = vld [vmem:[%s2] sm:$0x1]
  %v28 = vperm.slane %v26, 0
  %v30 = vadd.f32 %v22, %v28
  %v31 = vadd.f32 %v23, %v28
  %v32 = vadd.f32 %v24, %v28
  %v33 = vadd.f32 %v25, %v28
  %v34 = vmax.f32 %v30, 0.0
  %v35 = vmax.f32 %v31, 0.0
  %v36 = vmax.f32 %v32, 0.0
  %v37 = vmax.f32 %v33, 0.0
  %vm38 = vcmask 64512
  %39 = vst.msk [vmem:[%s3] sm:$0xff] %vm38, %v34
  %40 = vst.msk [vmem:[%s3 + $0x8] sm:$0xff] %vm38, %v35
  %41 = vst.msk [vmem:[%s3 + $0x10] sm:$0xff] %vm38, %v36
  %42 = vst.msk [vmem:[%s3 + $0x18] sm:$0xff] %vm38, %v37
  // Predicated region
  $region14: #{resnet_forward.57} parent=0 // pred_check
    _
  $region15: #{resnet_forward.57} parent=0 // pred_check_branch
    %44 = sbr.rel (0) target = $region17
  $region16: #{resnet_forward.57} parent=0 // pred_region
    _
  $region17: #{resnet_forward.57} parent=0 // pred_fallthru
    _
  // Predicated region
  $region18: #{resnet_forward.57} parent=0 // pred_check
    _
  $region19: #{resnet_forward.57} parent=0 // pred_check_branch
    %46 = sbr.rel (0) target = $region21
  $region20: #{resnet_forward.57} parent=0 // pred_region
    _
  $region21: #{resnet_forward.57} parent=0 // pred_fallthru
    _

// kernel: resnet_forward.52
$region0: #{resnet_forward.52}
  #allocation0 [shape = 'u32[]', space=smem, size = 0x4, offset = 0x4, fixed_abs, tag = 'smem constant byte address 0x4 - core index']
  #allocation1 [shape = 'u32[72,128]{1,0:T(1,128)}', space=vmem, size = 0x9000, scoped, tag = 'internal scratch']
  #allocation2 [shape = 'f32[128,128]{1,0:T(8,128)}', space=vmem, size = 0x10000, scoped, tag = 'scratch operand']
  %s0 = inlined_call_operand.vmem [shape: bf16[128,128], index: 0, kind: input, shape index: {}]
  %s1 = inlined_call_operand.vmem [shape: bf16[128,128], index: 1, kind: input, shape index: {}]
  %s2 = inlined_call_operand.vmem [shape: f32[1,128], index: 2, kind: input, shape index: {}]
  %s3 = inlined_call_operand.vmem [shape: f32[128,128], index: 3, kind: output, shape index: {}]
  %s4 = sld [smem:[#allocation0]]
  $region30: #{resnet_forward.52} parent=0
    _
  %s6 = ssub.s32 1, %s4
  %s7 = scalar_select 0, %s6, %s4
  // Predicated region
  $region2: #{resnet_forward.52} parent=0 // pred_check
    _
  $region3: #{resnet_forward.52} parent=0 // pred_check_branch
    %9 = sbr.rel (0) target = $region5
  $region4: #{resnet_forward.52} parent=0 // pred_region
    _
  $region5: #{resnet_forward.52} parent=0 // pred_fallthru
    _
  // Predicated region
  $region6: #{resnet_forward.52} parent=0 // pred_check
    _
  $region7: #{resnet_forward.52} parent=0 // pred_check_branch
    %11 = sbr.rel (0) target = $region9
  $region8: #{resnet_forward.52} parent=0 // pred_region
    _
  $region9: #{resnet_forward.52} parent=0 // pred_fallthru
    _
  // Predicated region
  $region10: #{resnet_forward.52} parent=0 // pred_check
    _
  $region11: #{resnet_forward.52} parent=0 // pred_check_branch
    %13 = sbr.rel (0) target = $region13
  $region12: #{resnet_forward.52} parent=0 // pred_region
    _
  $region13: #{resnet_forward.52} parent=0 // pred_fallthru
    _
  %p14 = scmp.eq.s32.totalorder 0, 0
  // Predicated region
  $region14: #{resnet_forward.52} parent=0 // pred_check
    %p15 = pneg %p14
  $region15: #{resnet_forward.52} parent=0 // pred_check_branch
    %17 = sbr.rel (%p15) target = $region17
  $region16: #{resnet_forward.52} parent=0 // pred_region
    %18 = vst [vmem:[#allocation2] sm:$0xff] 0.0
    %19 = vst [vmem:[#allocation2 + $0x8] sm:$0xff] 0.0
    %20 = vst [vmem:[#allocation2 + $0x10] sm:$0xff] 0.0
    %21 = vst [vmem:[#allocation2 + $0x18] sm:$0xff] 0.0
    %22 = vst [vmem:[#allocation2 + $0x20] sm:$0xff] 0.0
    %23 = vst [vmem:[#allocation2 + $0x28] sm:$0xff] 0.0
    %24 = vst [vmem:[#allocation2 + $0x30] sm:$0xff] 0.0
    %25 = vst [vmem:[#allocation2 + $0x38] sm:$0xff] 0.0
    %26 = vst [vmem:[#allocation2 + $0x40] sm:$0xff] 0.0
    %27 = vst [vmem:[#allocation2 + $0x48] sm:$0xff] 0.0
    %28 = vst [vmem:[#allocation2 + $0x50] sm:$0xff] 0.0
    %29 = vst [vmem:[#allocation2 + $0x58] sm:$0xff] 0.0
    %30 = vst [vmem:[#allocation2 + $0x60] sm:$0xff] 0.0
    %31 = vst [vmem:[#allocation2 + $0x68] sm:$0xff] 0.0
    %32 = vst [vmem:[#allocation2 + $0x70] sm:$0xff] 0.0
    %33 = vst [vmem:[#allocation2 + $0x78] sm:$0xff] 0.0
  $region17: #{resnet_forward.52} parent=0 // pred_fallthru
    _
  %v34 = vld [vmem:[#allocation2] sm:$0xff]
  %v35 = vld [vmem:[#allocation2 + $0x8] sm:$0xff]
  %v36 = vld [vmem:[#allocation2 + $0x10] sm:$0xff]
  %v37 = vld [vmem:[#allocation2 + $0x18] sm:$0xff]
  %v38 = vld [vmem:[#allocation2 + $0x20] sm:$0xff]
  %v39 = vld [vmem:[#allocation2 + $0x28] sm:$0xff]
  %v40 = vld [vmem:[#allocation2 + $0x30] sm:$0xff]
  %v41 = vld [vmem:[#allocation2 + $0x38] sm:$0xff]
  %v42 = vld [vmem:[#allocation2 + $0x40] sm:$0xff]
  %v43 = vld [vmem:[#allocation2 + $0x48] sm:$0xff]
  %v44 = vld [vmem:[#allocation2 + $0x50] sm:$0xff]
  %v45 = vld [vmem:[#allocation2 + $0x58] sm:$0xff]
  %v46 = vld [vmem:[#allocation2 + $0x60] sm:$0xff]
  %v47 = vld [vmem:[#allocation2 + $0x68] sm:$0xff]
  %v48 = vld [vmem:[#allocation2 + $0x70] sm:$0xff]
  %v49 = vld [vmem:[#allocation2 + $0x78] sm:$0xff]
  %v50 = vld [vmem:[%s0] sm:$0xf]
  %v51 = vld [vmem:[%s0 + $0x4] sm:$0xf]
  %v52 = vld [vmem:[%s0 + $0x8] sm:$0xf]
  %v53 = vld [vmem:[%s0 + $0xc] sm:$0xf]
  %v54 = vld [vmem:[%s0 + $0x10] sm:$0xf]
  %v55 = vld [vmem:[%s0 + $0x14] sm:$0xf]
  %v56 = vld [vmem:[%s0 + $0x18] sm:$0xf]
  %v57 = vld [vmem:[%s0 + $0x1c] sm:$0xf]
  %v58 = vld [vmem:[%s0 + $0x20] sm:$0xf]
  %v59 = vld [vmem:[%s0 + $0x24] sm:$0xf]
  %v60 = vld [vmem:[%s0 + $0x28] sm:$0xf]
  %v61 = vld [vmem:[%s0 + $0x2c] sm:$0xf]
  %v62 = vld [vmem:[%s0 + $0x30] sm:$0xf]
  %v63 = vld [vmem:[%s0 + $0x34] sm:$0xf]
  %v64 = vld [vmem:[%s0 + $0x38] sm:$0xf]
  %v65 = vld [vmem:[%s0 + $0x3c] sm:$0xf]
  %v66 = vld [vmem:[%s1] sm:$0xf]
  %v67 = vld [vmem:[%s1 + $0x4] sm:$0xf]
  %v68 = vld [vmem:[%s1 + $0x8] sm:$0xf]
  %v69 = vld [vmem:[%s1 + $0xc] sm:$0xf]
  %v70 = vld [vmem:[%s1 + $0x10] sm:$0xf]
  %v71 = vld [vmem:[%s1 + $0x14] sm:$0xf]
  %v72 = vld [vmem:[%s1 + $0x18] sm:$0xf]
  %v73 = vld [vmem:[%s1 + $0x1c] sm:$0xf]
  %v74 = vld [vmem:[%s1 + $0x20] sm:$0xf]
  %v75 = vld [vmem:[%s1 + $0x24] sm:$0xf]
  %v76 = vld [vmem:[%s1 + $0x28] sm:$0xf]
  %v77 = vld [vmem:[%s1 + $0x2c] sm:$0xf]
  %v78 = vld [vmem:[%s1 + $0x30] sm:$0xf]
  %v79 = vld [vmem:[%s1 + $0x34] sm:$0xf]
  %v80 = vld [vmem:[%s1 + $0x38] sm:$0xf]
  %v81 = vld [vmem:[%s1 + $0x3c] sm:$0xf]
  %v98 = vunpack.c.l.b16 %v50
  %v99 = vunpack.c.l.b16 %v51
  %v100 = vunpack.c.l.b16 %v52
  %v101 = vunpack.c.l.b16 %v53
  %v102 = vunpack.c.l.b16 %v54
  %v103 = vunpack.c.l.b16 %v55
  %v104 = vunpack.c.l.b16 %v56
  %v105 = vunpack.c.l.b16 %v57
  %v106 = vunpack.c.l.b16 %v58
  %v107 = vunpack.c.l.b16 %v59
  %v108 = vunpack.c.l.b16 %v60
  %v109 = vunpack.c.l.b16 %v61
  %v110 = vunpack.c.l.b16 %v62
  %v111 = vunpack.c.l.b16 %v63
  %v112 = vunpack.c.l.b16 %v64
  %v113 = vunpack.c.l.b16 %v65
  %v114 = vpack.c.b16 %v99, %v98
  %v115 = vpack.c.b16 %v101, %v100
  %v116 = vpack.c.b16 %v103, %v102
  %v117 = vpack.c.b16 %v105, %v104
  %v118 = vpack.c.b16 %v107, %v106
  %v119 = vpack.c.b16 %v109, %v108
  %v120 = vpack.c.b16 %v111, %v110
  %v121 = vpack.c.b16 %v113, %v112
  %v146 = vunpack.c.l.b16 %v66
  %v147 = vunpack.c.l.b16 %v67
  %v148 = vunpack.c.l.b16 %v68
  %v149 = vunpack.c.l.b16 %v69
  %v150 = vunpack.c.l.b16 %v70
  %v151 = vunpack.c.l.b16 %v71
  %v152 = vunpack.c.l.b16 %v72
  %v153 = vunpack.c.l.b16 %v73
  %v154 = vunpack.c.l.b16 %v74
  %v155 = vunpack.c.l.b16 %v75
  %v156 = vunpack.c.l.b16 %v76
  %v157 = vunpack.c.l.b16 %v77
  %v158 = vunpack.c.l.b16 %v78
  %v159 = vunpack.c.l.b16 %v79
  %v160 = vunpack.c.l.b16 %v80
  %v161 = vunpack.c.l.b16 %v81
  %v162 = vpack.c.b16 %v147, %v146
  %v163 = vpack.c.b16 %v149, %v148
  %v164 = vpack.c.b16 %v151, %v150
  %v165 = vpack.c.b16 %v153, %v152
  %v166 = vpack.c.b16 %v155, %v154
  %v167 = vpack.c.b16 %v157, %v156
  %v168 = vpack.c.b16 %v159, %v158
  %v169 = vpack.c.b16 %v161, %v160
  %178 = vmatpush.bf16.msra.mxu0 %v169
  %179 = vmatpush.bf16.msra.mxu0 %v168
  %180 = vmatpush.bf16.msra.mxu0 %v167
  %181 = vmatpush.bf16.msra.mxu0 %v166
  %182 = vmatpush.bf16.msra.mxu0 %v165
  %183 = vmatpush.bf16.msra.mxu0 %v164
  %184 = vmatpush.bf16.msra.mxu0 %v163
  %185 = vmatpush.bf16.msra.mxu0 %v162
  %186 = vmatmul.bf16.gmra.mxu0 %v114
  %v187 = vpop.f32.mrf.mxu0
  %v188 = vadd.f32 0.0, %v187
  %v189 = vpop.f32.mrf.mxu0
  %v190 = vadd.f32 0.0, %v189
  %191 = vmatmul.bf16.gmra.mxu0 %v115
  %v192 = vpop.f32.mrf.mxu0
  %v193 = vadd.f32 0.0, %v192
  %v194 = vpop.f32.mrf.mxu0
  %v195 = vadd.f32 0.0, %v194
  %196 = vmatmul.bf16.gmra.mxu0 %v116
  %v197 = vpop.f32.mrf.mxu0
  %v198 = vadd.f32 0.0, %v197
  %v199 = vpop.f32.mrf.mxu0
  %v200 = vadd.f32 0.0, %v199
  %201 = vmatmul.bf16.gmra.mxu0 %v117
  %v202 = vpop.f32.mrf.mxu0
  %v203 = vadd.f32 0.0, %v202
  %v204 = vpop.f32.mrf.mxu0
  %v205 = vadd.f32 0.0, %v204
  %206 = vmatmul.bf16.gmra.mxu0 %v118
  %v207 = vpop.f32.mrf.mxu0
  %v208 = vadd.f32 0.0, %v207
  %v209 = vpop.f32.mrf.mxu0
  %v210 = vadd.f32 0.0, %v209
  %211 = vmatmul.bf16.gmra.mxu0 %v119
  %v212 = vpop.f32.mrf.mxu0
  %v213 = vadd.f32 0.0, %v212
  %v214 = vpop.f32.mrf.mxu0
  %v215 = vadd.f32 0.0, %v214
  %216 = vmatmul.bf16.gmra.mxu0 %v120
  %v217 = vpop.f32.mrf.mxu0
  %v218 = vadd.f32 0.0, %v217
  %v219 = vpop.f32.mrf.mxu0
  %v220 = vadd.f32 0.0, %v219
  %221 = vmatmul.bf16.gmra.mxu0 %v121
  %v222 = vpop.f32.mrf.mxu0
  %v223 = vadd.f32 0.0, %v222
  %v224 = vpop.f32.mrf.mxu0
  %v225 = vadd.f32 0.0, %v224
  %226 = vdwg.mxu0
  %v227 = vadd.f32 %v34, %v188
  %v228 = vadd.f32 %v35, %v190
  %v229 = vadd.f32 %v36, %v193
  %v230 = vadd.f32 %v37, %v195
  %v231 = vadd.f32 %v38, %v198
  %v232 = vadd.f32 %v39, %v200
  %v233 = vadd.f32 %v40, %v203
  %v234 = vadd.f32 %v41, %v205
  %v235 = vadd.f32 %v42, %v208
  %v236 = vadd.f32 %v43, %v210
  %v237 = vadd.f32 %v44, %v213
  %v238 = vadd.f32 %v45, %v215
  %v239 = vadd.f32 %v46, %v218
  %v240 = vadd.f32 %v47, %v220
  %v241 = vadd.f32 %v48, %v223
  %v242 = vadd.f32 %v49, %v225
  %243 = vst [vmem:[#allocation2] sm:$0xff] %v227
  %244 = vst [vmem:[#allocation2 + $0x8] sm:$0xff] %v228
  %245 = vst [vmem:[#allocation2 + $0x10] sm:$0xff] %v229
  %246 = vst [vmem:[#allocation2 + $0x18] sm:$0xff] %v230
  %247 = vst [vmem:[#allocation2 + $0x20] sm:$0xff] %v231
  %248 = vst [vmem:[#allocation2 + $0x28] sm:$0xff] %v232
  %249 = vst [vmem:[#allocation2 + $0x30] sm:$0xff] %v233
  %250 = vst [vmem:[#allocation2 + $0x38] sm:$0xff] %v234
  %251 = vst [vmem:[#allocation2 + $0x40] sm:$0xff] %v235
  %252 = vst [vmem:[#allocation2 + $0x48] sm:$0xff] %v236
  %253 = vst [vmem:[#allocation2 + $0x50] sm:$0xff] %v237
  %254 = vst [vmem:[#allocation2 + $0x58] sm:$0xff] %v238
  %255 = vst [vmem:[#allocation2 + $0x60] sm:$0xff] %v239
  %256 = vst [vmem:[#allocation2 + $0x68] sm:$0xff] %v240
  %257 = vst [vmem:[#allocation2 + $0x70] sm:$0xff] %v241
  %258 = vst [vmem:[#allocation2 + $0x78] sm:$0xff] %v242
  // Predicated region
  $region18: #{resnet_forward.52} parent=0 // pred_check
    %p259 = pneg %p14
  $region19: #{resnet_forward.52} parent=0 // pred_check_branch
    %261 = sbr.rel (%p259) target = $region21
  $region20: #{resnet_forward.52} parent=0 // pred_region
    %v262 = vld [vmem:[#allocation2] sm:$0xff]
    %v263 = vld [vmem:[#allocation2 + $0x8] sm:$0xff]
    %v264 = vld [vmem:[#allocation2 + $0x10] sm:$0xff]
    %v265 = vld [vmem:[#allocation2 + $0x18] sm:$0xff]
    %v266 = vld [vmem:[#allocation2 + $0x20] sm:$0xff]
    %v267 = vld [vmem:[#allocation2 + $0x28] sm:$0xff]
    %v268 = vld [vmem:[#allocation2 + $0x30] sm:$0xff]
    %v269 = vld [vmem:[#allocation2 + $0x38] sm:$0xff]
    %v270 = vld [vmem:[#allocation2 + $0x40] sm:$0xff]
    %v271 = vld [vmem:[#allocation2 + $0x48] sm:$0xff]
    %v272 = vld [vmem:[#allocation2 + $0x50] sm:$0xff]
    %v273 = vld [vmem:[#allocation2 + $0x58] sm:$0xff]
    %v274 = vld [vmem:[#allocation2 + $0x60] sm:$0xff]
    %v275 = vld [vmem:[#allocation2 + $0x68] sm:$0xff]
    %v276 = vld [vmem:[#allocation2 + $0x70] sm:$0xff]
    %v277 = vld [vmem:[#allocation2 + $0x78] sm:$0xff]
    %v278 = vld [vmem:[%s2] sm:$0x1]
    %v280 = vperm.slane %v278, 0
    %v282 = vadd.f32 %v262, %v280
    %v283 = vadd.f32 %v263, %v280
    %v284 = vadd.f32 %v264, %v280
    %v285 = vadd.f32 %v265, %v280
    %v286 = vadd.f32 %v266, %v280
    %v287 = vadd.f32 %v267, %v280
    %v288 = vadd.f32 %v268, %v280
    %v289 = vadd.f32 %v269, %v280
    %v290 = vadd.f32 %v270, %v280
    %v291 = vadd.f32 %v271, %v280
    %v292 = vadd.f32 %v272, %v280
    %v293 = vadd.f32 %v273, %v280
    %v294 = vadd.f32 %v274, %v280
    %v295 = vadd.f32 %v275, %v280
    %v296 = vadd.f32 %v276, %v280
    %v297 = vadd.f32 %v277, %v280
    %298 = vst [vmem:[%s3] sm:$0xff] %v282
    %299 = vst [vmem:[%s3 + $0x8] sm:$0xff] %v283
    %300 = vst [vmem:[%s3 + $0x10] sm:$0xff] %v284
    %301 = vst [vmem:[%s3 + $0x18] sm:$0xff] %v285
    %302 = vst [vmem:[%s3 + $0x20] sm:$0xff] %v286
    %303 = vst [vmem:[%s3 + $0x28] sm:$0xff] %v287
    %304 = vst [vmem:[%s3 + $0x30] sm:$0xff] %v288
    %305 = vst [vmem:[%s3 + $0x38] sm:$0xff] %v289
    %306 = vst [vmem:[%s3 + $0x40] sm:$0xff] %v290
    %307 = vst [vmem:[%s3 + $0x48] sm:$0xff] %v291
    %308 = vst [vmem:[%s3 + $0x50] sm:$0xff] %v292
    %309 = vst [vmem:[%s3 + $0x58] sm:$0xff] %v293
    %310 = vst [vmem:[%s3 + $0x60] sm:$0xff] %v294
    %311 = vst [vmem:[%s3 + $0x68] sm:$0xff] %v295
    %312 = vst [vmem:[%s3 + $0x70] sm:$0xff] %v296
    %313 = vst [vmem:[%s3 + $0x78] sm:$0xff] %v297
  $region21: #{resnet_forward.52} parent=0 // pred_fallthru
    _
  // Predicated region
  $region22: #{resnet_forward.52} parent=0 // pred_check
    _
  $region23: #{resnet_forward.52} parent=0 // pred_check_branch
    %315 = sbr.rel (0) target = $region25
  $region24: #{resnet_forward.52} parent=0 // pred_region
    _
  $region25: #{resnet_forward.52} parent=0 // pred_fallthru
    _
  // Predicated region
  $region26: #{resnet_forward.52} parent=0 // pred_check
    _
  $region27: #{resnet_forward.52} parent=0 // pred_check_branch
    %317 = sbr.rel (0) target = $region29
  $region28: #{resnet_forward.52} parent=0 // pred_region
    _
  $region29: #{resnet_forward.52} parent=0 // pred_fallthru
    _

// kernel: resnet_forward.56
$region0: #{resnet_forward.56}
  #allocation0 [shape = 'u32[]', space=smem, size = 0x4, offset = 0x4, fixed_abs, tag = 'smem constant byte address 0x4 - core index']
  #allocation1 [shape = 'u32[72,128]{1,0:T(1,128)}', space=vmem, size = 0x9000, scoped, tag = 'internal scratch']
  %s0 = inlined_call_operand.vmem [shape: f32[32,8], index: 0, kind: input, shape index: {}]
  %s1 = inlined_call_operand.vmem [shape: f32[1,8], index: 1, kind: output, shape index: {0}]
  %s2 = inlined_call_operand.vmem [shape: f32[1,8], index: 2, kind: output, shape index: {1}]
  %3 = xla_tuple %s1, %s2
  %s4 = sld [smem:[#allocation0]]
  $region26: #{resnet_forward.56} parent=0
    _
  %s6 = ssub.s32 1, %s4
  %s7 = scalar_select 0, %s6, %s4
  // Predicated region
  $region2: #{resnet_forward.56} parent=0 // pred_check
    _
  $region3: #{resnet_forward.56} parent=0 // pred_check_branch
    %9 = sbr.rel (0) target = $region5
  $region4: #{resnet_forward.56} parent=0 // pred_region
    _
  $region5: #{resnet_forward.56} parent=0 // pred_fallthru
    _
  %p10 = scmp.eq.s32.totalorder 0, 0
  // Predicated region
  $region6: #{resnet_forward.56} parent=0 // pred_check
    %p11 = pneg %p10
  $region7: #{resnet_forward.56} parent=0 // pred_check_branch
    %13 = sbr.rel (%p11) target = $region9
  $region8: #{resnet_forward.56} parent=0 // pred_region
    %vm14 = vcmask 57344
    %15 = vst.msk [vmem:[%s1] sm:$0x1] %vm14, 0.0
    %16 = vst.msk [vmem:[%s2] sm:$0x1] %vm14, 0.0
  $region9: #{resnet_forward.56} parent=0 // pred_fallthru
    _
  %v17 = vld [vmem:[%s0] sm:$0xff]
  %v18 = vld [vmem:[%s0 + $0x8] sm:$0xff]
  %v19 = vld [vmem:[%s0 + $0x10] sm:$0xff]
  %v20 = vld [vmem:[%s0 + $0x18] sm:$0xff]
  %v21 = vld [vmem:[%s1] sm:$0x1]
  %vm22 = vcmask 64512
  %v23 = vsel %vm22, %v17, 0.0
  %v24 = vsel %vm22, %v18, 0.0
  %v25 = vadd.f32 %v23, %v24
  %v26 = vsel %vm22, %v19, 0.0
  %v27 = vadd.f32 %v25, %v26
  %v28 = vsel %vm22, %v20, 0.0
  %v29 = vadd.f32 %v27, %v28
  %v30 = vrot.slane %v29, 4
  %v31 = vadd.f32 %v29, %v30
  %v32 = vrot.slane %v31, 2
  %v33 = vadd.f32 %v31, %v32
  %v34 = vrot.slane %v33, 1
  %v35 = vadd.f32 %v33, %v34
  %v36 = vadd.f32 %v21, %v35
  %vm37 = vcmask 57344
  %38 = vst.msk [vmem:[%s1] sm:$0x1] %vm37, %v36
  %v39 = vld [vmem:[%s2] sm:$0x1]
  %v40 = vmul.f32 %v17, %v17
  %v41 = vmul.f32 %v18, %v18
  %v42 = vmul.f32 %v19, %v19
  %v43 = vmul.f32 %v20, %v20
  %v44 = vsel %vm22, %v40, 0.0
  %v45 = vsel %vm22, %v41, 0.0
  %v46 = vadd.f32 %v44, %v45
  %v47 = vsel %vm22, %v42, 0.0
  %v48 = vadd.f32 %v46, %v47
  %v49 = vsel %vm22, %v43, 0.0
  %v50 = vadd.f32 %v48, %v49
  %v51 = vrot.slane %v50, 4
  %v52 = vadd.f32 %v50, %v51
  %v53 = vrot.slane %v52, 2
  %v54 = vadd.f32 %v52, %v53
  %v55 = vrot.slane %v54, 1
  %v56 = vadd.f32 %v54, %v55
  %v57 = vadd.f32 %v39, %v56
  %58 = vst.msk [vmem:[%s2] sm:$0x1] %vm37, %v57
  // Predicated region
  $region10: #{resnet_forward.56} parent=0 // pred_check
    _
  $region11: #{resnet_forward.56} parent=0 // pred_check_branch
    %60 = sbr.rel (0) target = $region13
  $region12: #{resnet_forward.56} parent=0 // pred_region
    _
  $region13: #{resnet_forward.56} parent=0 // pred_fallthru
    _
  // Predicated region
  $region14: #{resnet_forward.56} parent=0 // pred_check
    _
  $region15: #{resnet_forward.56} parent=0 // pred_check_branch
    %62 = sbr.rel (0) target = $region17
  $region16: #{resnet_forward.56} parent=0 // pred_region
    _
  $region17: #{resnet_forward.56} parent=0 // pred_fallthru
    _
  // Predicated region
  $region18: #{resnet_forward.56} parent=0 // pred_check
    _
  $region19: #{resnet_forward.56} parent=0 // pred_check_branch
    %64 = sbr.rel (0) target = $region21
  $region20: #{resnet_forward.56} parent=0 // pred_region
    _
  $region21: #{resnet_forward.56} parent=0 // pred_fallthru
    _
  // Predicated region
  $region22: #{resnet_forward.56} parent=0 // pred_check
    _
  $region23: #{resnet_forward.56} parent=0 // pred_check_branch
    %66 = sbr.rel (0) target = $region25
  $region24: #{resnet_forward.56} parent=0 // pred_region
    _
  $region25: #{resnet_forward.56} parent=0 // pred_fallthru
    _

// kernel: resnet_forward.63
$region0: #{resnet_forward.63}
  #allocation0 [shape = 'u32[]', space=smem, size = 0x4, offset = 0x4, fixed_abs, tag = 'smem constant byte address 0x4 - core index']
  #allocation1 [shape = 'u32[72,128]{1,0:T(1,128)}', space=vmem, size = 0x9000, scoped, tag = 'internal scratch']
  %s0 = inlined_call_operand.vmem [shape: f32[32,32], index: 0, kind: input, shape index: {}]
  %s1 = inlined_call_operand.vmem [shape: f32[1,32], index: 1, kind: input, shape index: {}]
  %s2 = inlined_call_operand.vmem [shape: f32[1,32], index: 2, kind: input, shape index: {}]
  %s3 = inlined_call_operand.vmem [shape: f32[32,32], index: 3, kind: output, shape index: {}]
  %s4 = sld [smem:[#allocation0]]
  $region22: #{resnet_forward.63} parent=0
    _
  %s6 = ssub.s32 1, %s4
  %s7 = scalar_select 0, %s6, %s4
  // Predicated region
  $region2: #{resnet_forward.63} parent=0 // pred_check
    _
  $region3: #{resnet_forward.63} parent=0 // pred_check_branch
    %9 = sbr.rel (0) target = $region5
  $region4: #{resnet_forward.63} parent=0 // pred_region
    _
  $region5: #{resnet_forward.63} parent=0 // pred_fallthru
    _
  // Predicated region
  $region6: #{resnet_forward.63} parent=0 // pred_check
    _
  $region7: #{resnet_forward.63} parent=0 // pred_check_branch
    %11 = sbr.rel (0) target = $region9
  $region8: #{resnet_forward.63} parent=0 // pred_region
    _
  $region9: #{resnet_forward.63} parent=0 // pred_fallthru
    _
  // Predicated region
  $region10: #{resnet_forward.63} parent=0 // pred_check
    _
  $region11: #{resnet_forward.63} parent=0 // pred_check_branch
    %13 = sbr.rel (0) target = $region13
  $region12: #{resnet_forward.63} parent=0 // pred_region
    _
  $region13: #{resnet_forward.63} parent=0 // pred_fallthru
    _
  %v14 = vld [vmem:[%s0] sm:$0xff]
  %v15 = vld [vmem:[%s0 + $0x8] sm:$0xff]
  %v16 = vld [vmem:[%s0 + $0x10] sm:$0xff]
  %v17 = vld [vmem:[%s0 + $0x18] sm:$0xff]
  %v18 = vld [vmem:[%s1] sm:$0x1]
  %v20 = vperm.slane %v18, 0
  %v22 = vmul.f32 %v14, %v20
  %v23 = vmul.f32 %v15, %v20
  %v24 = vmul.f32 %v16, %v20
  %v25 = vmul.f32 %v17, %v20
  %v26 = vld [vmem:[%s2] sm:$0x1]
  %v28 = vperm.slane %v26, 0
  %v30 = vadd.f32 %v22, %v28
  %v31 = vadd.f32 %v23, %v28
  %v32 = vadd.f32 %v24, %v28
  %v33 = vadd.f32 %v25, %v28
  %v34 = vmax.f32 %v30, 0.0
  %v35 = vmax.f32 %v31, 0.0
  %v36 = vmax.f32 %v32, 0.0
  %v37 = vmax.f32 %v33, 0.0
  %vm38 = vcmask 261120
  %39 = vst.msk [vmem:[%s3] sm:$0xff] %vm38, %v34
  %40 = vst.msk [vmem:[%s3 + $0x8] sm:$0xff] %vm38, %v35
  %41 = vst.msk [vmem:[%s3 + $0x10] sm:$0xff] %vm38, %v36
  %42 = vst.msk [vmem:[%s3 + $0x18] sm:$0xff] %vm38, %v37
  // Predicated region
  $region14: #{resnet_forward.63} parent=0 // pred_check
    _
  $region15: #{resnet_forward.63} parent=0 // pred_check_branch
    %44 = sbr.rel (0) target = $region17
  $region16: #{resnet_forward.63} parent=0 // pred_region
    _
  $region17: #{resnet_forward.63} parent=0 // pred_fallthru
    _
  // Predicated region
  $region18: #{resnet_forward.63} parent=0 // pred_check
    _
  $region19: #{resnet_forward.63} parent=0 // pred_check_branch
    %46 = sbr.rel (0) target = $region21
  $region20: #{resnet_forward.63} parent=0 // pred_region
    _
  $region21: #{resnet_forward.63} parent=0 // pred_fallthru
    _

// kernel: resnet_forward.62
$region0: #{resnet_forward.62}
  #allocation0 [shape = 'u32[]', space=smem, size = 0x4, offset = 0x4, fixed_abs, tag = 'smem constant byte address 0x4 - core index']
  #allocation1 [shape = 'u32[72,128]{1,0:T(1,128)}', space=vmem, size = 0x9000, scoped, tag = 'internal scratch']
  %s0 = inlined_call_operand.vmem [shape: f32[32,32], index: 0, kind: input, shape index: {}]
  %s1 = inlined_call_operand.vmem [shape: f32[1,32], index: 1, kind: output, shape index: {0}]
  %s2 = inlined_call_operand.vmem [shape: f32[1,32], index: 2, kind: output, shape index: {1}]
  %3 = xla_tuple %s1, %s2
  %s4 = sld [smem:[#allocation0]]
  $region26: #{resnet_forward.62} parent=0
    _
  %s6 = ssub.s32 1, %s4
  %s7 = scalar_select 0, %s6, %s4
  // Predicated region
  $region2: #{resnet_forward.62} parent=0 // pred_check
    _
  $region3: #{resnet_forward.62} parent=0 // pred_check_branch
    %9 = sbr.rel (0) target = $region5
  $region4: #{resnet_forward.62} parent=0 // pred_region
    _
  $region5: #{resnet_forward.62} parent=0 // pred_fallthru
    _
  %p10 = scmp.eq.s32.totalorder 0, 0
  // Predicated region
  $region6: #{resnet_forward.62} parent=0 // pred_check
    %p11 = pneg %p10
  $region7: #{resnet_forward.62} parent=0 // pred_check_branch
    %13 = sbr.rel (%p11) target = $region9
  $region8: #{resnet_forward.62} parent=0 // pred_region
    %vm14 = vcmask 253952
    %15 = vst.msk [vmem:[%s1] sm:$0x1] %vm14, 0.0
    %16 = vst.msk [vmem:[%s2] sm:$0x1] %vm14, 0.0
  $region9: #{resnet_forward.62} parent=0 // pred_fallthru
    _
  %v17 = vld [vmem:[%s0] sm:$0xff]
  %v18 = vld [vmem:[%s0 + $0x8] sm:$0xff]
  %v19 = vld [vmem:[%s0 + $0x10] sm:$0xff]
  %v20 = vld [vmem:[%s0 + $0x18] sm:$0xff]
  %v21 = vld [vmem:[%s1] sm:$0x1]
  %vm22 = vcmask 261120
  %v23 = vsel %vm22, %v17, 0.0
  %v24 = vsel %vm22, %v18, 0.0
  %v25 = vadd.f32 %v23, %v24
  %v26 = vsel %vm22, %v19, 0.0
  %v27 = vadd.f32 %v25, %v26
  %v28 = vsel %vm22, %v20, 0.0
  %v29 = vadd.f32 %v27, %v28
  %v30 = vrot.slane %v29, 4
  %v31 = vadd.f32 %v29, %v30
  %v32 = vrot.slane %v31, 2
  %v33 = vadd.f32 %v31, %v32
  %v34 = vrot.slane %v33, 1
  %v35 = vadd.f32 %v33, %v34
  %v36 = vadd.f32 %v21, %v35
  %vm37 = vcmask 253952
  %38 = vst.msk [vmem:[%s1] sm:$0x1] %vm37, %v36
  %v39 = vld [vmem:[%s2] sm:$0x1]
  %v40 = vmul.f32 %v17, %v17
  %v41 = vmul.f32 %v18, %v18
  %v42 = vmul.f32 %v19, %v19
  %v43 = vmul.f32 %v20, %v20
  %v44 = vsel %vm22, %v40, 0.0
  %v45 = vsel %vm22, %v41, 0.0
  %v46 = vadd.f32 %v44, %v45
  %v47 = vsel %vm22, %v42, 0.0
  %v48 = vadd.f32 %v46, %v47
  %v49 = vsel %vm22, %v43, 0.0
  %v50 = vadd.f32 %v48, %v49
  %v51 = vrot.slane %v50, 4
  %v52 = vadd.f32 %v50, %v51
  %v53 = vrot.slane %v52, 2
  %v54 = vadd.f32 %v52, %v53
  %v55 = vrot.slane %v54, 1
  %v56 = vadd.f32 %v54, %v55
  %v57 = vadd.f32 %v39, %v56
  %58 = vst.msk [vmem:[%s2] sm:$0x1] %vm37, %v57
  // Predicated region
  $region10: #{resnet_forward.62} parent=0 // pred_check
    _
  $region11: #{resnet_forward.62} parent=0 // pred_check_branch
    %60 = sbr.rel (0) target = $region13
  $region12: #{resnet_forward.62} parent=0 // pred_region
    _
  $region13: #{resnet_forward.62} parent=0 // pred_fallthru
    _
  // Predicated region
  $region14: #{resnet_forward.62} parent=0 // pred_check
    _
  $region15: #{resnet_forward.62} parent=0 // pred_check_branch
    %62 = sbr.rel (0) target = $region17
  $region16: #{resnet_forward.62} parent=0 // pred_region
    _
  $region17: #{resnet_forward.62} parent=0 // pred_fallthru
    _
  // Predicated region
  $region18: #{resnet_forward.62} parent=0 // pred_check
    _
  $region19: #{resnet_forward.62} parent=0 // pred_check_branch
    %64 = sbr.rel (0) target = $region21
  $region20: #{resnet_forward.62} parent=0 // pred_region
    _
  $region21: #{resnet_forward.62} parent=0 // pred_fallthru
    _
  // Predicated region
  $region22: #{resnet_forward.62} parent=0 // pred_check
    _
  $region23: #{resnet_forward.62} parent=0 // pred_check_branch
    %66 = sbr.rel (0) target = $region25
  $region24: #{resnet_forward.62} parent=0 // pred_region
    _
  $region25: #{resnet_forward.62} parent=0 // pred_fallthru
    _

// kernel: resnet_forward.71
$region0: #{resnet_forward.71}
  #allocation0 [shape = 'u32[]', space=smem, size = 0x4, offset = 0x4, fixed_abs, tag = 'smem constant byte address 0x4 - core index']
  #allocation1 [shape = 'u32[72,128]{1,0:T(1,128)}', space=vmem, size = 0x9000, scoped, tag = 'internal scratch']
  %s0 = inlined_call_operand.vmem [shape: f32[32,32], index: 0, kind: input, shape index: {}]
  %s1 = inlined_call_operand.vmem [shape: f32[1,32], index: 1, kind: input, shape index: {}]
  %s2 = inlined_call_operand.vmem [shape: f32[1,32], index: 2, kind: input, shape index: {}]
  %s3 = inlined_call_operand.vmem [shape: f32[32,32], index: 3, kind: output, shape index: {}]
  %s4 = sld [smem:[#allocation0]]
  $region22: #{resnet_forward.71} parent=0
    _
  %s6 = ssub.s32 1, %s4
  %s7 = scalar_select 0, %s6, %s4
  // Predicated region
  $region2: #{resnet_forward.71} parent=0 // pred_check
    _
  $region3: #{resnet_forward.71} parent=0 // pred_check_branch
    %9 = sbr.rel (0) target = $region5
  $region4: #{resnet_forward.71} parent=0 // pred_region
    _
  $region5: #{resnet_forward.71} parent=0 // pred_fallthru
    _
  // Predicated region
  $region6: #{resnet_forward.71} parent=0 // pred_check
    _
  $region7: #{resnet_forward.71} parent=0 // pred_check_branch
    %11 = sbr.rel (0) target = $region9
  $region8: #{resnet_forward.71} parent=0 // pred_region
    _
  $region9: #{resnet_forward.71} parent=0 // pred_fallthru
    _
  // Predicated region
  $region10: #{resnet_forward.71} parent=0 // pred_check
    _
  $region11: #{resnet_forward.71} parent=0 // pred_check_branch
    %13 = sbr.rel (0) target = $region13
  $region12: #{resnet_forward.71} parent=0 // pred_region
    _
  $region13: #{resnet_forward.71} parent=0 // pred_fallthru
    _
  %v14 = vld [vmem:[%s0] sm:$0xff]
  %v15 = vld [vmem:[%s0 + $0x8] sm:$0xff]
  %v16 = vld [vmem:[%s0 + $0x10] sm:$0xff]
  %v17 = vld [vmem:[%s0 + $0x18] sm:$0xff]
  %v18 = vld [vmem:[%s1] sm:$0x1]
  %v20 = vperm.slane %v18, 0
  %v22 = vmul.f32 %v14, %v20
  %v23 = vmul.f32 %v15, %v20
  %v24 = vmul.f32 %v16, %v20
  %v25 = vmul.f32 %v17, %v20
  %v26 = vld [vmem:[%s2] sm:$0x1]
  %v28 = vperm.slane %v26, 0
  %v30 = vadd.f32 %v22, %v28
  %v31 = vadd.f32 %v23, %v28
  %v32 = vadd.f32 %v24, %v28
  %v33 = vadd.f32 %v25, %v28
  %vm34 = vcmask 261120
  %35 = vst.msk [vmem:[%s3] sm:$0xff] %vm34, %v30
  %36 = vst.msk [vmem:[%s3 + $0x8] sm:$0xff] %vm34, %v31
  %37 = vst.msk [vmem:[%s3 + $0x10] sm:$0xff] %vm34, %v32
  %38 = vst.msk [vmem:[%s3 + $0x18] sm:$0xff] %vm34, %v33
  // Predicated region
  $region14: #{resnet_forward.71} parent=0 // pred_check
    _
  $region15: #{resnet_forward.71} parent=0 // pred_check_branch
    %40 = sbr.rel (0) target = $region17
  $region16: #{resnet_forward.71} parent=0 // pred_region
    _
  $region17: #{resnet_forward.71} parent=0 // pred_fallthru
    _
  // Predicated region
  $region18: #{resnet_forward.71} parent=0 // pred_check
    _
  $region19: #{resnet_forward.71} parent=0 // pred_check_branch
    %42 = sbr.rel (0) target = $region21
  $region20: #{resnet_forward.71} parent=0 // pred_region
    _
  $region21: #{resnet_forward.71} parent=0 // pred_fallthru
    _

// kernel: resnet_forward.76
$region0: #{resnet_forward.76}
  #allocation0 [shape = 'u32[]', space=smem, size = 0x4, offset = 0x4, fixed_abs, tag = 'smem constant byte address 0x4 - core index']
  #allocation1 [shape = 'u32[72,128]{1,0:T(1,128)}', space=vmem, size = 0x9000, scoped, tag = 'internal scratch']
  %s0 = inlined_call_operand.vmem [shape: f32[32,16], index: 0, kind: input, shape index: {}]
  %s1 = inlined_call_operand.vmem [shape: f32[1,16], index: 1, kind: output, shape index: {0}]
  %s2 = inlined_call_operand.vmem [shape: f32[1,16], index: 2, kind: output, shape index: {1}]
  %3 = xla_tuple %s1, %s2
  %s4 = sld [smem:[#allocation0]]
  $region26: #{resnet_forward.76} parent=0
    _
  %s6 = ssub.s32 1, %s4
  %s7 = scalar_select 0, %s6, %s4
  // Predicated region
  $region2: #{resnet_forward.76} parent=0 // pred_check
    _
  $region3: #{resnet_forward.76} parent=0 // pred_check_branch
    %9 = sbr.rel (0) target = $region5
  $region4: #{resnet_forward.76} parent=0 // pred_region
    _
  $region5: #{resnet_forward.76} parent=0 // pred_fallthru
    _
  %p10 = scmp.eq.s32.totalorder 0, 0
  // Predicated region
  $region6: #{resnet_forward.76} parent=0 // pred_check
    %p11 = pneg %p10
  $region7: #{resnet_forward.76} parent=0 // pred_check_branch
    %13 = sbr.rel (%p11) target = $region9
  $region8: #{resnet_forward.76} parent=0 // pred_region
    %vm14 = vcmask 122880
    %15 = vst.msk [vmem:[%s1] sm:$0x1] %vm14, 0.0
    %16 = vst.msk [vmem:[%s2] sm:$0x1] %vm14, 0.0
  $region9: #{resnet_forward.76} parent=0 // pred_fallthru
    _
  %v17 = vld [vmem:[%s0] sm:$0xff]
  %v18 = vld [vmem:[%s0 + $0x8] sm:$0xff]
  %v19 = vld [vmem:[%s0 + $0x10] sm:$0xff]
  %v20 = vld [vmem:[%s0 + $0x18] sm:$0xff]
  %v21 = vld [vmem:[%s1] sm:$0x1]
  %vm22 = vcmask 130048
  %v23 = vsel %vm22, %v17, 0.0
  %v24 = vsel %vm22, %v18, 0.0
  %v25 = vadd.f32 %v23, %v24
  %v26 = vsel %vm22, %v19, 0.0
  %v27 = vadd.f32 %v25, %v26
  %v28 = vsel %vm22, %v20, 0.0
  %v29 = vadd.f32 %v27, %v28
  %v30 = vrot.slane %v29, 4
  %v31 = vadd.f32 %v29, %v30
  %v32 = vrot.slane %v31, 2
  %v33 = vadd.f32 %v31, %v32
  %v34 = vrot.slane %v33, 1
  %v35 = vadd.f32 %v33, %v34
  %v36 = vadd.f32 %v21, %v35
  %vm37 = vcmask 122880
  %38 = vst.msk [vmem:[%s1] sm:$0x1] %vm37, %v36
  %v39 = vld [vmem:[%s2] sm:$0x1]
  %v40 = vmul.f32 %v17, %v17
  %v41 = vmul.f32 %v18, %v18
  %v42 = vmul.f32 %v19, %v19
  %v43 = vmul.f32 %v20, %v20
  %v44 = vsel %vm22, %v40, 0.0
  %v45 = vsel %vm22, %v41, 0.0
  %v46 = vadd.f32 %v44, %v45
  %v47 = vsel %vm22, %v42, 0.0
  %v48 = vadd.f32 %v46, %v47
  %v49 = vsel %vm22, %v43, 0.0
  %v50 = vadd.f32 %v48, %v49
  %v51 = vrot.slane %v50, 4
  %v52 = vadd.f32 %v50, %v51
  %v53 = vrot.slane %v52, 2
  %v54 = vadd.f32 %v52, %v53
  %v55 = vrot.slane %v54, 1
  %v56 = vadd.f32 %v54, %v55
  %v57 = vadd.f32 %v39, %v56
  %58 = vst.msk [vmem:[%s2] sm:$0x1] %vm37, %v57
  // Predicated region
  $region10: #{resnet_forward.76} parent=0 // pred_check
    _
  $region11: #{resnet_forward.76} parent=0 // pred_check_branch
    %60 = sbr.rel (0) target = $region13
  $region12: #{resnet_forward.76} parent=0 // pred_region
    _
  $region13: #{resnet_forward.76} parent=0 // pred_fallthru
    _
  // Predicated region
  $region14: #{resnet_forward.76} parent=0 // pred_check
    _
  $region15: #{resnet_forward.76} parent=0 // pred_check_branch
    %62 = sbr.rel (0) target = $region17
  $region16: #{resnet_forward.76} parent=0 // pred_region
    _
  $region17: #{resnet_forward.76} parent=0 // pred_fallthru
    _
  // Predicated region
  $region18: #{resnet_forward.76} parent=0 // pred_check
    _
  $region19: #{resnet_forward.76} parent=0 // pred_check_branch
    %64 = sbr.rel (0) target = $region21
  $region20: #{resnet_forward.76} parent=0 // pred_region
    _
  $region21: #{resnet_forward.76} parent=0 // pred_fallthru
    _
  // Predicated region
  $region22: #{resnet_forward.76} parent=0 // pred_check
    _
  $region23: #{resnet_forward.76} parent=0 // pred_check_branch
    %66 = sbr.rel (0) target = $region25
  $region24: #{resnet_forward.76} parent=0 // pred_region
    _
  $region25: #{resnet_forward.76} parent=0 // pred_fallthru
    _

// kernel: resnet_forward.61
$region0: #{resnet_forward.61}
  #allocation0 [shape = 'u32[]', space=smem, size = 0x4, offset = 0x4, fixed_abs, tag = 'smem constant byte address 0x4 - core index']
  #allocation1 [shape = 'u32[72,128]{1,0:T(1,128)}', space=vmem, size = 0x9000, scoped, tag = 'internal scratch']
  #allocation2 [shape = 'f32[128,128]{1,0:T(8,128)}', space=vmem, size = 0x10000, scoped, tag = 'scratch operand']
  %s0 = inlined_call_operand.vmem [shape: bf16[128,128], index: 0, kind: input, shape index: {}]
  %s1 = inlined_call_operand.vmem [shape: bf16[128,128], index: 1, kind: input, shape index: {}]
  %s2 = inlined_call_operand.vmem [shape: f32[1,128], index: 2, kind: input, shape index: {}]
  %s3 = inlined_call_operand.vmem [shape: f32[128,128], index: 3, kind: input, shape index: {}]
  %s4 = inlined_call_operand.vmem [shape: f32[128,128], index: 4, kind: output, shape index: {}]
  %s5 = sld [smem:[#allocation0]]
  $region34: #{resnet_forward.61} parent=0
    _
  %s7 = ssub.s32 1, %s5
  %s8 = scalar_select 0, %s7, %s5
  // Predicated region
  $region2: #{resnet_forward.61} parent=0 // pred_check
    _
  $region3: #{resnet_forward.61} parent=0 // pred_check_branch
    %10 = sbr.rel (0) target = $region5
  $region4: #{resnet_forward.61} parent=0 // pred_region
    _
  $region5: #{resnet_forward.61} parent=0 // pred_fallthru
    _
  // Predicated region
  $region6: #{resnet_forward.61} parent=0 // pred_check
    _
  $region7: #{resnet_forward.61} parent=0 // pred_check_branch
    %12 = sbr.rel (0) target = $region9
  $region8: #{resnet_forward.61} parent=0 // pred_region
    _
  $region9: #{resnet_forward.61} parent=0 // pred_fallthru
    _
  // Predicated region
  $region10: #{resnet_forward.61} parent=0 // pred_check
    _
  $region11: #{resnet_forward.61} parent=0 // pred_check_branch
    %14 = sbr.rel (0) target = $region13
  $region12: #{resnet_forward.61} parent=0 // pred_region
    _
  $region13: #{resnet_forward.61} parent=0 // pred_fallthru
    _
  // Predicated region
  $region14: #{resnet_forward.61} parent=0 // pred_check
    _
  $region15: #{resnet_forward.61} parent=0 // pred_check_branch
    %16 = sbr.rel (0) target = $region17
  $region16: #{resnet_forward.61} parent=0 // pred_region
    _
  $region17: #{resnet_forward.61} parent=0 // pred_fallthru
    _
  %p17 = scmp.eq.s32.totalorder 0, 0
  // Predicated region
  $region18: #{resnet_forward.61} parent=0 // pred_check
    %p18 = pneg %p17
  $region19: #{resnet_forward.61} parent=0 // pred_check_branch
    %20 = sbr.rel (%p18) target = $region21
  $region20: #{resnet_forward.61} parent=0 // pred_region
    %21 = vst [vmem:[#allocation2] sm:$0xff] 0.0
    %22 = vst [vmem:[#allocation2 + $0x8] sm:$0xff] 0.0
    %23 = vst [vmem:[#allocation2 + $0x10] sm:$0xff] 0.0
    %24 = vst [vmem:[#allocation2 + $0x18] sm:$0xff] 0.0
    %25 = vst [vmem:[#allocation2 + $0x20] sm:$0xff] 0.0
    %26 = vst [vmem:[#allocation2 + $0x28] sm:$0xff] 0.0
    %27 = vst [vmem:[#allocation2 + $0x30] sm:$0xff] 0.0
    %28 = vst [vmem:[#allocation2 + $0x38] sm:$0xff] 0.0
    %29 = vst [vmem:[#allocation2 + $0x40] sm:$0xff] 0.0
    %30 = vst [vmem:[#allocation2 + $0x48] sm:$0xff] 0.0
    %31 = vst [vmem:[#allocation2 + $0x50] sm:$0xff] 0.0
    %32 = vst [vmem:[#allocation2 + $0x58] sm:$0xff] 0.0
    %33 = vst [vmem:[#allocation2 + $0x60] sm:$0xff] 0.0
    %34 = vst [vmem:[#allocation2 + $0x68] sm:$0xff] 0.0
    %35 = vst [vmem:[#allocation2 + $0x70] sm:$0xff] 0.0
    %36 = vst [vmem:[#allocation2 + $0x78] sm:$0xff] 0.0
  $region21: #{resnet_forward.61} parent=0 // pred_fallthru
    _
  %v37 = vld [vmem:[#allocation2] sm:$0xff]
  %v38 = vld [vmem:[#allocation2 + $0x8] sm:$0xff]
  %v39 = vld [vmem:[#allocation2 + $0x10] sm:$0xff]
  %v40 = vld [vmem:[#allocation2 + $0x18] sm:$0xff]
  %v41 = vld [vmem:[#allocation2 + $0x20] sm:$0xff]
  %v42 = vld [vmem:[#allocation2 + $0x28] sm:$0xff]
  %v43 = vld [vmem:[#allocation2 + $0x30] sm:$0xff]
  %v44 = vld [vmem:[#allocation2 + $0x38] sm:$0xff]
  %v45 = vld [vmem:[#allocation2 + $0x40] sm:$0xff]
  %v46 = vld [vmem:[#allocation2 + $0x48] sm:$0xff]
  %v47 = vld [vmem:[#allocation2 + $0x50] sm:$0xff]
  %v48 = vld [vmem:[#allocation2 + $0x58] sm:$0xff]
  %v49 = vld [vmem:[#allocation2 + $0x60] sm:$0xff]
  %v50 = vld [vmem:[#allocation2 + $0x68] sm:$0xff]
  %v51 = vld [vmem:[#allocation2 + $0x70] sm:$0xff]
  %v52 = vld [vmem:[#allocation2 + $0x78] sm:$0xff]
  %v53 = vld [vmem:[%s0] sm:$0xf]
  %v54 = vld [vmem:[%s0 + $0x4] sm:$0xf]
  %v55 = vld [vmem:[%s0 + $0x8] sm:$0xf]
  %v56 = vld [vmem:[%s0 + $0xc] sm:$0xf]
  %v57 = vld [vmem:[%s0 + $0x10] sm:$0xf]
  %v58 = vld [vmem:[%s0 + $0x14] sm:$0xf]
  %v59 = vld [vmem:[%s0 + $0x18] sm:$0xf]
  %v60 = vld [vmem:[%s0 + $0x1c] sm:$0xf]
  %v61 = vld [vmem:[%s0 + $0x20] sm:$0xf]
  %v62 = vld [vmem:[%s0 + $0x24] sm:$0xf]
  %v63 = vld [vmem:[%s0 + $0x28] sm:$0xf]
  %v64 = vld [vmem:[%s0 + $0x2c] sm:$0xf]
  %v65 = vld [vmem:[%s0 + $0x30] sm:$0xf]
  %v66 = vld [vmem:[%s0 + $0x34] sm:$0xf]
  %v67 = vld [vmem:[%s0 + $0x38] sm:$0xf]
  %v68 = vld [vmem:[%s0 + $0x3c] sm:$0xf]
  %v69 = vld [vmem:[%s1] sm:$0xf]
  %v70 = vld [vmem:[%s1 + $0x4] sm:$0xf]
  %v71 = vld [vmem:[%s1 + $0x8] sm:$0xf]
  %v72 = vld [vmem:[%s1 + $0xc] sm:$0xf]
  %v73 = vld [vmem:[%s1 + $0x10] sm:$0xf]
  %v74 = vld [vmem:[%s1 + $0x14] sm:$0xf]
  %v75 = vld [vmem:[%s1 + $0x18] sm:$0xf]
  %v76 = vld [vmem:[%s1 + $0x1c] sm:$0xf]
  %v77 = vld [vmem:[%s1 + $0x20] sm:$0xf]
  %v78 = vld [vmem:[%s1 + $0x24] sm:$0xf]
  %v79 = vld [vmem:[%s1 + $0x28] sm:$0xf]
  %v80 = vld [vmem:[%s1 + $0x2c] sm:$0xf]
  %v81 = vld [vmem:[%s1 + $0x30] sm:$0xf]
  %v82 = vld [vmem:[%s1 + $0x34] sm:$0xf]
  %v83 = vld [vmem:[%s1 + $0x38] sm:$0xf]
  %v84 = vld [vmem:[%s1 + $0x3c] sm:$0xf]
  %v101 = vunpack.c.l.b16 %v53
  %v102 = vunpack.c.l.b16 %v54
  %v103 = vunpack.c.l.b16 %v55
  %v104 = vunpack.c.l.b16 %v56
  %v105 = vunpack.c.l.b16 %v57
  %v106 = vunpack.c.l.b16 %v58
  %v107 = vunpack.c.l.b16 %v59
  %v108 = vunpack.c.l.b16 %v60
  %v109 = vunpack.c.l.b16 %v61
  %v110 = vunpack.c.l.b16 %v62
  %v111 = vunpack.c.l.b16 %v63
  %v112 = vunpack.c.l.b16 %v64
  %v113 = vunpack.c.l.b16 %v65
  %v114 = vunpack.c.l.b16 %v66
  %v115 = vunpack.c.l.b16 %v67
  %v116 = vunpack.c.l.b16 %v68
  %v117 = vpack.c.b16 %v102, %v101
  %v118 = vpack.c.b16 %v104, %v103
  %v119 = vpack.c.b16 %v106, %v105
  %v120 = vpack.c.b16 %v108, %v107
  %v121 = vpack.c.b16 %v110, %v109
  %v122 = vpack.c.b16 %v112, %v111
  %v123 = vpack.c.b16 %v114, %v113
  %v124 = vpack.c.b16 %v116, %v115
  %v149 = vunpack.c.l.b16 %v69
  %v150 = vunpack.c.l.b16 %v70
  %v151 = vunpack.c.l.b16 %v71
  %v152 = vunpack.c.l.b16 %v72
  %v153 = vunpack.c.l.b16 %v73
  %v154 = vunpack.c.l.b16 %v74
  %v155 = vunpack.c.l.b16 %v75
  %v156 = vunpack.c.l.b16 %v76
  %v157 = vunpack.c.l.b16 %v77
  %v158 = vunpack.c.l.b16 %v78
  %v159 = vunpack.c.l.b16 %v79
  %v160 = vunpack.c.l.b16 %v80
  %v161 = vunpack.c.l.b16 %v81
  %v162 = vunpack.c.l.b16 %v82
  %v163 = vunpack.c.l.b16 %v83
  %v164 = vunpack.c.l.b16 %v84
  %v165 = vpack.c.b16 %v150, %v149
  %v166 = vpack.c.b16 %v152, %v151
  %v167 = vpack.c.b16 %v154, %v153
  %v168 = vpack.c.b16 %v156, %v155
  %v169 = vpack.c.b16 %v158, %v157
  %v170 = vpack.c.b16 %v160, %v159
  %v171 = vpack.c.b16 %v162, %v161
  %v172 = vpack.c.b16 %v164, %v163
  %181 = vmatpush.bf16.msra.mxu0 %v172
  %182 = vmatpush.bf16.msra.mxu0 %v171
  %183 = vmatpush.bf16.msra.mxu0 %v170
  %184 = vmatpush.bf16.msra.mxu0 %v169
  %185 = vmatpush.bf16.msra.mxu0 %v168
  %186 = vmatpush.bf16.msra.mxu0 %v167
  %187 = vmatpush.bf16.msra.mxu0 %v166
  %188 = vmatpush.bf16.msra.mxu0 %v165
  %189 = vmatmul.bf16.gmra.mxu0 %v117
  %v190 = vpop.f32.mrf.mxu0
  %v191 = vadd.f32 0.0, %v190
  %v192 = vpop.f32.mrf.mxu0
  %v193 = vadd.f32 0.0, %v192
  %194 = vmatmul.bf16.gmra.mxu0 %v118
  %v195 = vpop.f32.mrf.mxu0
  %v196 = vadd.f32 0.0, %v195
  %v197 = vpop.f32.mrf.mxu0
  %v198 = vadd.f32 0.0, %v197
  %199 = vmatmul.bf16.gmra.mxu0 %v119
  %v200 = vpop.f32.mrf.mxu0
  %v201 = vadd.f32 0.0, %v200
  %v202 = vpop.f32.mrf.mxu0
  %v203 = vadd.f32 0.0, %v202
  %204 = vmatmul.bf16.gmra.mxu0 %v120
  %v205 = vpop.f32.mrf.mxu0
  %v206 = vadd.f32 0.0, %v205
  %v207 = vpop.f32.mrf.mxu0
  %v208 = vadd.f32 0.0, %v207
  %209 = vmatmul.bf16.gmra.mxu0 %v121
  %v210 = vpop.f32.mrf.mxu0
  %v211 = vadd.f32 0.0, %v210
  %v212 = vpop.f32.mrf.mxu0
  %v213 = vadd.f32 0.0, %v212
  %214 = vmatmul.bf16.gmra.mxu0 %v122
  %v215 = vpop.f32.mrf.mxu0
  %v216 = vadd.f32 0.0, %v215
  %v217 = vpop.f32.mrf.mxu0
  %v218 = vadd.f32 0.0, %v217
  %219 = vmatmul.bf16.gmra.mxu0 %v123
  %v220 = vpop.f32.mrf.mxu0
  %v221 = vadd.f32 0.0, %v220
  %v222 = vpop.f32.mrf.mxu0
  %v223 = vadd.f32 0.0, %v222
  %224 = vmatmul.bf16.gmra.mxu0 %v124
  %v225 = vpop.f32.mrf.mxu0
  %v226 = vadd.f32 0.0, %v225
  %v227 = vpop.f32.mrf.mxu0
  %v228 = vadd.f32 0.0, %v227
  %229 = vdwg.mxu0
  %v230 = vadd.f32 %v37, %v191
  %v231 = vadd.f32 %v38, %v193
  %v232 = vadd.f32 %v39, %v196
  %v233 = vadd.f32 %v40, %v198
  %v234 = vadd.f32 %v41, %v201
  %v235 = vadd.f32 %v42, %v203
  %v236 = vadd.f32 %v43, %v206
  %v237 = vadd.f32 %v44, %v208
  %v238 = vadd.f32 %v45, %v211
  %v239 = vadd.f32 %v46, %v213
  %v240 = vadd.f32 %v47, %v216
  %v241 = vadd.f32 %v48, %v218
  %v242 = vadd.f32 %v49, %v221
  %v243 = vadd.f32 %v50, %v223
  %v244 = vadd.f32 %v51, %v226
  %v245 = vadd.f32 %v52, %v228
  %246 = vst [vmem:[#allocation2] sm:$0xff] %v230
  %247 = vst [vmem:[#allocation2 + $0x8] sm:$0xff] %v231
  %248 = vst [vmem:[#allocation2 + $0x10] sm:$0xff] %v232
  %249 = vst [vmem:[#allocation2 + $0x18] sm:$0xff] %v233
  %250 = vst [vmem:[#allocation2 + $0x20] sm:$0xff] %v234
  %251 = vst [vmem:[#allocation2 + $0x28] sm:$0xff] %v235
  %252 = vst [vmem:[#allocation2 + $0x30] sm:$0xff] %v236
  %253 = vst [vmem:[#allocation2 + $0x38] sm:$0xff] %v237
  %254 = vst [vmem:[#allocation2 + $0x40] sm:$0xff] %v238
  %255 = vst [vmem:[#allocation2 + $0x48] sm:$0xff] %v239
  %256 = vst [vmem:[#allocation2 + $0x50] sm:$0xff] %v240
  %257 = vst [vmem:[#allocation2 + $0x58] sm:$0xff] %v241
  %258 = vst [vmem:[#allocation2 + $0x60] sm:$0xff] %v242
  %259 = vst [vmem:[#allocation2 + $0x68] sm:$0xff] %v243
  %260 = vst [vmem:[#allocation2 + $0x70] sm:$0xff] %v244
  %261 = vst [vmem:[#allocation2 + $0x78] sm:$0xff] %v245
  // Predicated region
  $region22: #{resnet_forward.61} parent=0 // pred_check
    %p262 = pneg %p17
  $region23: #{resnet_forward.61} parent=0 // pred_check_branch
    %264 = sbr.rel (%p262) target = $region25
  $region24: #{resnet_forward.61} parent=0 // pred_region
    %v265 = vld [vmem:[#allocation2] sm:$0xff]
    %v266 = vld [vmem:[#allocation2 + $0x8] sm:$0xff]
    %v267 = vld [vmem:[#allocation2 + $0x10] sm:$0xff]
    %v268 = vld [vmem:[#allocation2 + $0x18] sm:$0xff]
    %v269 = vld [vmem:[#allocation2 + $0x20] sm:$0xff]
    %v270 = vld [vmem:[#allocation2 + $0x28] sm:$0xff]
    %v271 = vld [vmem:[#allocation2 + $0x30] sm:$0xff]
    %v272 = vld [vmem:[#allocation2 + $0x38] sm:$0xff]
    %v273 = vld [vmem:[#allocation2 + $0x40] sm:$0xff]
    %v274 = vld [vmem:[#allocation2 + $0x48] sm:$0xff]
    %v275 = vld [vmem:[#allocation2 + $0x50] sm:$0xff]
    %v276 = vld [vmem:[#allocation2 + $0x58] sm:$0xff]
    %v277 = vld [vmem:[#allocation2 + $0x60] sm:$0xff]
    %v278 = vld [vmem:[#allocation2 + $0x68] sm:$0xff]
    %v279 = vld [vmem:[#allocation2 + $0x70] sm:$0xff]
    %v280 = vld [vmem:[#allocation2 + $0x78] sm:$0xff]
    %v281 = vld [vmem:[%s2] sm:$0x1]
    %v283 = vperm.slane %v281, 0
    %v285 = vadd.f32 %v265, %v283
    %v286 = vadd.f32 %v266, %v283
    %v287 = vadd.f32 %v267, %v283
    %v288 = vadd.f32 %v268, %v283
    %v289 = vadd.f32 %v269, %v283
    %v290 = vadd.f32 %v270, %v283
    %v291 = vadd.f32 %v271, %v283
    %v292 = vadd.f32 %v272, %v283
    %v293 = vadd.f32 %v273, %v283
    %v294 = vadd.f32 %v274, %v283
    %v295 = vadd.f32 %v275, %v283
    %v296 = vadd.f32 %v276, %v283
    %v297 = vadd.f32 %v277, %v283
    %v298 = vadd.f32 %v278, %v283
    %v299 = vadd.f32 %v279, %v283
    %v300 = vadd.f32 %v280, %v283
    %v301 = vld [vmem:[%s3] sm:$0xff]
    %v302 = vld [vmem:[%s3 + $0x8] sm:$0xff]
    %v303 = vld [vmem:[%s3 + $0x10] sm:$0xff]
    %v304 = vld [vmem:[%s3 + $0x18] sm:$0xff]
    %v305 = vld [vmem:[%s3 + $0x20] sm:$0xff]
    %v306 = vld [vmem:[%s3 + $0x28] sm:$0xff]
    %v307 = vld [vmem:[%s3 + $0x30] sm:$0xff]
    %v308 = vld [vmem:[%s3 + $0x38] sm:$0xff]
    %v309 = vld [vmem:[%s3 + $0x40] sm:$0xff]
    %v310 = vld [vmem:[%s3 + $0x48] sm:$0xff]
    %v311 = vld [vmem:[%s3 + $0x50] sm:$0xff]
    %v312 = vld [vmem:[%s3 + $0x58] sm:$0xff]
    %v313 = vld [vmem:[%s3 + $0x60] sm:$0xff]
    %v314 = vld [vmem:[%s3 + $0x68] sm:$0xff]
    %v315 = vld [vmem:[%s3 + $0x70] sm:$0xff]
    %v316 = vld [vmem:[%s3 + $0x78] sm:$0xff]
    %v317 = vadd.f32 %v285, %v301
    %v318 = vadd.f32 %v286, %v302
    %v319 = vadd.f32 %v287, %v303
    %v320 = vadd.f32 %v288, %v304
    %v321 = vadd.f32 %v289, %v305
    %v322 = vadd.f32 %v290, %v306
    %v323 = vadd.f32 %v291, %v307
    %v324 = vadd.f32 %v292, %v308
    %v325 = vadd.f32 %v293, %v309
    %v326 = vadd.f32 %v294, %v310
    %v327 = vadd.f32 %v295, %v311
    %v328 = vadd.f32 %v296, %v312
    %v329 = vadd.f32 %v297, %v313
    %v330 = vadd.f32 %v298, %v314
    %v331 = vadd.f32 %v299, %v315
    %v332 = vadd.f32 %v300, %v316
    %333 = vst [vmem:[%s4] sm:$0xff] %v317
    %334 = vst [vmem:[%s4 + $0x8] sm:$0xff] %v318
    %335 = vst [vmem:[%s4 + $0x10] sm:$0xff] %v319
    %336 = vst [vmem:[%s4 + $0x18] sm:$0xff] %v320
    %337 = vst [vmem:[%s4 + $0x20] sm:$0xff] %v321
    %338 = vst [vmem:[%s4 + $0x28] sm:$0xff] %v322
    %339 = vst [vmem:[%s4 + $0x30] sm:$0xff] %v323
    %340 = vst [vmem:[%s4 + $0x38] sm:$0xff] %v324
    %341 = vst [vmem:[%s4 + $0x40] sm:$0xff] %v325
    %342 = vst [vmem:[%s4 + $0x48] sm:$0xff] %v326
    %343 = vst [vmem:[%s4 + $0x50] sm:$0xff] %v327
    %344 = vst [vmem:[%s4 + $0x58] sm:$0xff] %v328
    %345 = vst [vmem:[%s4 + $0x60] sm:$0xff] %v329
    %346 = vst [vmem:[%s4 + $0x68] sm:$0xff] %v330
    %347 = vst [vmem:[%s4 + $0x70] sm:$0xff] %v331
    %348 = vst [vmem:[%s4 + $0x78] sm:$0xff] %v332
  $region25: #{resnet_forward.61} parent=0 // pred_fallthru
    _
  // Predicated region
  $region26: #{resnet_forward.61} parent=0 // pred_check
    _
  $region27: #{resnet_forward.61} parent=0 // pred_check_branch
    %350 = sbr.rel (0) target = $region29
  $region28: #{resnet_forward.61} parent=0 // pred_region
    _
  $region29: #{resnet_forward.61} parent=0 // pred_fallthru
    _
  // Predicated region
  $region30: #{resnet_forward.61} parent=0 // pred_check
    _
  $region31: #{resnet_forward.61} parent=0 // pred_check_branch
    %352 = sbr.rel (0) target = $region33
  $region32: #{resnet_forward.61} parent=0 // pred_region
    _
  $region33: #{resnet_forward.61} parent=0 // pred_fallthru
    _

// kernel: resnet_forward.77
$region0: #{resnet_forward.77}
  #allocation0 [shape = 'u32[]', space=smem, size = 0x4, offset = 0x4, fixed_abs, tag = 'smem constant byte address 0x4 - core index']
  #allocation1 [shape = 'u32[72,128]{1,0:T(1,128)}', space=vmem, size = 0x9000, scoped, tag = 'internal scratch']
  %s0 = inlined_call_operand.vmem [shape: f32[32,16], index: 0, kind: input, shape index: {}]
  %s1 = inlined_call_operand.vmem [shape: f32[1,16], index: 1, kind: input, shape index: {}]
  %s2 = inlined_call_operand.vmem [shape: f32[1,16], index: 2, kind: input, shape index: {}]
  %s3 = inlined_call_operand.vmem [shape: f32[32,16], index: 3, kind: output, shape index: {}]
  %s4 = sld [smem:[#allocation0]]
  $region22: #{resnet_forward.77} parent=0
    _
  %s6 = ssub.s32 1, %s4
  %s7 = scalar_select 0, %s6, %s4
  // Predicated region
  $region2: #{resnet_forward.77} parent=0 // pred_check
    _
  $region3: #{resnet_forward.77} parent=0 // pred_check_branch
    %9 = sbr.rel (0) target = $region5
  $region4: #{resnet_forward.77} parent=0 // pred_region
    _
  $region5: #{resnet_forward.77} parent=0 // pred_fallthru
    _
  // Predicated region
  $region6: #{resnet_forward.77} parent=0 // pred_check
    _
  $region7: #{resnet_forward.77} parent=0 // pred_check_branch
    %11 = sbr.rel (0) target = $region9
  $region8: #{resnet_forward.77} parent=0 // pred_region
    _
  $region9: #{resnet_forward.77} parent=0 // pred_fallthru
    _
  // Predicated region
  $region10: #{resnet_forward.77} parent=0 // pred_check
    _
  $region11: #{resnet_forward.77} parent=0 // pred_check_branch
    %13 = sbr.rel (0) target = $region13
  $region12: #{resnet_forward.77} parent=0 // pred_region
    _
  $region13: #{resnet_forward.77} parent=0 // pred_fallthru
    _
  %v14 = vld [vmem:[%s0] sm:$0xff]
  %v15 = vld [vmem:[%s0 + $0x8] sm:$0xff]
  %v16 = vld [vmem:[%s0 + $0x10] sm:$0xff]
  %v17 = vld [vmem:[%s0 + $0x18] sm:$0xff]
  %v18 = vld [vmem:[%s1] sm:$0x1]
  %v20 = vperm.slane %v18, 0
  %v22 = vmul.f32 %v14, %v20
  %v23 = vmul.f32 %v15, %v20
  %v24 = vmul.f32 %v16, %v20
  %v25 = vmul.f32 %v17, %v20
  %v26 = vld [vmem:[%s2] sm:$0x1]
  %v28 = vperm.slane %v26, 0
  %v30 = vadd.f32 %v22, %v28
  %v31 = vadd.f32 %v23, %v28
  %v32 = vadd.f32 %v24, %v28
  %v33 = vadd.f32 %v25, %v28
  %v34 = vmax.f32 %v30, 0.0
  %v35 = vmax.f32 %v31, 0.0
  %v36 = vmax.f32 %v32, 0.0
  %v37 = vmax.f32 %v33, 0.0
  %vm38 = vcmask 130048
  %39 = vst.msk [vmem:[%s3] sm:$0xff] %vm38, %v34
  %40 = vst.msk [vmem:[%s3 + $0x8] sm:$0xff] %vm38, %v35
  %41 = vst.msk [vmem:[%s3 + $0x10] sm:$0xff] %vm38, %v36
  %42 = vst.msk [vmem:[%s3 + $0x18] sm:$0xff] %vm38, %v37
  // Predicated region
  $region14: #{resnet_forward.77} parent=0 // pred_check
    _
  $region15: #{resnet_forward.77} parent=0 // pred_check_branch
    %44 = sbr.rel (0) target = $region17
  $region16: #{resnet_forward.77} parent=0 // pred_region
    _
  $region17: #{resnet_forward.77} parent=0 // pred_fallthru
    _
  // Predicated region
  $region18: #{resnet_forward.77} parent=0 // pred_check
    _
  $region19: #{resnet_forward.77} parent=0 // pred_check_branch
    %46 = sbr.rel (0) target = $region21
  $region20: #{resnet_forward.77} parent=0 // pred_region
    _
  $region21: #{resnet_forward.77} parent=0 // pred_fallthru
    _

// kernel: resnet_forward.82
$region0: #{resnet_forward.82}
  #allocation0 [shape = 'u32[]', space=smem, size = 0x4, offset = 0x4, fixed_abs, tag = 'smem constant byte address 0x4 - core index']
  #allocation1 [shape = 'u32[72,128]{1,0:T(1,128)}', space=vmem, size = 0x9000, scoped, tag = 'internal scratch']
  %s0 = inlined_call_operand.vmem [shape: f32[8,64], index: 0, kind: input, shape index: {}]
  %s1 = inlined_call_operand.vmem [shape: f32[1,64], index: 1, kind: output, shape index: {0}]
  %s2 = inlined_call_operand.vmem [shape: f32[1,64], index: 2, kind: output, shape index: {1}]
  %3 = xla_tuple %s1, %s2
  %s4 = sld [smem:[#allocation0]]
  $region26: #{resnet_forward.82} parent=0
    _
  %s6 = ssub.s32 1, %s4
  %s7 = scalar_select 0, %s6, %s4
  // Predicated region
  $region2: #{resnet_forward.82} parent=0 // pred_check
    _
  $region3: #{resnet_forward.82} parent=0 // pred_check_branch
    %9 = sbr.rel (0) target = $region5
  $region4: #{resnet_forward.82} parent=0 // pred_region
    _
  $region5: #{resnet_forward.82} parent=0 // pred_fallthru
    _
  %p10 = scmp.eq.s32.totalorder 0, 0
  // Predicated region
  $region6: #{resnet_forward.82} parent=0 // pred_check
    %p11 = pneg %p10
  $region7: #{resnet_forward.82} parent=0 // pred_check_branch
    %13 = sbr.rel (%p11) target = $region9
  $region8: #{resnet_forward.82} parent=0 // pred_region
    %vm14 = vcmask 516096
    %15 = vst.msk [vmem:[%s1] sm:$0x1] %vm14, 0.0
    %16 = vst.msk [vmem:[%s2] sm:$0x1] %vm14, 0.0
  $region9: #{resnet_forward.82} parent=0 // pred_fallthru
    _
  %v17 = vld [vmem:[%s0] sm:$0xff]
  %v18 = vld [vmem:[%s1] sm:$0x1]
  %vm19 = vcmask 523264
  %v20 = vsel %vm19, %v17, 0.0
  %v21 = vrot.slane %v20, 4
  %v22 = vadd.f32 %v20, %v21
  %v23 = vrot.slane %v22, 2
  %v24 = vadd.f32 %v22, %v23
  %v25 = vrot.slane %v24, 1
  %v26 = vadd.f32 %v24, %v25
  %v27 = vadd.f32 %v18, %v26
  %vm28 = vcmask 516096
  %29 = vst.msk [vmem:[%s1] sm:$0x1] %vm28, %v27
  %v30 = vld [vmem:[%s2] sm:$0x1]
  %v31 = vmul.f32 %v17, %v17
  %v32 = vsel %vm19, %v31, 0.0
  %v33 = vrot.slane %v32, 4
  %v34 = vadd.f32 %v32, %v33
  %v35 = vrot.slane %v34, 2
  %v36 = vadd.f32 %v34, %v35
  %v37 = vrot.slane %v36, 1
  %v38 = vadd.f32 %v36, %v37
  %v39 = vadd.f32 %v30, %v38
  %40 = vst.msk [vmem:[%s2] sm:$0x1] %vm28, %v39
  // Predicated region
  $region10: #{resnet_forward.82} parent=0 // pred_check
    _
  $region11: #{resnet_forward.82} parent=0 // pred_check_branch
    %42 = sbr.rel (0) target = $region13
  $region12: #{resnet_forward.82} parent=0 // pred_region
    _
  $region13: #{resnet_forward.82} parent=0 // pred_fallthru
    _
  // Predicated region
  $region14: #{resnet_forward.82} parent=0 // pred_check
    _
  $region15: #{resnet_forward.82} parent=0 // pred_check_branch
    %44 = sbr.rel (0) target = $region17
  $region16: #{resnet_forward.82} parent=0 // pred_region
    _
  $region17: #{resnet_forward.82} parent=0 // pred_fallthru
    _
  // Predicated region
  $region18: #{resnet_forward.82} parent=0 // pred_check
    _
  $region19: #{resnet_forward.82} parent=0 // pred_check_branch
    %46 = sbr.rel (0) target = $region21
  $region20: #{resnet_forward.82} parent=0 // pred_region
    _
  $region21: #{resnet_forward.82} parent=0 // pred_fallthru
    _
  // Predicated region
  $region22: #{resnet_forward.82} parent=0 // pred_check
    _
  $region23: #{resnet_forward.82} parent=0 // pred_check_branch
    %48 = sbr.rel (0) target = $region25
  $region24: #{resnet_forward.82} parent=0 // pred_region
    _
  $region25: #{resnet_forward.82} parent=0 // pred_fallthru
    _

// kernel: resnet_forward.80
$region0: #{resnet_forward.80}
  #allocation0 [shape = 'u32[]', space=smem, size = 0x4, offset = 0x4, fixed_abs, tag = 'smem constant byte address 0x4 - core index']
  #allocation1 [shape = 'u32[72,128]{1,0:T(1,128)}', space=vmem, size = 0x9000, scoped, tag = 'internal scratch']
  %s0 = inlined_call_operand.vmem [shape: f32[8,16], index: 0, kind: input, shape index: {}]
  %s1 = inlined_call_operand.vmem [shape: f32[1,16], index: 1, kind: input, shape index: {}]
  %s2 = inlined_call_operand.vmem [shape: f32[1,16], index: 2, kind: input, shape index: {}]
  %s3 = inlined_call_operand.vmem [shape: f32[8,16], index: 3, kind: output, shape index: {}]
  %s4 = sld [smem:[#allocation0]]
  $region22: #{resnet_forward.80} parent=0
    _
  %s6 = ssub.s32 1, %s4
  %s7 = scalar_select 0, %s6, %s4
  // Predicated region
  $region2: #{resnet_forward.80} parent=0 // pred_check
    _
  $region3: #{resnet_forward.80} parent=0 // pred_check_branch
    %9 = sbr.rel (0) target = $region5
  $region4: #{resnet_forward.80} parent=0 // pred_region
    _
  $region5: #{resnet_forward.80} parent=0 // pred_fallthru
    _
  // Predicated region
  $region6: #{resnet_forward.80} parent=0 // pred_check
    _
  $region7: #{resnet_forward.80} parent=0 // pred_check_branch
    %11 = sbr.rel (0) target = $region9
  $region8: #{resnet_forward.80} parent=0 // pred_region
    _
  $region9: #{resnet_forward.80} parent=0 // pred_fallthru
    _
  // Predicated region
  $region10: #{resnet_forward.80} parent=0 // pred_check
    _
  $region11: #{resnet_forward.80} parent=0 // pred_check_branch
    %13 = sbr.rel (0) target = $region13
  $region12: #{resnet_forward.80} parent=0 // pred_region
    _
  $region13: #{resnet_forward.80} parent=0 // pred_fallthru
    _
  %v14 = vld [vmem:[%s0] sm:$0xff]
  %v15 = vld [vmem:[%s1] sm:$0x1]
  %v17 = vperm.slane %v15, 0
  %v19 = vmul.f32 %v14, %v17
  %v20 = vld [vmem:[%s2] sm:$0x1]
  %v22 = vperm.slane %v20, 0
  %v24 = vadd.f32 %v19, %v22
  %v25 = vmax.f32 %v24, 0.0
  %vm26 = vcmask 130048
  %27 = vst.msk [vmem:[%s3] sm:$0xff] %vm26, %v25
  // Predicated region
  $region14: #{resnet_forward.80} parent=0 // pred_check
    _
  $region15: #{resnet_forward.80} parent=0 // pred_check_branch
    %29 = sbr.rel (0) target = $region17
  $region16: #{resnet_forward.80} parent=0 // pred_region
    _
  $region17: #{resnet_forward.80} parent=0 // pred_fallthru
    _
  // Predicated region
  $region18: #{resnet_forward.80} parent=0 // pred_check
    _
  $region19: #{resnet_forward.80} parent=0 // pred_check_branch
    %31 = sbr.rel (0) target = $region21
  $region20: #{resnet_forward.80} parent=0 // pred_region
    _
  $region21: #{resnet_forward.80} parent=0 // pred_fallthru
    _

// kernel: resnet_forward.83
$region0: #{resnet_forward.83}
  #allocation0 [shape = 'u32[]', space=smem, size = 0x4, offset = 0x4, fixed_abs, tag = 'smem constant byte address 0x4 - core index']
  #allocation1 [shape = 'u32[72,128]{1,0:T(1,128)}', space=vmem, size = 0x9000, scoped, tag = 'internal scratch']
  %s0 = inlined_call_operand.vmem [shape: f32[8,64], index: 0, kind: input, shape index: {}]
  %s1 = inlined_call_operand.vmem [shape: f32[1,64], index: 1, kind: input, shape index: {}]
  %s2 = inlined_call_operand.vmem [shape: f32[1,64], index: 2, kind: input, shape index: {}]
  %s3 = inlined_call_operand.vmem [shape: f32[8,64], index: 3, kind: output, shape index: {}]
  %s4 = sld [smem:[#allocation0]]
  $region22: #{resnet_forward.83} parent=0
    _
  %s6 = ssub.s32 1, %s4
  %s7 = scalar_select 0, %s6, %s4
  // Predicated region
  $region2: #{resnet_forward.83} parent=0 // pred_check
    _
  $region3: #{resnet_forward.83} parent=0 // pred_check_branch
    %9 = sbr.rel (0) target = $region5
  $region4: #{resnet_forward.83} parent=0 // pred_region
    _
  $region5: #{resnet_forward.83} parent=0 // pred_fallthru
    _
  // Predicated region
  $region6: #{resnet_forward.83} parent=0 // pred_check
    _
  $region7: #{resnet_forward.83} parent=0 // pred_check_branch
    %11 = sbr.rel (0) target = $region9
  $region8: #{resnet_forward.83} parent=0 // pred_region
    _
  $region9: #{resnet_forward.83} parent=0 // pred_fallthru
    _
  // Predicated region
  $region10: #{resnet_forward.83} parent=0 // pred_check
    _
  $region11: #{resnet_forward.83} parent=0 // pred_check_branch
    %13 = sbr.rel (0) target = $region13
  $region12: #{resnet_forward.83} parent=0 // pred_region
    _
  $region13: #{resnet_forward.83} parent=0 // pred_fallthru
    _
  %v14 = vld [vmem:[%s0] sm:$0xff]
  %v15 = vld [vmem:[%s1] sm:$0x1]
  %v17 = vperm.slane %v15, 0
  %v19 = vmul.f32 %v14, %v17
  %v20 = vld [vmem:[%s2] sm:$0x1]
  %v22 = vperm.slane %v20, 0
  %v24 = vadd.f32 %v19, %v22
  %v25 = vmax.f32 %v24, 0.0
  %vm26 = vcmask 523264
  %27 = vst.msk [vmem:[%s3] sm:$0xff] %vm26, %v25
  // Predicated region
  $region14: #{resnet_forward.83} parent=0 // pred_check
    _
  $region15: #{resnet_forward.83} parent=0 // pred_check_branch
    %29 = sbr.rel (0) target = $region17
  $region16: #{resnet_forward.83} parent=0 // pred_region
    _
  $region17: #{resnet_forward.83} parent=0 // pred_fallthru
    _
  // Predicated region
  $region18: #{resnet_forward.83} parent=0 // pred_check
    _
  $region19: #{resnet_forward.83} parent=0 // pred_check_branch
    %31 = sbr.rel (0) target = $region21
  $region20: #{resnet_forward.83} parent=0 // pred_region
    _
  $region21: #{resnet_forward.83} parent=0 // pred_fallthru
    _

// kernel: resnet_forward.79
$region0: #{resnet_forward.79}
  #allocation0 [shape = 'u32[]', space=smem, size = 0x4, offset = 0x4, fixed_abs, tag = 'smem constant byte address 0x4 - core index']
  #allocation1 [shape = 'u32[72,128]{1,0:T(1,128)}', space=vmem, size = 0x9000, scoped, tag = 'internal scratch']
  %s0 = inlined_call_operand.vmem [shape: f32[8,16], index: 0, kind: input, shape index: {}]
  %s1 = inlined_call_operand.vmem [shape: f32[1,16], index: 1, kind: output, shape index: {0}]
  %s2 = inlined_call_operand.vmem [shape: f32[1,16], index: 2, kind: output, shape index: {1}]
  %3 = xla_tuple %s1, %s2
  %s4 = sld [smem:[#allocation0]]
  $region26: #{resnet_forward.79} parent=0
    _
  %s6 = ssub.s32 1, %s4
  %s7 = scalar_select 0, %s6, %s4
  // Predicated region
  $region2: #{resnet_forward.79} parent=0 // pred_check
    _
  $region3: #{resnet_forward.79} parent=0 // pred_check_branch
    %9 = sbr.rel (0) target = $region5
  $region4: #{resnet_forward.79} parent=0 // pred_region
    _
  $region5: #{resnet_forward.79} parent=0 // pred_fallthru
    _
  %p10 = scmp.eq.s32.totalorder 0, 0
  // Predicated region
  $region6: #{resnet_forward.79} parent=0 // pred_check
    %p11 = pneg %p10
  $region7: #{resnet_forward.79} parent=0 // pred_check_branch
    %13 = sbr.rel (%p11) target = $region9
  $region8: #{resnet_forward.79} parent=0 // pred_region
    %vm14 = vcmask 122880
    %15 = vst.msk [vmem:[%s1] sm:$0x1] %vm14, 0.0
    %16 = vst.msk [vmem:[%s2] sm:$0x1] %vm14, 0.0
  $region9: #{resnet_forward.79} parent=0 // pred_fallthru
    _
  %v17 = vld [vmem:[%s0] sm:$0xff]
  %v18 = vld [vmem:[%s1] sm:$0x1]
  %vm19 = vcmask 130048
  %v20 = vsel %vm19, %v17, 0.0
  %v21 = vrot.slane %v20, 4
  %v22 = vadd.f32 %v20, %v21
  %v23 = vrot.slane %v22, 2
  %v24 = vadd.f32 %v22, %v23
  %v25 = vrot.slane %v24, 1
  %v26 = vadd.f32 %v24, %v25
  %v27 = vadd.f32 %v18, %v26
  %vm28 = vcmask 122880
  %29 = vst.msk [vmem:[%s1] sm:$0x1] %vm28, %v27
  %v30 = vld [vmem:[%s2] sm:$0x1]
  %v31 = vmul.f32 %v17, %v17
  %v32 = vsel %vm19, %v31, 0.0
  %v33 = vrot.slane %v32, 4
  %v34 = vadd.f32 %v32, %v33
  %v35 = vrot.slane %v34, 2
  %v36 = vadd.f32 %v34, %v35
  %v37 = vrot.slane %v36, 1
  %v38 = vadd.f32 %v36, %v37
  %v39 = vadd.f32 %v30, %v38
  %40 = vst.msk [vmem:[%s2] sm:$0x1] %vm28, %v39
  // Predicated region
  $region10: #{resnet_forward.79} parent=0 // pred_check
    _
  $region11: #{resnet_forward.79} parent=0 // pred_check_branch
    %42 = sbr.rel (0) target = $region13
  $region12: #{resnet_forward.79} parent=0 // pred_region
    _
  $region13: #{resnet_forward.79} parent=0 // pred_fallthru
    _
  // Predicated region
  $region14: #{resnet_forward.79} parent=0 // pred_check
    _
  $region15: #{resnet_forward.79} parent=0 // pred_check_branch
    %44 = sbr.rel (0) target = $region17
  $region16: #{resnet_forward.79} parent=0 // pred_region
    _
  $region17: #{resnet_forward.79} parent=0 // pred_fallthru
    _
  // Predicated region
  $region18: #{resnet_forward.79} parent=0 // pred_check
    _
  $region19: #{resnet_forward.79} parent=0 // pred_check_branch
    %46 = sbr.rel (0) target = $region21
  $region20: #{resnet_forward.79} parent=0 // pred_region
    _
  $region21: #{resnet_forward.79} parent=0 // pred_fallthru
    _
  // Predicated region
  $region22: #{resnet_forward.79} parent=0 // pred_check
    _
  $region23: #{resnet_forward.79} parent=0 // pred_check_branch
    %48 = sbr.rel (0) target = $region25
  $region24: #{resnet_forward.79} parent=0 // pred_region
    _
  $region25: #{resnet_forward.79} parent=0 // pred_fallthru
    _

// kernel: resnet_forward.91
$region0: #{resnet_forward.91}
  #allocation0 [shape = 'u32[]', space=smem, size = 0x4, offset = 0x4, fixed_abs, tag = 'smem constant byte address 0x4 - core index']
  #allocation1 [shape = 'u32[72,128]{1,0:T(1,128)}', space=vmem, size = 0x9000, scoped, tag = 'internal scratch']
  %s0 = inlined_call_operand.vmem [shape: f32[2,4,64], index: 0, kind: input, shape index: {}]
  %s1 = inlined_call_operand.vmem [shape: f32[64,10], index: 1, kind: input, shape index: {}]
  %s2 = inlined_call_operand.vmem [shape: f32[1,10], index: 2, kind: input, shape index: {}]
  %s3 = inlined_call_operand.hbm [shape: f32[2,10], index: 3, kind: output, shape index: {}]
  %s4 = sld [smem:[#allocation0]]
  $region22: #{resnet_forward.91} parent=0
    _
  %s6 = ssub.s32 1, %s4
  %s7 = scalar_select 0, %s6, %s4
  $region1: #{resnet_forward.91} parent=0
    #allocation2 [shape = 'u8[1024]{0}', space=vmem, size = 0x400, scoped, tag = 'output window, operand 0, single buffered']
    #allocation3 [shape = 's32[1]{0}', space=sflag, size = 0x4, scoped, tag = 'scoped memory for resnet_forward.91']
    %8 = vsyncpa [#allocation3], 0
    // Predicated region
    $region2: #{resnet_forward.91} parent=1 // pred_check
      _
    $region3: #{resnet_forward.91} parent=1 // pred_check_branch
      %10 = sbr.rel (0) target = $region5
    $region4: #{resnet_forward.91} parent=1 // pred_region
      _
    $region5: #{resnet_forward.91} parent=1 // pred_fallthru
      _
    // Predicated region
    $region6: #{resnet_forward.91} parent=1 // pred_check
      _
    $region7: #{resnet_forward.91} parent=1 // pred_check_branch
      %12 = sbr.rel (0) target = $region9
    $region8: #{resnet_forward.91} parent=1 // pred_region
      _
    $region9: #{resnet_forward.91} parent=1 // pred_fallthru
      _
    // Predicated region
    $region10: #{resnet_forward.91} parent=1 // pred_check
      _
    $region11: #{resnet_forward.91} parent=1 // pred_check_branch
      %14 = sbr.rel (0) target = $region13
    $region12: #{resnet_forward.91} parent=1 // pred_region
      _
    $region13: #{resnet_forward.91} parent=1 // pred_fallthru
      _
    %v15 = vld [vmem:[%s0] sm:$0xf]
    %v16 = vld [vmem:[%s0 + $0x4] sm:$0xf]
    %vm17 = vcmask 519168
    %v18 = vsel %vm17, %v15, 0.0
    %v19 = vrot.slane %v18, 4
    %v20 = vadd.f32 %v18, %v19
    %v21 = vrot.slane %v20, 2
    %v22 = vadd.f32 %v20, %v21
    %v23 = vrot.slane %v22, 1
    %v24 = vadd.f32 %v22, %v23
    %v25 = vsel %vm17, %v16, 0.0
    %v26 = vrot.slane %v25, 4
    %v27 = vadd.f32 %v25, %v26
    %v28 = vrot.slane %v27, 2
    %v29 = vadd.f32 %v27, %v28
    %v30 = vrot.slane %v29, 1
    %v31 = vadd.f32 %v29, %v30
    %v32 = vrcp.pop 4.0
    %v33 = vmul.f32 4.0, %v32
    %v34 = vsub.f32 1.0, %v33
    %v35 = vmul.f32 %v32, %v34
    %v36 = vadd.f32 %v32, %v35
    %vm37 = vweird.f32 %v32
    %v38 = vsel %vm37, %v32, %v36
    %v39 = vmul.f32 %v24, %v38
    %v40 = vmul.f32 %v31, %v38
    %v41 = vld [vmem:[%s1] sm:$0xff]
    %v42 = vld [vmem:[%s1 + $0x8] sm:$0xff]
    %v43 = vld [vmem:[%s1 + $0x10] sm:$0xff]
    %v44 = vld [vmem:[%s1 + $0x18] sm:$0xff]
    %v45 = vld [vmem:[%s1 + $0x20] sm:$0xff]
    %v46 = vld [vmem:[%s1 + $0x28] sm:$0xff]
    %v47 = vld [vmem:[%s1 + $0x30] sm:$0xff]
    %v48 = vld [vmem:[%s1 + $0x38] sm:$0xff]
    %v49 = vld [vmem:[%s2] sm:$0x1]
    %v51 = vperm.slane %v49, 0
    %vm55 = vcmask 1041409
    %v56 = vsel %vm55, %v40, %v39
    %vm57 = vcmask 523264
    %v58 = vsel %vm57, %v56, 0
    %60 = vmatpush.msra.mxu0 0.0
    %61 = vmatpush.msra.mxu0 0.0
    %62 = vmatpush.msra.mxu0 0.0
    %63 = vmatpush.msra.mxu0 0.0
    %64 = vmatpush.msra.mxu0 0.0
    %65 = vmatpush.msra.mxu0 0.0
    %66 = vmatpush.msra.mxu0 0.0
    %67 = vmatpush.msra.mxu0 0.0
    %68 = vmatpush.msra.mxu0 %v48
    %69 = vmatpush.msra.mxu0 %v47
    %70 = vmatpush.msra.mxu0 %v46
    %71 = vmatpush.msra.mxu0 %v45
    %72 = vmatpush.msra.mxu0 %v44
    %73 = vmatpush.msra.mxu0 %v43
    %74 = vmatpush.msra.mxu0 %v42
    %75 = vmatpush.msra.mxu0 %v41
    %76 = vmatmul.f32.gmra.mxu0 %v58
    %v77 = vpop.f32.mrf.mxu0
    %v78 = vadd.f32 %v51, %v77
    %79 = vdwg.mxu0
    %vm80 = vcmask 74752
    %v81 = vsel %vm80, %v78, -inf
    %82 = vmax.xlane.f32.xlu0 %v81
    %v83 = vpop.xlane.xlu0 %82
    %v84 = vsub.f32 %v78, %v83
    %v85 = vmul.f32 %v84, 1.442695
    %v86 = vpow.pop %v85
    %v87 = vsel %vm80, %v86, 0.0
    %88 = vadd.xlane.f32.xlu0 %v87
    %v89 = vpop.xlane.xlu0 %88
    %v90 = vrcp.pop %v89
    %v91 = vmul.f32 %v89, %v90
    %v92 = vsub.f32 1.0, %v91
    %v93 = vmul.f32 %v90, %v92
    %v94 = vadd.f32 %v90, %v93
    %vm95 = vweird.f32 %v89
    %vm96 = vweird.f32 %v90
    %vm97 = vmor %vm95, %vm96
    %v98 = vsel %vm97, %v90, %v94
    %v99 = vand.u32 2147483647, %v89
    %vm100 = vcmp.eq.f32.partialorder %v99, 8.507059e+37
    %v101 = vand.u32 %v89, 2147483648
    %v102 = vor.u32 1.1754944e-38, %v101
    %v103 = vsel %vm100, %v102, %v98
    %v104 = vmul.f32 %v86, %v103
    %105 = vst.msk [vmem:[#allocation2] sm:$0x3] %vm80, %v104
    // Predicated region
    $region14: #{resnet_forward.91} parent=1 // pred_check
      _
    $region15: #{resnet_forward.91} parent=1 // pred_check_branch
      %107 = sbr.rel (0) target = $region17
    $region16: #{resnet_forward.91} parent=1 // pred_region
      %109 = vsyncadd [#allocation3], 0
      %s111 = sshll.u32 [#allocation2], 4
      %s112 = int_to_ptr.vmem [resolvable:$true] %s111
      %s113 = sshll.u32 %s3, 4
      %s114 = int_to_ptr.hbm [resolvable:$true] %s113
      %116 = dma.vmem_to_hbm [thread:$0]  %s112, 32, %s114, [#allocation3]
    $region17: #{resnet_forward.91} parent=1 // pred_fallthru
      _
    // Predicated region
    $region18: #{resnet_forward.91} parent=1 // pred_check
      _
    $region19: #{resnet_forward.91} parent=1 // pred_check_branch
      %118 = sbr.rel (0) target = $region21
    $region20: #{resnet_forward.91} parent=1 // pred_region
      %120 = dma.done [#allocation3], 32
    $region21: #{resnet_forward.91} parent=1 // pred_fallthru
      _
    %121 = vsyncpa [#allocation3], 1

</llo_original>
